<compile_context>
chip_gen: v6e
topology: v6e:2x2x1
jax: 0.10.0
libtpu: 0.0.40
codegen_flags: <defaults>
</compile_context>

<pallas_src>
import numpy as np
import jax
import jax.numpy as jnp
from jax.experimental import pallas as pl
from jax.experimental.pallas import tpu as pltpu

EPS = 1e-5          # torch.nn.InstanceNorm2d default eps
NEG_SLOPE = 0.2     # LeakyReLU negative slope
_VMEM_LIMIT = 32 * 1024 * 1024


# ----------------------- small constant matrices (host / numpy) -----------------------

def _tap_masks(H, W):
    """(9, H*W) 0/1 masks: row t=(dh+1)*3+(dw+1) is 1 where 3x3 tap (dh,dw) reads an
    in-bounds pixel (the zero padding of Conv2d(k=3, padding=1))."""
    hs = np.repeat(np.arange(H), W)
    ws = np.tile(np.arange(W), H)
    m = np.zeros((9, H * W), np.float32)
    t = 0
    for dh in (-1, 0, 1):
        for dw in (-1, 0, 1):
            ok = (hs + dh >= 0) & (hs + dh < H) & (ws + dw >= 0) & (ws + dw < W)
            m[t] = ok.astype(np.float32)
            t += 1
    return m


def _pool_mat(H, W):
    """(H*W, H*W/4) s.t. x @ P == F.avg_pool2d(kernel=2, stride=2) on flat spatial."""
    Ws = W // 2
    P = np.zeros((H * W, (H // 2) * Ws), np.float32)
    for h in range(H):
        for w in range(W):
            P[h * W + w, (h // 2) * Ws + (w // 2)] = 0.25
    return P


def _upcat_mat(Hs, Ws):
    """(4*Hs*Ws, 4*Hs*Ws) scatter for ConvTranspose2d(k=2, s=2): row t*HWs + (h*Ws+w)
    hits flattened output (2h+dh)*(2Ws) + (2w+dw), tap t = dh*2 + dw."""
    Hb, Wb = 2 * Hs, 2 * Ws
    HWs = Hs * Ws
    U = np.zeros((4 * HWs, Hb * Wb), np.float32)
    for t in range(4):
        dh, dw = t // 2, t % 2
        for h in range(Hs):
            for w in range(Ws):
                U[t * HWs + h * Ws + w, (2 * h + dh) * Wb + (2 * w + dw)] = 1.0
    return U


# ------------------------------ fused U-Net Pallas kernel ------------------------------

def _make_unet_kernel(L, W0):
    """Kernel factory: U-Net with `L` down levels, full-res width W0, grid axis = batch."""
    f32 = jnp.float32

    def in_lrelu(y):
        # InstanceNorm2d(eps=1e-5, affine=False) + LeakyReLU(0.2); two-pass stats.
        inv_n = 1.0 / y.shape[-1]
        mean = jnp.sum(y, axis=-1, keepdims=True) * inv_n
        yc = y - mean
        var = jnp.sum(yc * yc, axis=-1, keepdims=True) * inv_n
        z = yc * jax.lax.rsqrt(var + EPS)
        return jnp.where(z >= 0, z, NEG_SLOPE * z)

    def conv3(x, w_ref, m_ref, Wl):
        # 3x3 conv, padding=1, no bias.
        #   x: (Cin, HW) lane-dense; w_ref: (Cout, 9*Cin); m_ref: (9, HW) boundary masks.
        # Shifted taps via lane rolls + masks, then ONE matmul with K = 9*Cin.
        taps = []
        t = 0
        for dh in (-1, 0, 1):
            for dw in (-1, 0, 1):
                s = dh * Wl + dw
                if s == 0:
                    taps.append(x)
                else:
                    xt = jnp.roll(x, -s, axis=1)             # static shift: slice+concat
                    taps.append(xt * m_ref[t:t + 1, :])      # zero out-of-bounds reads
                t += 1
        xcol = jnp.concatenate(taps, axis=0)                 # (9*Cin, HW)
        return jnp.dot(w_ref[...], xcol, preferred_element_type=f32)

    def tconv(x, wt_ref, u_ref):
        # ConvTranspose2d(k=2, s=2, no bias) -> InstanceNorm -> LeakyReLU.
        #   x: (Cin, HWs); wt_ref: (Cout, 4*Cin); u_ref: (4*HWs, HWb) scatter matrix.
        cin = x.shape[0]
        wt = wt_ref[...]
        taps = [jnp.dot(wt[:, t * cin:(t + 1) * cin], x, preferred_element_type=f32)
                for t in range(4)]
        ycat = jnp.concatenate(taps, axis=1)                 # (Cout, 4*HWs)
        up = jnp.dot(ycat, u_ref[...], preferred_element_type=f32)   # (Cout, HWb)
        return in_lrelu(up)

    def kernel(*refs):
        i = 0
        x_ref = refs[i]; i += 1
        down = [(refs[i + 2 * l], refs[i + 2 * l + 1]) for l in range(L)]; i += 2 * L
        bott = (refs[i], refs[i + 1]); i += 2
        up = [(refs[i + 3 * j], refs[i + 3 * j + 1], refs[i + 3 * j + 2]) for j in range(L)]
        i += 3 * L
        w1x1_ref, b1x1_ref = refs[i], refs[i + 1]; i += 2
        M = [refs[i + l] for l in range(L + 1)]; i += L + 1
        P = [refs[i + l] for l in range(L)]; i += L
        U = [refs[i + l] for l in range(L)]; i += L
        o_ref = refs[i]

        # ------------------------------- encoder -------------------------------
        x = x_ref[0]                                          # (Cin=1, HW0), HW on lanes
        skips = []
        for l in range(L):
            w1, w2 = down[l]
            x = in_lrelu(conv3(x, w1, M[l], W0 >> l))
            x = in_lrelu(conv3(x, w2, M[l], W0 >> l))
            skips.append(x)
            x = jnp.dot(x, P[l][...], preferred_element_type=f32)   # 2x2 avg pool

        # ------------------------------ bottleneck ------------------------------
        x = in_lrelu(conv3(x, bott[0], M[L], W0 >> L))
        x = in_lrelu(conv3(x, bott[1], M[L], W0 >> L))

        # ------------------------------- decoder --------------------------------
        for j in range(L):
            lvl = L - 1 - j
            wt, w1, w2 = up[j]
            x = tconv(x, wt, U[j])
            x = jnp.concatenate([x, skips[lvl]], axis=0)      # channel concat [up, skip]
            x = in_lrelu(conv3(x, w1, M[lvl], W0 >> lvl))     # single merged conv (2C in)
            x = in_lrelu(conv3(x, w2, M[lvl], W0 >> lvl))

        # --------------------------- final 1x1 conv + bias ---------------------------
        out = jnp.dot(w1x1_ref[...], x, preferred_element_type=f32) + b1x1_ref[...]
        o_ref[0] = out

    return kernel


# ------------------------------ weight re-layout (wrapper) ------------------------------

def _w3(w):
    # HWIO (3, 3, Cin, Cout) -> lane-dense (Cout, 9*Cin), column = (kh*3+kw)*Cin + cin.
    # NOTE: torch Conv2d weights are OIHW -> permute (2,3,1,0) before calling this.
    w = jnp.transpose(w, (3, 0, 1, 2))
    return w.reshape(w.shape[0], -1).astype(jnp.float32)


def _wt(w):
    # ConvTranspose2d (Cin, Cout, 2, 2) -> lane-dense (Cout, 4*Cin), col = (kh*2+kw)*Cin + cin.
    w = jnp.transpose(w, (1, 2, 3, 0))
    return w.reshape(w.shape[0], -1).astype(jnp.float32)


def _zero_index_map(ndim):
    zeros = (0,) * ndim
    return lambda b: zeros


def unet_forward(params, x_nchw):
    """Whole U-Net as ONE fused Pallas kernel per batch element (grid=(B,))."""
    B, cin, H, W = x_nchw.shape
    L = len(params["down"])
    assert H % (1 << L) == 0 and W % (1 << L) == 0
    HW = H * W

    args = [x_nchw.reshape(B, cin, HW).astype(jnp.float32)]
    for (w1, w2) in params["down"]:
        args += [_w3(w1), _w3(w2)]
    args += [_w3(params["bottleneck"][0]), _w3(params["bottleneck"][1])]
    up_convs = list(params["up_conv"]) + [params["final_block"]]
    for j in range(L):
        w1, w2 = up_convs[j]                       # w1 takes the full 2C concat input
        args += [_wt(params["up_t"][j]), _w3(w1), _w3(w2)]
    w1x1, b1x1 = params["final_1x1"]
    args += [w1x1.reshape(1, -1).astype(jnp.float32), b1x1.reshape(1, 1).astype(jnp.float32)]
    for l in range(L + 1):
        args.append(jnp.asarray(_tap_masks(H >> l, W >> l)))
    for l in range(L):
        args.append(jnp.asarray(_pool_mat(H >> l, W >> l)))
    for j in range(L):
        lvl = L - j                                # source level of upsample step j
        args.append(jnp.asarray(_upcat_mat(H >> lvl, W >> lvl)))

    in_specs = [pl.BlockSpec((1, cin, HW), lambda b: (b, 0, 0))]
    for a in args[1:]:
        in_specs.append(pl.BlockSpec(a.shape, _zero_index_map(a.ndim)))

    # TODO(synk): at realistic fastMRI sizes (e.g. 320x320) add an HW grid axis and swap
    # the pool/scatter matmuls for strided DMA so per-level blocks fit v7x's 64 MiB VMEM.
    y = pl.pallas_call(
        _make_unet_kernel(L, W),
        out_shape=jax.ShapeDtypeStruct((B, 1, HW), jnp.float32),
        grid=(B,),
        in_specs=in_specs,
        out_specs=pl.BlockSpec((1, 1, HW), lambda b: (b, 0, 0)),
        compiler_params=pltpu.CompilerParams(
            dimension_semantics=(pltpu.PARALLEL,),   # B=2 -> both TensorCores on v7x
            vmem_limit_bytes=_VMEM_LIMIT),
    )(*args)
    return y.reshape(B, 1, H, W)


# ------------------------------ data-consistency module ------------------------------

def _dc_kernel(lam_ref, kp_ref, k0_ref, m_ref, o_ref):
    # Learnable data-consistency blend in k-space; re/im packed on axis 1.
    lam = lam_ref[...]                         # (1, 1, 1)
    inv = 1.0 / (1.0 + lam)
    kp = kp_ref[...]
    m = m_ref[...]
    o_ref[...] = (1.0 - m) * kp + (m * inv) * (kp + lam * k0_ref[...])


def dc_blend(lam_arr, kp_ri, k0_ri, m_ri):
    # Single grid=() launch over the whole packed (B, 2, HW) arrays (whole-array blocks).
    return pl.pallas_call(
        _dc_kernel,
        out_shape=jax.ShapeDtypeStruct(kp_ri.shape, jnp.float32),
    )(lam_arr, kp_ri, k0_ri, m_ri)


def fft2c(x):
    # TODO(synk): FFT has no Pallas equivalent on TPU; done with jnp.fft (XLA).
    return jnp.fft.fftshift(
        jnp.fft.fft2(jnp.fft.ifftshift(x, axes=(-2, -1)), norm="ortho"),
        axes=(-2, -1))


def ifft2c(x):
    return jnp.fft.fftshift(
        jnp.fft.ifft2(jnp.fft.ifftshift(x, axes=(-2, -1)), norm="ortho"),
        axes=(-2, -1))


def dc_forward(lam, k, m, x, mean, std):
    B, _, H, W = x.shape
    HW = H * W
    x_un = x * std + mean
    kp = fft2c(x_un[:, 0].astype(jnp.complex64))
    k0 = k[:, 0]

    kp_ri = jnp.stack([jnp.real(kp), jnp.imag(kp)], axis=1).reshape(B, 2, HW).astype(jnp.float32)
    k0_ri = jnp.stack([jnp.real(k0), jnp.imag(k0)], axis=1).reshape(B, 2, HW).astype(jnp.float32)
    m_ri = jnp.broadcast_to(m[:, 0].astype(jnp.float32).reshape(B, 1, HW), (B, 2, HW))
    lam_arr = jnp.reshape(lam, (1, 1, 1)).astype(jnp.float32)

    kdc_ri = dc_blend(lam_arr, kp_ri, k0_ri, m_ri)
    kdc = (kdc_ri[:, 0] + 1j * kdc_ri[:, 1]).reshape(B, H, W).astype(jnp.complex64)
    x_rec = jnp.abs(ifft2c(kdc))[:, None].astype(jnp.float32)
    return (x_rec - mean) / std


@jax.jit
def unet_dcl_cascade(params, k, m, x, mean, std):
    x = unet_forward(params["unet"], x)
    x = dc_forward(params["dc_lambda"], k, m, x, mean, std)
    return x


# ------------------------------ deterministic init ------------------------------

def _conv_w(key, cin, cout):
    return jax.random.normal(key, (3, 3, cin, cout), jnp.float32) / np.sqrt(9 * cin)


def _tconv_w(key, cin, cout):
    return jax.random.normal(key, (cin, cout, 2, 2), jnp.float32) / np.sqrt(4 * cin)


def init_params(key, n_filters=4, num_layers=2):
    keys = iter(jax.random.split(key, 64))
    chans = n_filters
    down = [(_conv_w(next(keys), 1, chans), _conv_w(next(keys), chans, chans))]
    ch = chans
    for _ in range(num_layers - 1):
        down.append((_conv_w(next(keys), ch, ch * 2), _conv_w(next(keys), ch * 2, ch * 2)))
        ch *= 2
    bottleneck = (_conv_w(next(keys), ch, ch * 2), _conv_w(next(keys), ch * 2, ch * 2))
    up_t, up_conv = [], []
    for _ in range(num_layers - 1):
        up_t.append(_tconv_w(next(keys), ch * 2, ch))
        up_conv.append((_conv_w(next(keys), ch * 2, ch), _conv_w(next(keys), ch, ch)))
        ch //= 2
    up_t.append(_tconv_w(next(keys), ch * 2, ch))
    final_block = (_conv_w(next(keys), ch * 2, ch), _conv_w(next(keys), ch, ch))
    final_1x1 = (jax.random.normal(next(keys), (1, ch), jnp.float32) / np.sqrt(ch),
                 jax.random.normal(next(keys), (1,), jnp.float32) * 0.01)
    unet = dict(down=down, bottleneck=bottleneck, up_t=up_t, up_conv=up_conv,
                final_block=final_block, final_1x1=final_1x1)
    return {"unet": unet, "dc_lambda": jnp.array(0.5, jnp.float32)}


# ------------------------------ main ------------------------------

if __name__ == "__main__":
    B, H, W = 2, 16, 16
    key = jax.random.PRNGKey(0)
    kx, kkr, kki, kmk, kmn, ksd = jax.random.split(key, 6)

    x = jax.random.normal(kx, (B, 1, H, W), jnp.float32)
    k = (jax.random.normal(kkr, (B, 1, H, W), jnp.float32)
         + 1j * jax.random.normal(kki, (B, 1, H, W), jnp.float32)).astype(jnp.complex64)
    mask_cols = (jax.random.uniform(kmk, (B, 1, 1, W)) > 0.5).astype(jnp.float32)
    m = jnp.broadcast_to(mask_cols, (B, 1, H, W))
    mean = jax.random.normal(kmn, (B, 1, 1, 1), jnp.float32) * 0.1
    std = jnp.abs(jax.random.normal(ksd, (B, 1, 1, 1), jnp.float32)) + 0.5

    params = init_params(jax.random.PRNGKey(42), n_filters=4, num_layers=2)

    out = unet_dcl_cascade(params, k, m, x, mean, std)
    out = jax.block_until_ready(out)

    assert out.shape == (B, 1, H, W), out.shape
    assert out.dtype == jnp.float32
    assert bool(jnp.all(jnp.isfinite(out)))
    print("KERNEL_OK")
</pallas_src>

<mosaic_0001>
module attributes {stable_mosaic.version = 11 : i64} {
  func.func @kernel(%arg0: i32, %arg1: memref<1x1x256xf32, #tpu.memory_space<vmem>>, %arg2: memref<4x9xf32, #tpu.memory_space<vmem>>, %arg3: memref<4x36xf32, #tpu.memory_space<vmem>>, %arg4: memref<8x36xf32, #tpu.memory_space<vmem>>, %arg5: memref<8x72xf32, #tpu.memory_space<vmem>>, %arg6: memref<16x72xf32, #tpu.memory_space<vmem>>, %arg7: memref<16x144xf32, #tpu.memory_space<vmem>>, %arg8: memref<8x64xf32, #tpu.memory_space<vmem>>, %arg9: memref<8x144xf32, #tpu.memory_space<vmem>>, %arg10: memref<8x72xf32, #tpu.memory_space<vmem>>, %arg11: memref<4x32xf32, #tpu.memory_space<vmem>>, %arg12: memref<4x72xf32, #tpu.memory_space<vmem>>, %arg13: memref<4x36xf32, #tpu.memory_space<vmem>>, %arg14: memref<1x4xf32, #tpu.memory_space<vmem>>, %arg15: memref<1x1xf32, #tpu.memory_space<vmem>>, %arg16: memref<9x256xf32, #tpu.memory_space<vmem>>, %arg17: memref<9x64xf32, #tpu.memory_space<vmem>>, %arg18: memref<9x16xf32, #tpu.memory_space<vmem>>, %arg19: memref<256x64xf32, #tpu.memory_space<vmem>>, %arg20: memref<64x16xf32, #tpu.memory_space<vmem>>, %arg21: memref<64x64xf32, #tpu.memory_space<vmem>>, %arg22: memref<256x256xf32, #tpu.memory_space<vmem>>, %arg23: memref<1x1x256xf32, #tpu.memory_space<vmem>>) attributes {dimension_semantics = [#tpu.dimension_semantics<parallel>], iteration_bounds = array<i64: 2>, scalar_prefetch = 0 : i64, scratch_operands = 0 : i64, tpu.core_type = #tpu.core_type<tc>, window_params = [{transform_indices = @transform_0, window_bounds = array<i64: 1, 1, 256>}, {pipeline_mode = #tpu.pipeline_mode<synchronous>, transform_indices = @transform_1, window_bounds = array<i64: 4, 9>}, {pipeline_mode = #tpu.pipeline_mode<synchronous>, transform_indices = @transform_2, window_bounds = array<i64: 4, 36>}, {pipeline_mode = #tpu.pipeline_mode<synchronous>, transform_indices = @transform_3, window_bounds = array<i64: 8, 36>}, {pipeline_mode = #tpu.pipeline_mode<synchronous>, transform_indices = @transform_4, window_bounds = array<i64: 8, 72>}, {pipeline_mode = #tpu.pipeline_mode<synchronous>, transform_indices = @transform_5, window_bounds = array<i64: 16, 72>}, {pipeline_mode = #tpu.pipeline_mode<synchronous>, transform_indices = @transform_6, window_bounds = array<i64: 16, 144>}, {pipeline_mode = #tpu.pipeline_mode<synchronous>, transform_indices = @transform_7, window_bounds = array<i64: 8, 64>}, {pipeline_mode = #tpu.pipeline_mode<synchronous>, transform_indices = @transform_8, window_bounds = array<i64: 8, 144>}, {pipeline_mode = #tpu.pipeline_mode<synchronous>, transform_indices = @transform_9, window_bounds = array<i64: 8, 72>}, {pipeline_mode = #tpu.pipeline_mode<synchronous>, transform_indices = @transform_10, window_bounds = array<i64: 4, 32>}, {pipeline_mode = #tpu.pipeline_mode<synchronous>, transform_indices = @transform_11, window_bounds = array<i64: 4, 72>}, {pipeline_mode = #tpu.pipeline_mode<synchronous>, transform_indices = @transform_12, window_bounds = array<i64: 4, 36>}, {pipeline_mode = #tpu.pipeline_mode<synchronous>, transform_indices = @transform_13, window_bounds = array<i64: 1, 4>}, {pipeline_mode = #tpu.pipeline_mode<synchronous>, transform_indices = @transform_14, window_bounds = array<i64: 1, 1>}, {pipeline_mode = #tpu.pipeline_mode<synchronous>, transform_indices = @transform_15, window_bounds = array<i64: 9, 256>}, {pipeline_mode = #tpu.pipeline_mode<synchronous>, transform_indices = @transform_16, window_bounds = array<i64: 9, 64>}, {pipeline_mode = #tpu.pipeline_mode<synchronous>, transform_indices = @transform_17, window_bounds = array<i64: 9, 16>}, {pipeline_mode = #tpu.pipeline_mode<synchronous>, transform_indices = @transform_18, window_bounds = array<i64: 256, 64>}, {pipeline_mode = #tpu.pipeline_mode<synchronous>, transform_indices = @transform_19, window_bounds = array<i64: 64, 16>}, {pipeline_mode = #tpu.pipeline_mode<synchronous>, transform_indices = @transform_20, window_bounds = array<i64: 64, 64>}, {pipeline_mode = #tpu.pipeline_mode<synchronous>, transform_indices = @transform_21, window_bounds = array<i64: 256, 256>}, {transform_indices = @transform_22, window_bounds = array<i64: 1, 1, 256>}]} {
    %c0 = arith.constant 0 : index
    %c0_0 = arith.constant 0 : index
    %c0_1 = arith.constant 0 : index
    %0 = vector.load %arg1[%c0, %c0_0, %c0_1] : memref<1x1x256xf32, #tpu.memory_space<vmem>>, vector<1x1x256xf32>
    %1 = vector.shape_cast %0 : vector<1x1x256xf32> to vector<1x256xf32>
    %2 = vector.extract_strided_slice %1 {offsets = [0, 239], sizes = [1, 17], strides = [1, 1]} : vector<1x256xf32> to vector<1x17xf32>
    %3 = vector.extract_strided_slice %1 {offsets = [0, 0], sizes = [1, 239], strides = [1, 1]} : vector<1x256xf32> to vector<1x239xf32>
    %4 = tpu.concatenate %2, %3 in 1 : vector<1x17xf32>, vector<1x239xf32> -> vector<1x256xf32>
    %c0_2 = arith.constant 0 : index
    %c0_3 = arith.constant 0 : index
    %5 = vector.load %arg16[%c0_2, %c0_3] : memref<9x256xf32, #tpu.memory_space<vmem>>, vector<1x256xf32>
    %6 = arith.mulf %4, %5 : vector<1x256xf32>
    %7 = vector.extract_strided_slice %1 {offsets = [0, 240], sizes = [1, 16], strides = [1, 1]} : vector<1x256xf32> to vector<1x16xf32>
    %8 = vector.extract_strided_slice %1 {offsets = [0, 0], sizes = [1, 240], strides = [1, 1]} : vector<1x256xf32> to vector<1x240xf32>
    %9 = tpu.concatenate %7, %8 in 1 : vector<1x16xf32>, vector<1x240xf32> -> vector<1x256xf32>
    %c1 = arith.constant 1 : index
    %c0_4 = arith.constant 0 : index
    %10 = vector.load %arg16[%c1, %c0_4] : memref<9x256xf32, #tpu.memory_space<vmem>>, vector<1x256xf32>
    %11 = arith.mulf %9, %10 : vector<1x256xf32>
    %12 = vector.extract_strided_slice %1 {offsets = [0, 241], sizes = [1, 15], strides = [1, 1]} : vector<1x256xf32> to vector<1x15xf32>
    %13 = vector.extract_strided_slice %1 {offsets = [0, 0], sizes = [1, 241], strides = [1, 1]} : vector<1x256xf32> to vector<1x241xf32>
    %14 = tpu.concatenate %12, %13 in 1 : vector<1x15xf32>, vector<1x241xf32> -> vector<1x256xf32>
    %c2 = arith.constant 2 : index
    %c0_5 = arith.constant 0 : index
    %15 = vector.load %arg16[%c2, %c0_5] : memref<9x256xf32, #tpu.memory_space<vmem>>, vector<1x256xf32>
    %16 = arith.mulf %14, %15 : vector<1x256xf32>
    %17 = vector.extract_strided_slice %1 {offsets = [0, 255], sizes = [1, 1], strides = [1, 1]} : vector<1x256xf32> to vector<1x1xf32>
    %18 = vector.extract_strided_slice %1 {offsets = [0, 0], sizes = [1, 255], strides = [1, 1]} : vector<1x256xf32> to vector<1x255xf32>
    %19 = tpu.concatenate %17, %18 in 1 : vector<1x1xf32>, vector<1x255xf32> -> vector<1x256xf32>
    %c3 = arith.constant 3 : index
    %c0_6 = arith.constant 0 : index
    %20 = vector.load %arg16[%c3, %c0_6] : memref<9x256xf32, #tpu.memory_space<vmem>>, vector<1x256xf32>
    %21 = arith.mulf %19, %20 : vector<1x256xf32>
    %22 = vector.extract_strided_slice %1 {offsets = [0, 1], sizes = [1, 255], strides = [1, 1]} : vector<1x256xf32> to vector<1x255xf32>
    %23 = vector.extract_strided_slice %1 {offsets = [0, 0], sizes = [1, 1], strides = [1, 1]} : vector<1x256xf32> to vector<1x1xf32>
    %24 = tpu.concatenate %22, %23 in 1 : vector<1x255xf32>, vector<1x1xf32> -> vector<1x256xf32>
    %c5 = arith.constant 5 : index
    %c0_7 = arith.constant 0 : index
    %25 = vector.load %arg16[%c5, %c0_7] : memref<9x256xf32, #tpu.memory_space<vmem>>, vector<1x256xf32>
    %26 = arith.mulf %24, %25 : vector<1x256xf32>
    %27 = vector.extract_strided_slice %1 {offsets = [0, 15], sizes = [1, 241], strides = [1, 1]} : vector<1x256xf32> to vector<1x241xf32>
    %28 = vector.extract_strided_slice %1 {offsets = [0, 0], sizes = [1, 15], strides = [1, 1]} : vector<1x256xf32> to vector<1x15xf32>
    %29 = tpu.concatenate %27, %28 in 1 : vector<1x241xf32>, vector<1x15xf32> -> vector<1x256xf32>
    %c6 = arith.constant 6 : index
    %c0_8 = arith.constant 0 : index
    %30 = vector.load %arg16[%c6, %c0_8] : memref<9x256xf32, #tpu.memory_space<vmem>>, vector<1x256xf32>
    %31 = arith.mulf %29, %30 : vector<1x256xf32>
    %32 = vector.extract_strided_slice %1 {offsets = [0, 16], sizes = [1, 240], strides = [1, 1]} : vector<1x256xf32> to vector<1x240xf32>
    %33 = vector.extract_strided_slice %1 {offsets = [0, 0], sizes = [1, 16], strides = [1, 1]} : vector<1x256xf32> to vector<1x16xf32>
    %34 = tpu.concatenate %32, %33 in 1 : vector<1x240xf32>, vector<1x16xf32> -> vector<1x256xf32>
    %c7 = arith.constant 7 : index
    %c0_9 = arith.constant 0 : index
    %35 = vector.load %arg16[%c7, %c0_9] : memref<9x256xf32, #tpu.memory_space<vmem>>, vector<1x256xf32>
    %36 = arith.mulf %34, %35 : vector<1x256xf32>
    %37 = vector.extract_strided_slice %1 {offsets = [0, 17], sizes = [1, 239], strides = [1, 1]} : vector<1x256xf32> to vector<1x239xf32>
    %38 = vector.extract_strided_slice %1 {offsets = [0, 0], sizes = [1, 17], strides = [1, 1]} : vector<1x256xf32> to vector<1x17xf32>
    %39 = tpu.concatenate %37, %38 in 1 : vector<1x239xf32>, vector<1x17xf32> -> vector<1x256xf32>
    %c8 = arith.constant 8 : index
    %c0_10 = arith.constant 0 : index
    %40 = vector.load %arg16[%c8, %c0_10] : memref<9x256xf32, #tpu.memory_space<vmem>>, vector<1x256xf32>
    %41 = arith.mulf %39, %40 : vector<1x256xf32>
    %42 = tpu.concatenate %6, %11, %16, %21, %1, %26, %31, %36, %41 in 0 : vector<1x256xf32>, vector<1x256xf32>, vector<1x256xf32>, vector<1x256xf32>, vector<1x256xf32>, vector<1x256xf32>, vector<1x256xf32>, vector<1x256xf32>, vector<1x256xf32> -> vector<9x256xf32>
    %c0_11 = arith.constant 0 : index
    %c0_12 = arith.constant 0 : index
    %43 = vector.load %arg2[%c0_11, %c0_12] : memref<4x9xf32, #tpu.memory_space<vmem>>, vector<4x9xf32>
    %cst = arith.constant dense<0.000000e+00> : vector<4x256xf32>
    %44 = tpu.matmul %43, %42, %cst {dimension_numbers = #tpu.dot_dimension_numbers<[1], [0], [0], [1], [0, 0, 1, 1], [], []>} : vector<4x9xf32>, vector<9x256xf32>, vector<4x256xf32> -> vector<4x256xf32>
    %cst_13 = arith.constant dense<0.000000e+00> : vector<4xf32>
    %45 = vector.multi_reduction <add>, %44, %cst_13 [1] : vector<4x256xf32> to vector<4xf32>
    %46 = vector.shape_cast %45 : vector<4xf32> to vector<4x1xf32>
    %cst_14 = arith.constant 3.906250e-03 : f32
    %47 = vector.broadcast %cst_14 : f32 to vector<4x1xf32>
    %48 = arith.mulf %46, %47 : vector<4x1xf32>
    %49 = vector.broadcast %48 : vector<4x1xf32> to vector<4x256xf32>
    %50 = arith.subf %44, %49 : vector<4x256xf32>
    %51 = arith.mulf %50, %50 : vector<4x256xf32>
    %cst_15 = arith.constant dense<0.000000e+00> : vector<4xf32>
    %52 = vector.multi_reduction <add>, %51, %cst_15 [1] : vector<4x256xf32> to vector<4xf32>
    %53 = vector.shape_cast %52 : vector<4xf32> to vector<4x1xf32>
    %cst_16 = arith.constant 3.906250e-03 : f32
    %54 = vector.broadcast %cst_16 : f32 to vector<4x1xf32>
    %55 = arith.mulf %53, %54 : vector<4x1xf32>
    %cst_17 = arith.constant 9.99999974E-6 : f32
    %56 = vector.broadcast %cst_17 : f32 to vector<4x1xf32>
    %57 = arith.addf %55, %56 : vector<4x1xf32>
    %58 = math.rsqrt %57 : vector<4x1xf32>
    %59 = vector.broadcast %58 : vector<4x1xf32> to vector<4x256xf32>
    %60 = arith.mulf %50, %59 : vector<4x256xf32>
    %cst_18 = arith.constant 0.000000e+00 : f32
    %61 = vector.broadcast %cst_18 : f32 to vector<4x256xf32>
    %62 = arith.cmpf oge, %60, %61 : vector<4x256xf32>
    %cst_19 = arith.constant 2.000000e-01 : f32
    %63 = vector.broadcast %cst_19 : f32 to vector<4x256xf32>
    %64 = arith.mulf %63, %60 : vector<4x256xf32>
    %65 = arith.select %62, %60, %64 : vector<4x256xi1>, vector<4x256xf32>
    %66 = vector.extract_strided_slice %65 {offsets = [0, 239], sizes = [4, 17], strides = [1, 1]} : vector<4x256xf32> to vector<4x17xf32>
    %67 = vector.extract_strided_slice %65 {offsets = [0, 0], sizes = [4, 239], strides = [1, 1]} : vector<4x256xf32> to vector<4x239xf32>
    %68 = tpu.concatenate %66, %67 in 1 : vector<4x17xf32>, vector<4x239xf32> -> vector<4x256xf32>
    %c0_20 = arith.constant 0 : index
    %c0_21 = arith.constant 0 : index
    %69 = vector.load %arg16[%c0_20, %c0_21] : memref<9x256xf32, #tpu.memory_space<vmem>>, vector<1x256xf32>
    %70 = vector.broadcast %69 : vector<1x256xf32> to vector<4x256xf32>
    %71 = arith.mulf %68, %70 : vector<4x256xf32>
    %72 = vector.extract_strided_slice %65 {offsets = [0, 240], sizes = [4, 16], strides = [1, 1]} : vector<4x256xf32> to vector<4x16xf32>
    %73 = vector.extract_strided_slice %65 {offsets = [0, 0], sizes = [4, 240], strides = [1, 1]} : vector<4x256xf32> to vector<4x240xf32>
    %74 = tpu.concatenate %72, %73 in 1 : vector<4x16xf32>, vector<4x240xf32> -> vector<4x256xf32>
    %c1_22 = arith.constant 1 : index
    %c0_23 = arith.constant 0 : index
    %75 = vector.load %arg16[%c1_22, %c0_23] : memref<9x256xf32, #tpu.memory_space<vmem>>, vector<1x256xf32>
    %76 = vector.broadcast %75 : vector<1x256xf32> to vector<4x256xf32>
    %77 = arith.mulf %74, %76 : vector<4x256xf32>
    %78 = vector.extract_strided_slice %65 {offsets = [0, 241], sizes = [4, 15], strides = [1, 1]} : vector<4x256xf32> to vector<4x15xf32>
    %79 = vector.extract_strided_slice %65 {offsets = [0, 0], sizes = [4, 241], strides = [1, 1]} : vector<4x256xf32> to vector<4x241xf32>
    %80 = tpu.concatenate %78, %79 in 1 : vector<4x15xf32>, vector<4x241xf32> -> vector<4x256xf32>
    %c2_24 = arith.constant 2 : index
    %c0_25 = arith.constant 0 : index
    %81 = vector.load %arg16[%c2_24, %c0_25] : memref<9x256xf32, #tpu.memory_space<vmem>>, vector<1x256xf32>
    %82 = vector.broadcast %81 : vector<1x256xf32> to vector<4x256xf32>
    %83 = arith.mulf %80, %82 : vector<4x256xf32>
    %84 = vector.extract_strided_slice %65 {offsets = [0, 255], sizes = [4, 1], strides = [1, 1]} : vector<4x256xf32> to vector<4x1xf32>
    %85 = vector.extract_strided_slice %65 {offsets = [0, 0], sizes = [4, 255], strides = [1, 1]} : vector<4x256xf32> to vector<4x255xf32>
    %86 = tpu.concatenate %84, %85 in 1 : vector<4x1xf32>, vector<4x255xf32> -> vector<4x256xf32>
    %c3_26 = arith.constant 3 : index
    %c0_27 = arith.constant 0 : index
    %87 = vector.load %arg16[%c3_26, %c0_27] : memref<9x256xf32, #tpu.memory_space<vmem>>, vector<1x256xf32>
    %88 = vector.broadcast %87 : vector<1x256xf32> to vector<4x256xf32>
    %89 = arith.mulf %86, %88 : vector<4x256xf32>
    %90 = vector.extract_strided_slice %65 {offsets = [0, 1], sizes = [4, 255], strides = [1, 1]} : vector<4x256xf32> to vector<4x255xf32>
    %91 = vector.extract_strided_slice %65 {offsets = [0, 0], sizes = [4, 1], strides = [1, 1]} : vector<4x256xf32> to vector<4x1xf32>
    %92 = tpu.concatenate %90, %91 in 1 : vector<4x255xf32>, vector<4x1xf32> -> vector<4x256xf32>
    %c5_28 = arith.constant 5 : index
    %c0_29 = arith.constant 0 : index
    %93 = vector.load %arg16[%c5_28, %c0_29] : memref<9x256xf32, #tpu.memory_space<vmem>>, vector<1x256xf32>
    %94 = vector.broadcast %93 : vector<1x256xf32> to vector<4x256xf32>
    %95 = arith.mulf %92, %94 : vector<4x256xf32>
    %96 = vector.extract_strided_slice %65 {offsets = [0, 15], sizes = [4, 241], strides = [1, 1]} : vector<4x256xf32> to vector<4x241xf32>
    %97 = vector.extract_strided_slice %65 {offsets = [0, 0], sizes = [4, 15], strides = [1, 1]} : vector<4x256xf32> to vector<4x15xf32>
    %98 = tpu.concatenate %96, %97 in 1 : vector<4x241xf32>, vector<4x15xf32> -> vector<4x256xf32>
    %c6_30 = arith.constant 6 : index
    %c0_31 = arith.constant 0 : index
    %99 = vector.load %arg16[%c6_30, %c0_31] : memref<9x256xf32, #tpu.memory_space<vmem>>, vector<1x256xf32>
    %100 = vector.broadcast %99 : vector<1x256xf32> to vector<4x256xf32>
    %101 = arith.mulf %98, %100 : vector<4x256xf32>
    %102 = vector.extract_strided_slice %65 {offsets = [0, 16], sizes = [4, 240], strides = [1, 1]} : vector<4x256xf32> to vector<4x240xf32>
    %103 = vector.extract_strided_slice %65 {offsets = [0, 0], sizes = [4, 16], strides = [1, 1]} : vector<4x256xf32> to vector<4x16xf32>
    %104 = tpu.concatenate %102, %103 in 1 : vector<4x240xf32>, vector<4x16xf32> -> vector<4x256xf32>
    %c7_32 = arith.constant 7 : index
    %c0_33 = arith.constant 0 : index
    %105 = vector.load %arg16[%c7_32, %c0_33] : memref<9x256xf32, #tpu.memory_space<vmem>>, vector<1x256xf32>
    %106 = vector.broadcast %105 : vector<1x256xf32> to vector<4x256xf32>
    %107 = arith.mulf %104, %106 : vector<4x256xf32>
    %108 = vector.extract_strided_slice %65 {offsets = [0, 17], sizes = [4, 239], strides = [1, 1]} : vector<4x256xf32> to vector<4x239xf32>
    %109 = vector.extract_strided_slice %65 {offsets = [0, 0], sizes = [4, 17], strides = [1, 1]} : vector<4x256xf32> to vector<4x17xf32>
    %110 = tpu.concatenate %108, %109 in 1 : vector<4x239xf32>, vector<4x17xf32> -> vector<4x256xf32>
    %c8_34 = arith.constant 8 : index
    %c0_35 = arith.constant 0 : index
    %111 = vector.load %arg16[%c8_34, %c0_35] : memref<9x256xf32, #tpu.memory_space<vmem>>, vector<1x256xf32>
    %112 = vector.broadcast %111 : vector<1x256xf32> to vector<4x256xf32>
    %113 = arith.mulf %110, %112 : vector<4x256xf32>
    %114 = tpu.concatenate %71, %77, %83, %89, %65, %95, %101, %107, %113 in 0 : vector<4x256xf32>, vector<4x256xf32>, vector<4x256xf32>, vector<4x256xf32>, vector<4x256xf32>, vector<4x256xf32>, vector<4x256xf32>, vector<4x256xf32>, vector<4x256xf32> -> vector<36x256xf32>
    %c0_36 = arith.constant 0 : index
    %c0_37 = arith.constant 0 : index
    %115 = vector.load %arg3[%c0_36, %c0_37] : memref<4x36xf32, #tpu.memory_space<vmem>>, vector<4x36xf32>
    %cst_38 = arith.constant dense<0.000000e+00> : vector<4x256xf32>
    %116 = tpu.matmul %115, %114, %cst_38 {dimension_numbers = #tpu.dot_dimension_numbers<[1], [0], [0], [1], [0, 0, 1, 1], [], []>} : vector<4x36xf32>, vector<36x256xf32>, vector<4x256xf32> -> vector<4x256xf32>
    %cst_39 = arith.constant dense<0.000000e+00> : vector<4xf32>
    %117 = vector.multi_reduction <add>, %116, %cst_39 [1] : vector<4x256xf32> to vector<4xf32>
    %118 = vector.shape_cast %117 : vector<4xf32> to vector<4x1xf32>
    %cst_40 = arith.constant 3.906250e-03 : f32
    %119 = vector.broadcast %cst_40 : f32 to vector<4x1xf32>
    %120 = arith.mulf %118, %119 : vector<4x1xf32>
    %121 = vector.broadcast %120 : vector<4x1xf32> to vector<4x256xf32>
    %122 = arith.subf %116, %121 : vector<4x256xf32>
    %123 = arith.mulf %122, %122 : vector<4x256xf32>
    %cst_41 = arith.constant dense<0.000000e+00> : vector<4xf32>
    %124 = vector.multi_reduction <add>, %123, %cst_41 [1] : vector<4x256xf32> to vector<4xf32>
    %125 = vector.shape_cast %124 : vector<4xf32> to vector<4x1xf32>
    %cst_42 = arith.constant 3.906250e-03 : f32
    %126 = vector.broadcast %cst_42 : f32 to vector<4x1xf32>
    %127 = arith.mulf %125, %126 : vector<4x1xf32>
    %cst_43 = arith.constant 9.99999974E-6 : f32
    %128 = vector.broadcast %cst_43 : f32 to vector<4x1xf32>
    %129 = arith.addf %127, %128 : vector<4x1xf32>
    %130 = math.rsqrt %129 : vector<4x1xf32>
    %131 = vector.broadcast %130 : vector<4x1xf32> to vector<4x256xf32>
    %132 = arith.mulf %122, %131 : vector<4x256xf32>
    %cst_44 = arith.constant 0.000000e+00 : f32
    %133 = vector.broadcast %cst_44 : f32 to vector<4x256xf32>
    %134 = arith.cmpf oge, %132, %133 : vector<4x256xf32>
    %cst_45 = arith.constant 2.000000e-01 : f32
    %135 = vector.broadcast %cst_45 : f32 to vector<4x256xf32>
    %136 = arith.mulf %135, %132 : vector<4x256xf32>
    %137 = arith.select %134, %132, %136 : vector<4x256xi1>, vector<4x256xf32>
    %c0_46 = arith.constant 0 : index
    %c0_47 = arith.constant 0 : index
    %138 = vector.load %arg19[%c0_46, %c0_47] : memref<256x64xf32, #tpu.memory_space<vmem>>, vector<256x64xf32>
    %cst_48 = arith.constant dense<0.000000e+00> : vector<4x64xf32>
    %139 = tpu.matmul %137, %138, %cst_48 {dimension_numbers = #tpu.dot_dimension_numbers<[1], [0], [0], [1], [0, 0, 1, 1], [], []>} : vector<4x256xf32>, vector<256x64xf32>, vector<4x64xf32> -> vector<4x64xf32>
    %140 = vector.extract_strided_slice %139 {offsets = [0, 55], sizes = [4, 9], strides = [1, 1]} : vector<4x64xf32> to vector<4x9xf32>
    %141 = vector.extract_strided_slice %139 {offsets = [0, 0], sizes = [4, 55], strides = [1, 1]} : vector<4x64xf32> to vector<4x55xf32>
    %142 = tpu.concatenate %140, %141 in 1 : vector<4x9xf32>, vector<4x55xf32> -> vector<4x64xf32>
    %c0_49 = arith.constant 0 : index
    %c0_50 = arith.constant 0 : index
    %143 = vector.load %arg17[%c0_49, %c0_50] : memref<9x64xf32, #tpu.memory_space<vmem>>, vector<1x64xf32>
    %144 = vector.broadcast %143 : vector<1x64xf32> to vector<4x64xf32>
    %145 = arith.mulf %142, %144 : vector<4x64xf32>
    %146 = vector.extract_strided_slice %139 {offsets = [0, 56], sizes = [4, 8], strides = [1, 1]} : vector<4x64xf32> to vector<4x8xf32>
    %147 = vector.extract_strided_slice %139 {offsets = [0, 0], sizes = [4, 56], strides = [1, 1]} : vector<4x64xf32> to vector<4x56xf32>
    %148 = tpu.concatenate %146, %147 in 1 : vector<4x8xf32>, vector<4x56xf32> -> vector<4x64xf32>
    %c1_51 = arith.constant 1 : index
    %c0_52 = arith.constant 0 : index
    %149 = vector.load %arg17[%c1_51, %c0_52] : memref<9x64xf32, #tpu.memory_space<vmem>>, vector<1x64xf32>
    %150 = vector.broadcast %149 : vector<1x64xf32> to vector<4x64xf32>
    %151 = arith.mulf %148, %150 : vector<4x64xf32>
    %152 = vector.extract_strided_slice %139 {offsets = [0, 57], sizes = [4, 7], strides = [1, 1]} : vector<4x64xf32> to vector<4x7xf32>
    %153 = vector.extract_strided_slice %139 {offsets = [0, 0], sizes = [4, 57], strides = [1, 1]} : vector<4x64xf32> to vector<4x57xf32>
    %154 = tpu.concatenate %152, %153 in 1 : vector<4x7xf32>, vector<4x57xf32> -> vector<4x64xf32>
    %c2_53 = arith.constant 2 : index
    %c0_54 = arith.constant 0 : index
    %155 = vector.load %arg17[%c2_53, %c0_54] : memref<9x64xf32, #tpu.memory_space<vmem>>, vector<1x64xf32>
    %156 = vector.broadcast %155 : vector<1x64xf32> to vector<4x64xf32>
    %157 = arith.mulf %154, %156 : vector<4x64xf32>
    %158 = vector.extract_strided_slice %139 {offsets = [0, 63], sizes = [4, 1], strides = [1, 1]} : vector<4x64xf32> to vector<4x1xf32>
    %159 = vector.extract_strided_slice %139 {offsets = [0, 0], sizes = [4, 63], strides = [1, 1]} : vector<4x64xf32> to vector<4x63xf32>
    %160 = tpu.concatenate %158, %159 in 1 : vector<4x1xf32>, vector<4x63xf32> -> vector<4x64xf32>
    %c3_55 = arith.constant 3 : index
    %c0_56 = arith.constant 0 : index
    %161 = vector.load %arg17[%c3_55, %c0_56] : memref<9x64xf32, #tpu.memory_space<vmem>>, vector<1x64xf32>
    %162 = vector.broadcast %161 : vector<1x64xf32> to vector<4x64xf32>
    %163 = arith.mulf %160, %162 : vector<4x64xf32>
    %164 = vector.extract_strided_slice %139 {offsets = [0, 1], sizes = [4, 63], strides = [1, 1]} : vector<4x64xf32> to vector<4x63xf32>
    %165 = vector.extract_strided_slice %139 {offsets = [0, 0], sizes = [4, 1], strides = [1, 1]} : vector<4x64xf32> to vector<4x1xf32>
    %166 = tpu.concatenate %164, %165 in 1 : vector<4x63xf32>, vector<4x1xf32> -> vector<4x64xf32>
    %c5_57 = arith.constant 5 : index
    %c0_58 = arith.constant 0 : index
    %167 = vector.load %arg17[%c5_57, %c0_58] : memref<9x64xf32, #tpu.memory_space<vmem>>, vector<1x64xf32>
    %168 = vector.broadcast %167 : vector<1x64xf32> to vector<4x64xf32>
    %169 = arith.mulf %166, %168 : vector<4x64xf32>
    %170 = vector.extract_strided_slice %139 {offsets = [0, 7], sizes = [4, 57], strides = [1, 1]} : vector<4x64xf32> to vector<4x57xf32>
    %171 = vector.extract_strided_slice %139 {offsets = [0, 0], sizes = [4, 7], strides = [1, 1]} : vector<4x64xf32> to vector<4x7xf32>
    %172 = tpu.concatenate %170, %171 in 1 : vector<4x57xf32>, vector<4x7xf32> -> vector<4x64xf32>
    %c6_59 = arith.constant 6 : index
    %c0_60 = arith.constant 0 : index
    %173 = vector.load %arg17[%c6_59, %c0_60] : memref<9x64xf32, #tpu.memory_space<vmem>>, vector<1x64xf32>
    %174 = vector.broadcast %173 : vector<1x64xf32> to vector<4x64xf32>
    %175 = arith.mulf %172, %174 : vector<4x64xf32>
    %176 = vector.extract_strided_slice %139 {offsets = [0, 8], sizes = [4, 56], strides = [1, 1]} : vector<4x64xf32> to vector<4x56xf32>
    %177 = vector.extract_strided_slice %139 {offsets = [0, 0], sizes = [4, 8], strides = [1, 1]} : vector<4x64xf32> to vector<4x8xf32>
    %178 = tpu.concatenate %176, %177 in 1 : vector<4x56xf32>, vector<4x8xf32> -> vector<4x64xf32>
    %c7_61 = arith.constant 7 : index
    %c0_62 = arith.constant 0 : index
    %179 = vector.load %arg17[%c7_61, %c0_62] : memref<9x64xf32, #tpu.memory_space<vmem>>, vector<1x64xf32>
    %180 = vector.broadcast %179 : vector<1x64xf32> to vector<4x64xf32>
    %181 = arith.mulf %178, %180 : vector<4x64xf32>
    %182 = vector.extract_strided_slice %139 {offsets = [0, 9], sizes = [4, 55], strides = [1, 1]} : vector<4x64xf32> to vector<4x55xf32>
    %183 = vector.extract_strided_slice %139 {offsets = [0, 0], sizes = [4, 9], strides = [1, 1]} : vector<4x64xf32> to vector<4x9xf32>
    %184 = tpu.concatenate %182, %183 in 1 : vector<4x55xf32>, vector<4x9xf32> -> vector<4x64xf32>
    %c8_63 = arith.constant 8 : index
    %c0_64 = arith.constant 0 : index
    %185 = vector.load %arg17[%c8_63, %c0_64] : memref<9x64xf32, #tpu.memory_space<vmem>>, vector<1x64xf32>
    %186 = vector.broadcast %185 : vector<1x64xf32> to vector<4x64xf32>
    %187 = arith.mulf %184, %186 : vector<4x64xf32>
    %188 = tpu.concatenate %145, %151, %157, %163, %139, %169, %175, %181, %187 in 0 : vector<4x64xf32>, vector<4x64xf32>, vector<4x64xf32>, vector<4x64xf32>, vector<4x64xf32>, vector<4x64xf32>, vector<4x64xf32>, vector<4x64xf32>, vector<4x64xf32> -> vector<36x64xf32>
    %c0_65 = arith.constant 0 : index
    %c0_66 = arith.constant 0 : index
    %189 = vector.load %arg4[%c0_65, %c0_66] : memref<8x36xf32, #tpu.memory_space<vmem>>, vector<8x36xf32>
    %cst_67 = arith.constant dense<0.000000e+00> : vector<8x64xf32>
    %190 = tpu.matmul %189, %188, %cst_67 {dimension_numbers = #tpu.dot_dimension_numbers<[1], [0], [0], [1], [0, 0, 1, 1], [], []>} : vector<8x36xf32>, vector<36x64xf32>, vector<8x64xf32> -> vector<8x64xf32>
    %cst_68 = arith.constant dense<0.000000e+00> : vector<8xf32>
    %191 = vector.multi_reduction <add>, %190, %cst_68 [1] : vector<8x64xf32> to vector<8xf32>
    %192 = vector.shape_cast %191 : vector<8xf32> to vector<8x1xf32>
    %cst_69 = arith.constant 1.562500e-02 : f32
    %193 = vector.broadcast %cst_69 : f32 to vector<8x1xf32>
    %194 = arith.mulf %192, %193 : vector<8x1xf32>
    %195 = vector.broadcast %194 : vector<8x1xf32> to vector<8x64xf32>
    %196 = arith.subf %190, %195 : vector<8x64xf32>
    %197 = arith.mulf %196, %196 : vector<8x64xf32>
    %cst_70 = arith.constant dense<0.000000e+00> : vector<8xf32>
    %198 = vector.multi_reduction <add>, %197, %cst_70 [1] : vector<8x64xf32> to vector<8xf32>
    %199 = vector.shape_cast %198 : vector<8xf32> to vector<8x1xf32>
    %cst_71 = arith.constant 1.562500e-02 : f32
    %200 = vector.broadcast %cst_71 : f32 to vector<8x1xf32>
    %201 = arith.mulf %199, %200 : vector<8x1xf32>
    %cst_72 = arith.constant 9.99999974E-6 : f32
    %202 = vector.broadcast %cst_72 : f32 to vector<8x1xf32>
    %203 = arith.addf %201, %202 : vector<8x1xf32>
    %204 = math.rsqrt %203 : vector<8x1xf32>
    %205 = vector.broadcast %204 : vector<8x1xf32> to vector<8x64xf32>
    %206 = arith.mulf %196, %205 : vector<8x64xf32>
    %cst_73 = arith.constant 0.000000e+00 : f32
    %207 = vector.broadcast %cst_73 : f32 to vector<8x64xf32>
    %208 = arith.cmpf oge, %206, %207 : vector<8x64xf32>
    %cst_74 = arith.constant 2.000000e-01 : f32
    %209 = vector.broadcast %cst_74 : f32 to vector<8x64xf32>
    %210 = arith.mulf %209, %206 : vector<8x64xf32>
    %211 = arith.select %208, %206, %210 : vector<8x64xi1>, vector<8x64xf32>
    %212 = vector.extract_strided_slice %211 {offsets = [0, 55], sizes = [8, 9], strides = [1, 1]} : vector<8x64xf32> to vector<8x9xf32>
    %213 = vector.extract_strided_slice %211 {offsets = [0, 0], sizes = [8, 55], strides = [1, 1]} : vector<8x64xf32> to vector<8x55xf32>
    %214 = tpu.concatenate %212, %213 in 1 : vector<8x9xf32>, vector<8x55xf32> -> vector<8x64xf32>
    %c0_75 = arith.constant 0 : index
    %c0_76 = arith.constant 0 : index
    %215 = vector.load %arg17[%c0_75, %c0_76] : memref<9x64xf32, #tpu.memory_space<vmem>>, vector<1x64xf32>
    %216 = vector.broadcast %215 : vector<1x64xf32> to vector<8x64xf32>
    %217 = arith.mulf %214, %216 : vector<8x64xf32>
    %218 = vector.extract_strided_slice %211 {offsets = [0, 56], sizes = [8, 8], strides = [1, 1]} : vector<8x64xf32> to vector<8x8xf32>
    %219 = vector.extract_strided_slice %211 {offsets = [0, 0], sizes = [8, 56], strides = [1, 1]} : vector<8x64xf32> to vector<8x56xf32>
    %220 = tpu.concatenate %218, %219 in 1 : vector<8x8xf32>, vector<8x56xf32> -> vector<8x64xf32>
    %c1_77 = arith.constant 1 : index
    %c0_78 = arith.constant 0 : index
    %221 = vector.load %arg17[%c1_77, %c0_78] : memref<9x64xf32, #tpu.memory_space<vmem>>, vector<1x64xf32>
    %222 = vector.broadcast %221 : vector<1x64xf32> to vector<8x64xf32>
    %223 = arith.mulf %220, %222 : vector<8x64xf32>
    %224 = vector.extract_strided_slice %211 {offsets = [0, 57], sizes = [8, 7], strides = [1, 1]} : vector<8x64xf32> to vector<8x7xf32>
    %225 = vector.extract_strided_slice %211 {offsets = [0, 0], sizes = [8, 57], strides = [1, 1]} : vector<8x64xf32> to vector<8x57xf32>
    %226 = tpu.concatenate %224, %225 in 1 : vector<8x7xf32>, vector<8x57xf32> -> vector<8x64xf32>
    %c2_79 = arith.constant 2 : index
    %c0_80 = arith.constant 0 : index
    %227 = vector.load %arg17[%c2_79, %c0_80] : memref<9x64xf32, #tpu.memory_space<vmem>>, vector<1x64xf32>
    %228 = vector.broadcast %227 : vector<1x64xf32> to vector<8x64xf32>
    %229 = arith.mulf %226, %228 : vector<8x64xf32>
    %230 = vector.extract_strided_slice %211 {offsets = [0, 63], sizes = [8, 1], strides = [1, 1]} : vector<8x64xf32> to vector<8x1xf32>
    %231 = vector.extract_strided_slice %211 {offsets = [0, 0], sizes = [8, 63], strides = [1, 1]} : vector<8x64xf32> to vector<8x63xf32>
    %232 = tpu.concatenate %230, %231 in 1 : vector<8x1xf32>, vector<8x63xf32> -> vector<8x64xf32>
    %c3_81 = arith.constant 3 : index
    %c0_82 = arith.constant 0 : index
    %233 = vector.load %arg17[%c3_81, %c0_82] : memref<9x64xf32, #tpu.memory_space<vmem>>, vector<1x64xf32>
    %234 = vector.broadcast %233 : vector<1x64xf32> to vector<8x64xf32>
    %235 = arith.mulf %232, %234 : vector<8x64xf32>
    %236 = vector.extract_strided_slice %211 {offsets = [0, 1], sizes = [8, 63], strides = [1, 1]} : vector<8x64xf32> to vector<8x63xf32>
    %237 = vector.extract_strided_slice %211 {offsets = [0, 0], sizes = [8, 1], strides = [1, 1]} : vector<8x64xf32> to vector<8x1xf32>
    %238 = tpu.concatenate %236, %237 in 1 : vector<8x63xf32>, vector<8x1xf32> -> vector<8x64xf32>
    %c5_83 = arith.constant 5 : index
    %c0_84 = arith.constant 0 : index
    %239 = vector.load %arg17[%c5_83, %c0_84] : memref<9x64xf32, #tpu.memory_space<vmem>>, vector<1x64xf32>
    %240 = vector.broadcast %239 : vector<1x64xf32> to vector<8x64xf32>
    %241 = arith.mulf %238, %240 : vector<8x64xf32>
    %242 = vector.extract_strided_slice %211 {offsets = [0, 7], sizes = [8, 57], strides = [1, 1]} : vector<8x64xf32> to vector<8x57xf32>
    %243 = vector.extract_strided_slice %211 {offsets = [0, 0], sizes = [8, 7], strides = [1, 1]} : vector<8x64xf32> to vector<8x7xf32>
    %244 = tpu.concatenate %242, %243 in 1 : vector<8x57xf32>, vector<8x7xf32> -> vector<8x64xf32>
    %c6_85 = arith.constant 6 : index
    %c0_86 = arith.constant 0 : index
    %245 = vector.load %arg17[%c6_85, %c0_86] : memref<9x64xf32, #tpu.memory_space<vmem>>, vector<1x64xf32>
    %246 = vector.broadcast %245 : vector<1x64xf32> to vector<8x64xf32>
    %247 = arith.mulf %244, %246 : vector<8x64xf32>
    %248 = vector.extract_strided_slice %211 {offsets = [0, 8], sizes = [8, 56], strides = [1, 1]} : vector<8x64xf32> to vector<8x56xf32>
    %249 = vector.extract_strided_slice %211 {offsets = [0, 0], sizes = [8, 8], strides = [1, 1]} : vector<8x64xf32> to vector<8x8xf32>
    %250 = tpu.concatenate %248, %249 in 1 : vector<8x56xf32>, vector<8x8xf32> -> vector<8x64xf32>
    %c7_87 = arith.constant 7 : index
    %c0_88 = arith.constant 0 : index
    %251 = vector.load %arg17[%c7_87, %c0_88] : memref<9x64xf32, #tpu.memory_space<vmem>>, vector<1x64xf32>
    %252 = vector.broadcast %251 : vector<1x64xf32> to vector<8x64xf32>
    %253 = arith.mulf %250, %252 : vector<8x64xf32>
    %254 = vector.extract_strided_slice %211 {offsets = [0, 9], sizes = [8, 55], strides = [1, 1]} : vector<8x64xf32> to vector<8x55xf32>
    %255 = vector.extract_strided_slice %211 {offsets = [0, 0], sizes = [8, 9], strides = [1, 1]} : vector<8x64xf32> to vector<8x9xf32>
    %256 = tpu.concatenate %254, %255 in 1 : vector<8x55xf32>, vector<8x9xf32> -> vector<8x64xf32>
    %c8_89 = arith.constant 8 : index
    %c0_90 = arith.constant 0 : index
    %257 = vector.load %arg17[%c8_89, %c0_90] : memref<9x64xf32, #tpu.memory_space<vmem>>, vector<1x64xf32>
    %258 = vector.broadcast %257 : vector<1x64xf32> to vector<8x64xf32>
    %259 = arith.mulf %256, %258 : vector<8x64xf32>
    %260 = tpu.concatenate %217, %223, %229, %235, %211, %241, %247, %253, %259 in 0 : vector<8x64xf32>, vector<8x64xf32>, vector<8x64xf32>, vector<8x64xf32>, vector<8x64xf32>, vector<8x64xf32>, vector<8x64xf32>, vector<8x64xf32>, vector<8x64xf32> -> vector<72x64xf32>
    %c0_91 = arith.constant 0 : index
    %c0_92 = arith.constant 0 : index
    %261 = vector.load %arg5[%c0_91, %c0_92] : memref<8x72xf32, #tpu.memory_space<vmem>>, vector<8x72xf32>
    %cst_93 = arith.constant dense<0.000000e+00> : vector<8x64xf32>
    %262 = tpu.matmul %261, %260, %cst_93 {dimension_numbers = #tpu.dot_dimension_numbers<[1], [0], [0], [1], [0, 0, 1, 1], [], []>} : vector<8x72xf32>, vector<72x64xf32>, vector<8x64xf32> -> vector<8x64xf32>
    %cst_94 = arith.constant dense<0.000000e+00> : vector<8xf32>
    %263 = vector.multi_reduction <add>, %262, %cst_94 [1] : vector<8x64xf32> to vector<8xf32>
    %264 = vector.shape_cast %263 : vector<8xf32> to vector<8x1xf32>
    %cst_95 = arith.constant 1.562500e-02 : f32
    %265 = vector.broadcast %cst_95 : f32 to vector<8x1xf32>
    %266 = arith.mulf %264, %265 : vector<8x1xf32>
    %267 = vector.broadcast %266 : vector<8x1xf32> to vector<8x64xf32>
    %268 = arith.subf %262, %267 : vector<8x64xf32>
    %269 = arith.mulf %268, %268 : vector<8x64xf32>
    %cst_96 = arith.constant dense<0.000000e+00> : vector<8xf32>
    %270 = vector.multi_reduction <add>, %269, %cst_96 [1] : vector<8x64xf32> to vector<8xf32>
    %271 = vector.shape_cast %270 : vector<8xf32> to vector<8x1xf32>
    %cst_97 = arith.constant 1.562500e-02 : f32
    %272 = vector.broadcast %cst_97 : f32 to vector<8x1xf32>
    %273 = arith.mulf %271, %272 : vector<8x1xf32>
    %cst_98 = arith.constant 9.99999974E-6 : f32
    %274 = vector.broadcast %cst_98 : f32 to vector<8x1xf32>
    %275 = arith.addf %273, %274 : vector<8x1xf32>
    %276 = math.rsqrt %275 : vector<8x1xf32>
    %277 = vector.broadcast %276 : vector<8x1xf32> to vector<8x64xf32>
    %278 = arith.mulf %268, %277 : vector<8x64xf32>
    %cst_99 = arith.constant 0.000000e+00 : f32
    %279 = vector.broadcast %cst_99 : f32 to vector<8x64xf32>
    %280 = arith.cmpf oge, %278, %279 : vector<8x64xf32>
    %cst_100 = arith.constant 2.000000e-01 : f32
    %281 = vector.broadcast %cst_100 : f32 to vector<8x64xf32>
    %282 = arith.mulf %281, %278 : vector<8x64xf32>
    %283 = arith.select %280, %278, %282 : vector<8x64xi1>, vector<8x64xf32>
    %c0_101 = arith.constant 0 : index
    %c0_102 = arith.constant 0 : index
    %284 = vector.load %arg20[%c0_101, %c0_102] : memref<64x16xf32, #tpu.memory_space<vmem>>, vector<64x16xf32>
    %cst_103 = arith.constant dense<0.000000e+00> : vector<8x16xf32>
    %285 = tpu.matmul %283, %284, %cst_103 {dimension_numbers = #tpu.dot_dimension_numbers<[1], [0], [0], [1], [0, 0, 1, 1], [], []>} : vector<8x64xf32>, vector<64x16xf32>, vector<8x16xf32> -> vector<8x16xf32>
    %286 = vector.extract_strided_slice %285 {offsets = [0, 11], sizes = [8, 5], strides = [1, 1]} : vector<8x16xf32> to vector<8x5xf32>
    %287 = vector.extract_strided_slice %285 {offsets = [0, 0], sizes = [8, 11], strides = [1, 1]} : vector<8x16xf32> to vector<8x11xf32>
    %288 = tpu.concatenate %286, %287 in 1 : vector<8x5xf32>, vector<8x11xf32> -> vector<8x16xf32>
    %c0_104 = arith.constant 0 : index
    %c0_105 = arith.constant 0 : index
    %289 = vector.load %arg18[%c0_104, %c0_105] : memref<9x16xf32, #tpu.memory_space<vmem>>, vector<1x16xf32>
    %290 = vector.broadcast %289 : vector<1x16xf32> to vector<8x16xf32>
    %291 = arith.mulf %288, %290 : vector<8x16xf32>
    %292 = vector.extract_strided_slice %285 {offsets = [0, 12], sizes = [8, 4], strides = [1, 1]} : vector<8x16xf32> to vector<8x4xf32>
    %293 = vector.extract_strided_slice %285 {offsets = [0, 0], sizes = [8, 12], strides = [1, 1]} : vector<8x16xf32> to vector<8x12xf32>
    %294 = tpu.concatenate %292, %293 in 1 : vector<8x4xf32>, vector<8x12xf32> -> vector<8x16xf32>
    %c1_106 = arith.constant 1 : index
    %c0_107 = arith.constant 0 : index
    %295 = vector.load %arg18[%c1_106, %c0_107] : memref<9x16xf32, #tpu.memory_space<vmem>>, vector<1x16xf32>
    %296 = vector.broadcast %295 : vector<1x16xf32> to vector<8x16xf32>
    %297 = arith.mulf %294, %296 : vector<8x16xf32>
    %298 = vector.extract_strided_slice %285 {offsets = [0, 13], sizes = [8, 3], strides = [1, 1]} : vector<8x16xf32> to vector<8x3xf32>
    %299 = vector.extract_strided_slice %285 {offsets = [0, 0], sizes = [8, 13], strides = [1, 1]} : vector<8x16xf32> to vector<8x13xf32>
    %300 = tpu.concatenate %298, %299 in 1 : vector<8x3xf32>, vector<8x13xf32> -> vector<8x16xf32>
    %c2_108 = arith.constant 2 : index
    %c0_109 = arith.constant 0 : index
    %301 = vector.load %arg18[%c2_108, %c0_109] : memref<9x16xf32, #tpu.memory_space<vmem>>, vector<1x16xf32>
    %302 = vector.broadcast %301 : vector<1x16xf32> to vector<8x16xf32>
    %303 = arith.mulf %300, %302 : vector<8x16xf32>
    %304 = vector.extract_strided_slice %285 {offsets = [0, 15], sizes = [8, 1], strides = [1, 1]} : vector<8x16xf32> to vector<8x1xf32>
    %305 = vector.extract_strided_slice %285 {offsets = [0, 0], sizes = [8, 15], strides = [1, 1]} : vector<8x16xf32> to vector<8x15xf32>
    %306 = tpu.concatenate %304, %305 in 1 : vector<8x1xf32>, vector<8x15xf32> -> vector<8x16xf32>
    %c3_110 = arith.constant 3 : index
    %c0_111 = arith.constant 0 : index
    %307 = vector.load %arg18[%c3_110, %c0_111] : memref<9x16xf32, #tpu.memory_space<vmem>>, vector<1x16xf32>
    %308 = vector.broadcast %307 : vector<1x16xf32> to vector<8x16xf32>
    %309 = arith.mulf %306, %308 : vector<8x16xf32>
    %310 = vector.extract_strided_slice %285 {offsets = [0, 1], sizes = [8, 15], strides = [1, 1]} : vector<8x16xf32> to vector<8x15xf32>
    %311 = vector.extract_strided_slice %285 {offsets = [0, 0], sizes = [8, 1], strides = [1, 1]} : vector<8x16xf32> to vector<8x1xf32>
    %312 = tpu.concatenate %310, %311 in 1 : vector<8x15xf32>, vector<8x1xf32> -> vector<8x16xf32>
    %c5_112 = arith.constant 5 : index
    %c0_113 = arith.constant 0 : index
    %313 = vector.load %arg18[%c5_112, %c0_113] : memref<9x16xf32, #tpu.memory_space<vmem>>, vector<1x16xf32>
    %314 = vector.broadcast %313 : vector<1x16xf32> to vector<8x16xf32>
    %315 = arith.mulf %312, %314 : vector<8x16xf32>
    %316 = vector.extract_strided_slice %285 {offsets = [0, 3], sizes = [8, 13], strides = [1, 1]} : vector<8x16xf32> to vector<8x13xf32>
    %317 = vector.extract_strided_slice %285 {offsets = [0, 0], sizes = [8, 3], strides = [1, 1]} : vector<8x16xf32> to vector<8x3xf32>
    %318 = tpu.concatenate %316, %317 in 1 : vector<8x13xf32>, vector<8x3xf32> -> vector<8x16xf32>
    %c6_114 = arith.constant 6 : index
    %c0_115 = arith.constant 0 : index
    %319 = vector.load %arg18[%c6_114, %c0_115] : memref<9x16xf32, #tpu.memory_space<vmem>>, vector<1x16xf32>
    %320 = vector.broadcast %319 : vector<1x16xf32> to vector<8x16xf32>
    %321 = arith.mulf %318, %320 : vector<8x16xf32>
    %322 = vector.extract_strided_slice %285 {offsets = [0, 4], sizes = [8, 12], strides = [1, 1]} : vector<8x16xf32> to vector<8x12xf32>
    %323 = vector.extract_strided_slice %285 {offsets = [0, 0], sizes = [8, 4], strides = [1, 1]} : vector<8x16xf32> to vector<8x4xf32>
    %324 = tpu.concatenate %322, %323 in 1 : vector<8x12xf32>, vector<8x4xf32> -> vector<8x16xf32>
    %c7_116 = arith.constant 7 : index
    %c0_117 = arith.constant 0 : index
    %325 = vector.load %arg18[%c7_116, %c0_117] : memref<9x16xf32, #tpu.memory_space<vmem>>, vector<1x16xf32>
    %326 = vector.broadcast %325 : vector<1x16xf32> to vector<8x16xf32>
    %327 = arith.mulf %324, %326 : vector<8x16xf32>
    %328 = vector.extract_strided_slice %285 {offsets = [0, 5], sizes = [8, 11], strides = [1, 1]} : vector<8x16xf32> to vector<8x11xf32>
    %329 = vector.extract_strided_slice %285 {offsets = [0, 0], sizes = [8, 5], strides = [1, 1]} : vector<8x16xf32> to vector<8x5xf32>
    %330 = tpu.concatenate %328, %329 in 1 : vector<8x11xf32>, vector<8x5xf32> -> vector<8x16xf32>
    %c8_118 = arith.constant 8 : index
    %c0_119 = arith.constant 0 : index
    %331 = vector.load %arg18[%c8_118, %c0_119] : memref<9x16xf32, #tpu.memory_space<vmem>>, vector<1x16xf32>
    %332 = vector.broadcast %331 : vector<1x16xf32> to vector<8x16xf32>
    %333 = arith.mulf %330, %332 : vector<8x16xf32>
    %334 = tpu.concatenate %291, %297, %303, %309, %285, %315, %321, %327, %333 in 0 : vector<8x16xf32>, vector<8x16xf32>, vector<8x16xf32>, vector<8x16xf32>, vector<8x16xf32>, vector<8x16xf32>, vector<8x16xf32>, vector<8x16xf32>, vector<8x16xf32> -> vector<72x16xf32>
    %c0_120 = arith.constant 0 : index
    %c0_121 = arith.constant 0 : index
    %335 = vector.load %arg6[%c0_120, %c0_121] : memref<16x72xf32, #tpu.memory_space<vmem>>, vector<16x72xf32>
    %cst_122 = arith.constant dense<0.000000e+00> : vector<16x16xf32>
    %336 = tpu.matmul %335, %334, %cst_122 {dimension_numbers = #tpu.dot_dimension_numbers<[1], [0], [0], [1], [0, 0, 1, 1], [], []>} : vector<16x72xf32>, vector<72x16xf32>, vector<16x16xf32> -> vector<16x16xf32>
    %cst_123 = arith.constant dense<0.000000e+00> : vector<16xf32>
    %337 = vector.multi_reduction <add>, %336, %cst_123 [1] : vector<16x16xf32> to vector<16xf32>
    %338 = vector.shape_cast %337 : vector<16xf32> to vector<16x1xf32>
    %cst_124 = arith.constant 6.250000e-02 : f32
    %339 = vector.broadcast %cst_124 : f32 to vector<16x1xf32>
    %340 = arith.mulf %338, %339 : vector<16x1xf32>
    %341 = vector.broadcast %340 : vector<16x1xf32> to vector<16x16xf32>
    %342 = arith.subf %336, %341 : vector<16x16xf32>
    %343 = arith.mulf %342, %342 : vector<16x16xf32>
    %cst_125 = arith.constant dense<0.000000e+00> : vector<16xf32>
    %344 = vector.multi_reduction <add>, %343, %cst_125 [1] : vector<16x16xf32> to vector<16xf32>
    %345 = vector.shape_cast %344 : vector<16xf32> to vector<16x1xf32>
    %cst_126 = arith.constant 6.250000e-02 : f32
    %346 = vector.broadcast %cst_126 : f32 to vector<16x1xf32>
    %347 = arith.mulf %345, %346 : vector<16x1xf32>
    %cst_127 = arith.constant 9.99999974E-6 : f32
    %348 = vector.broadcast %cst_127 : f32 to vector<16x1xf32>
    %349 = arith.addf %347, %348 : vector<16x1xf32>
    %350 = math.rsqrt %349 : vector<16x1xf32>
    %351 = vector.broadcast %350 : vector<16x1xf32> to vector<16x16xf32>
    %352 = arith.mulf %342, %351 : vector<16x16xf32>
    %cst_128 = arith.constant 0.000000e+00 : f32
    %353 = vector.broadcast %cst_128 : f32 to vector<16x16xf32>
    %354 = arith.cmpf oge, %352, %353 : vector<16x16xf32>
    %cst_129 = arith.constant 2.000000e-01 : f32
    %355 = vector.broadcast %cst_129 : f32 to vector<16x16xf32>
    %356 = arith.mulf %355, %352 : vector<16x16xf32>
    %357 = arith.select %354, %352, %356 : vector<16x16xi1>, vector<16x16xf32>
    %358 = vector.extract_strided_slice %357 {offsets = [0, 11], sizes = [16, 5], strides = [1, 1]} : vector<16x16xf32> to vector<16x5xf32>
    %359 = vector.extract_strided_slice %357 {offsets = [0, 0], sizes = [16, 11], strides = [1, 1]} : vector<16x16xf32> to vector<16x11xf32>
    %360 = tpu.concatenate %358, %359 in 1 : vector<16x5xf32>, vector<16x11xf32> -> vector<16x16xf32>
    %c0_130 = arith.constant 0 : index
    %c0_131 = arith.constant 0 : index
    %361 = vector.load %arg18[%c0_130, %c0_131] : memref<9x16xf32, #tpu.memory_space<vmem>>, vector<1x16xf32>
    %362 = vector.broadcast %361 : vector<1x16xf32> to vector<16x16xf32>
    %363 = arith.mulf %360, %362 : vector<16x16xf32>
    %364 = vector.extract_strided_slice %357 {offsets = [0, 12], sizes = [16, 4], strides = [1, 1]} : vector<16x16xf32> to vector<16x4xf32>
    %365 = vector.extract_strided_slice %357 {offsets = [0, 0], sizes = [16, 12], strides = [1, 1]} : vector<16x16xf32> to vector<16x12xf32>
    %366 = tpu.concatenate %364, %365 in 1 : vector<16x4xf32>, vector<16x12xf32> -> vector<16x16xf32>
    %c1_132 = arith.constant 1 : index
    %c0_133 = arith.constant 0 : index
    %367 = vector.load %arg18[%c1_132, %c0_133] : memref<9x16xf32, #tpu.memory_space<vmem>>, vector<1x16xf32>
    %368 = vector.broadcast %367 : vector<1x16xf32> to vector<16x16xf32>
    %369 = arith.mulf %366, %368 : vector<16x16xf32>
    %370 = vector.extract_strided_slice %357 {offsets = [0, 13], sizes = [16, 3], strides = [1, 1]} : vector<16x16xf32> to vector<16x3xf32>
    %371 = vector.extract_strided_slice %357 {offsets = [0, 0], sizes = [16, 13], strides = [1, 1]} : vector<16x16xf32> to vector<16x13xf32>
    %372 = tpu.concatenate %370, %371 in 1 : vector<16x3xf32>, vector<16x13xf32> -> vector<16x16xf32>
    %c2_134 = arith.constant 2 : index
    %c0_135 = arith.constant 0 : index
    %373 = vector.load %arg18[%c2_134, %c0_135] : memref<9x16xf32, #tpu.memory_space<vmem>>, vector<1x16xf32>
    %374 = vector.broadcast %373 : vector<1x16xf32> to vector<16x16xf32>
    %375 = arith.mulf %372, %374 : vector<16x16xf32>
    %376 = vector.extract_strided_slice %357 {offsets = [0, 15], sizes = [16, 1], strides = [1, 1]} : vector<16x16xf32> to vector<16x1xf32>
    %377 = vector.extract_strided_slice %357 {offsets = [0, 0], sizes = [16, 15], strides = [1, 1]} : vector<16x16xf32> to vector<16x15xf32>
    %378 = tpu.concatenate %376, %377 in 1 : vector<16x1xf32>, vector<16x15xf32> -> vector<16x16xf32>
    %c3_136 = arith.constant 3 : index
    %c0_137 = arith.constant 0 : index
    %379 = vector.load %arg18[%c3_136, %c0_137] : memref<9x16xf32, #tpu.memory_space<vmem>>, vector<1x16xf32>
    %380 = vector.broadcast %379 : vector<1x16xf32> to vector<16x16xf32>
    %381 = arith.mulf %378, %380 : vector<16x16xf32>
    %382 = vector.extract_strided_slice %357 {offsets = [0, 1], sizes = [16, 15], strides = [1, 1]} : vector<16x16xf32> to vector<16x15xf32>
    %383 = vector.extract_strided_slice %357 {offsets = [0, 0], sizes = [16, 1], strides = [1, 1]} : vector<16x16xf32> to vector<16x1xf32>
    %384 = tpu.concatenate %382, %383 in 1 : vector<16x15xf32>, vector<16x1xf32> -> vector<16x16xf32>
    %c5_138 = arith.constant 5 : index
    %c0_139 = arith.constant 0 : index
    %385 = vector.load %arg18[%c5_138, %c0_139] : memref<9x16xf32, #tpu.memory_space<vmem>>, vector<1x16xf32>
    %386 = vector.broadcast %385 : vector<1x16xf32> to vector<16x16xf32>
    %387 = arith.mulf %384, %386 : vector<16x16xf32>
    %388 = vector.extract_strided_slice %357 {offsets = [0, 3], sizes = [16, 13], strides = [1, 1]} : vector<16x16xf32> to vector<16x13xf32>
    %389 = vector.extract_strided_slice %357 {offsets = [0, 0], sizes = [16, 3], strides = [1, 1]} : vector<16x16xf32> to vector<16x3xf32>
    %390 = tpu.concatenate %388, %389 in 1 : vector<16x13xf32>, vector<16x3xf32> -> vector<16x16xf32>
    %c6_140 = arith.constant 6 : index
    %c0_141 = arith.constant 0 : index
    %391 = vector.load %arg18[%c6_140, %c0_141] : memref<9x16xf32, #tpu.memory_space<vmem>>, vector<1x16xf32>
    %392 = vector.broadcast %391 : vector<1x16xf32> to vector<16x16xf32>
    %393 = arith.mulf %390, %392 : vector<16x16xf32>
    %394 = vector.extract_strided_slice %357 {offsets = [0, 4], sizes = [16, 12], strides = [1, 1]} : vector<16x16xf32> to vector<16x12xf32>
    %395 = vector.extract_strided_slice %357 {offsets = [0, 0], sizes = [16, 4], strides = [1, 1]} : vector<16x16xf32> to vector<16x4xf32>
    %396 = tpu.concatenate %394, %395 in 1 : vector<16x12xf32>, vector<16x4xf32> -> vector<16x16xf32>
    %c7_142 = arith.constant 7 : index
    %c0_143 = arith.constant 0 : index
    %397 = vector.load %arg18[%c7_142, %c0_143] : memref<9x16xf32, #tpu.memory_space<vmem>>, vector<1x16xf32>
    %398 = vector.broadcast %397 : vector<1x16xf32> to vector<16x16xf32>
    %399 = arith.mulf %396, %398 : vector<16x16xf32>
    %400 = vector.extract_strided_slice %357 {offsets = [0, 5], sizes = [16, 11], strides = [1, 1]} : vector<16x16xf32> to vector<16x11xf32>
    %401 = vector.extract_strided_slice %357 {offsets = [0, 0], sizes = [16, 5], strides = [1, 1]} : vector<16x16xf32> to vector<16x5xf32>
    %402 = tpu.concatenate %400, %401 in 1 : vector<16x11xf32>, vector<16x5xf32> -> vector<16x16xf32>
    %c8_144 = arith.constant 8 : index
    %c0_145 = arith.constant 0 : index
    %403 = vector.load %arg18[%c8_144, %c0_145] : memref<9x16xf32, #tpu.memory_space<vmem>>, vector<1x16xf32>
    %404 = vector.broadcast %403 : vector<1x16xf32> to vector<16x16xf32>
    %405 = arith.mulf %402, %404 : vector<16x16xf32>
    %406 = tpu.concatenate %363, %369, %375, %381, %357, %387, %393, %399, %405 in 0 : vector<16x16xf32>, vector<16x16xf32>, vector<16x16xf32>, vector<16x16xf32>, vector<16x16xf32>, vector<16x16xf32>, vector<16x16xf32>, vector<16x16xf32>, vector<16x16xf32> -> vector<144x16xf32>
    %c0_146 = arith.constant 0 : index
    %c0_147 = arith.constant 0 : index
    %407 = vector.load %arg7[%c0_146, %c0_147] : memref<16x144xf32, #tpu.memory_space<vmem>>, vector<16x144xf32>
    %cst_148 = arith.constant dense<0.000000e+00> : vector<16x16xf32>
    %408 = tpu.matmul %407, %406, %cst_148 {dimension_numbers = #tpu.dot_dimension_numbers<[1], [0], [0], [1], [0, 0, 1, 1], [], []>} : vector<16x144xf32>, vector<144x16xf32>, vector<16x16xf32> -> vector<16x16xf32>
    %cst_149 = arith.constant dense<0.000000e+00> : vector<16xf32>
    %409 = vector.multi_reduction <add>, %408, %cst_149 [1] : vector<16x16xf32> to vector<16xf32>
    %410 = vector.shape_cast %409 : vector<16xf32> to vector<16x1xf32>
    %cst_150 = arith.constant 6.250000e-02 : f32
    %411 = vector.broadcast %cst_150 : f32 to vector<16x1xf32>
    %412 = arith.mulf %410, %411 : vector<16x1xf32>
    %413 = vector.broadcast %412 : vector<16x1xf32> to vector<16x16xf32>
    %414 = arith.subf %408, %413 : vector<16x16xf32>
    %415 = arith.mulf %414, %414 : vector<16x16xf32>
    %cst_151 = arith.constant dense<0.000000e+00> : vector<16xf32>
    %416 = vector.multi_reduction <add>, %415, %cst_151 [1] : vector<16x16xf32> to vector<16xf32>
    %417 = vector.shape_cast %416 : vector<16xf32> to vector<16x1xf32>
    %cst_152 = arith.constant 6.250000e-02 : f32
    %418 = vector.broadcast %cst_152 : f32 to vector<16x1xf32>
    %419 = arith.mulf %417, %418 : vector<16x1xf32>
    %cst_153 = arith.constant 9.99999974E-6 : f32
    %420 = vector.broadcast %cst_153 : f32 to vector<16x1xf32>
    %421 = arith.addf %419, %420 : vector<16x1xf32>
    %422 = math.rsqrt %421 : vector<16x1xf32>
    %423 = vector.broadcast %422 : vector<16x1xf32> to vector<16x16xf32>
    %424 = arith.mulf %414, %423 : vector<16x16xf32>
    %cst_154 = arith.constant 0.000000e+00 : f32
    %425 = vector.broadcast %cst_154 : f32 to vector<16x16xf32>
    %426 = arith.cmpf oge, %424, %425 : vector<16x16xf32>
    %cst_155 = arith.constant 2.000000e-01 : f32
    %427 = vector.broadcast %cst_155 : f32 to vector<16x16xf32>
    %428 = arith.mulf %427, %424 : vector<16x16xf32>
    %429 = arith.select %426, %424, %428 : vector<16x16xi1>, vector<16x16xf32>
    %c0_156 = arith.constant 0 : index
    %c0_157 = arith.constant 0 : index
    %430 = vector.load %arg8[%c0_156, %c0_157] : memref<8x64xf32, #tpu.memory_space<vmem>>, vector<8x64xf32>
    %431 = vector.extract_strided_slice %430 {offsets = [0, 0], sizes = [8, 16], strides = [1, 1]} : vector<8x64xf32> to vector<8x16xf32>
    %cst_158 = arith.constant dense<0.000000e+00> : vector<8x16xf32>
    %432 = tpu.matmul %431, %429, %cst_158 {dimension_numbers = #tpu.dot_dimension_numbers<[1], [0], [0], [1], [0, 0, 1, 1], [], []>} : vector<8x16xf32>, vector<16x16xf32>, vector<8x16xf32> -> vector<8x16xf32>
    %433 = vector.extract_strided_slice %430 {offsets = [0, 16], sizes = [8, 16], strides = [1, 1]} : vector<8x64xf32> to vector<8x16xf32>
    %cst_159 = arith.constant dense<0.000000e+00> : vector<8x16xf32>
    %434 = tpu.matmul %433, %429, %cst_159 {dimension_numbers = #tpu.dot_dimension_numbers<[1], [0], [0], [1], [0, 0, 1, 1], [], []>} : vector<8x16xf32>, vector<16x16xf32>, vector<8x16xf32> -> vector<8x16xf32>
    %435 = vector.extract_strided_slice %430 {offsets = [0, 32], sizes = [8, 16], strides = [1, 1]} : vector<8x64xf32> to vector<8x16xf32>
    %cst_160 = arith.constant dense<0.000000e+00> : vector<8x16xf32>
    %436 = tpu.matmul %435, %429, %cst_160 {dimension_numbers = #tpu.dot_dimension_numbers<[1], [0], [0], [1], [0, 0, 1, 1], [], []>} : vector<8x16xf32>, vector<16x16xf32>, vector<8x16xf32> -> vector<8x16xf32>
    %437 = vector.extract_strided_slice %430 {offsets = [0, 48], sizes = [8, 16], strides = [1, 1]} : vector<8x64xf32> to vector<8x16xf32>
    %cst_161 = arith.constant dense<0.000000e+00> : vector<8x16xf32>
    %438 = tpu.matmul %437, %429, %cst_161 {dimension_numbers = #tpu.dot_dimension_numbers<[1], [0], [0], [1], [0, 0, 1, 1], [], []>} : vector<8x16xf32>, vector<16x16xf32>, vector<8x16xf32> -> vector<8x16xf32>
    %439 = tpu.concatenate %432, %434, %436, %438 in 1 : vector<8x16xf32>, vector<8x16xf32>, vector<8x16xf32>, vector<8x16xf32> -> vector<8x64xf32>
    %c0_162 = arith.constant 0 : index
    %c0_163 = arith.constant 0 : index
    %440 = vector.load %arg21[%c0_162, %c0_163] : memref<64x64xf32, #tpu.memory_space<vmem>>, vector<64x64xf32>
    %cst_164 = arith.constant dense<0.000000e+00> : vector<8x64xf32>
    %441 = tpu.matmul %439, %440, %cst_164 {dimension_numbers = #tpu.dot_dimension_numbers<[1], [0], [0], [1], [0, 0, 1, 1], [], []>} : vector<8x64xf32>, vector<64x64xf32>, vector<8x64xf32> -> vector<8x64xf32>
    %cst_165 = arith.constant dense<0.000000e+00> : vector<8xf32>
    %442 = vector.multi_reduction <add>, %441, %cst_165 [1] : vector<8x64xf32> to vector<8xf32>
    %443 = vector.shape_cast %442 : vector<8xf32> to vector<8x1xf32>
    %cst_166 = arith.constant 1.562500e-02 : f32
    %444 = vector.broadcast %cst_166 : f32 to vector<8x1xf32>
    %445 = arith.mulf %443, %444 : vector<8x1xf32>
    %446 = vector.broadcast %445 : vector<8x1xf32> to vector<8x64xf32>
    %447 = arith.subf %441, %446 : vector<8x64xf32>
    %448 = arith.mulf %447, %447 : vector<8x64xf32>
    %cst_167 = arith.constant dense<0.000000e+00> : vector<8xf32>
    %449 = vector.multi_reduction <add>, %448, %cst_167 [1] : vector<8x64xf32> to vector<8xf32>
    %450 = vector.shape_cast %449 : vector<8xf32> to vector<8x1xf32>
    %cst_168 = arith.constant 1.562500e-02 : f32
    %451 = vector.broadcast %cst_168 : f32 to vector<8x1xf32>
    %452 = arith.mulf %450, %451 : vector<8x1xf32>
    %cst_169 = arith.constant 9.99999974E-6 : f32
    %453 = vector.broadcast %cst_169 : f32 to vector<8x1xf32>
    %454 = arith.addf %452, %453 : vector<8x1xf32>
    %455 = math.rsqrt %454 : vector<8x1xf32>
    %456 = vector.broadcast %455 : vector<8x1xf32> to vector<8x64xf32>
    %457 = arith.mulf %447, %456 : vector<8x64xf32>
    %cst_170 = arith.constant 0.000000e+00 : f32
    %458 = vector.broadcast %cst_170 : f32 to vector<8x64xf32>
    %459 = arith.cmpf oge, %457, %458 : vector<8x64xf32>
    %cst_171 = arith.constant 2.000000e-01 : f32
    %460 = vector.broadcast %cst_171 : f32 to vector<8x64xf32>
    %461 = arith.mulf %460, %457 : vector<8x64xf32>
    %462 = arith.select %459, %457, %461 : vector<8x64xi1>, vector<8x64xf32>
    %463 = tpu.concatenate %462, %283 in 0 : vector<8x64xf32>, vector<8x64xf32> -> vector<16x64xf32>
    %464 = vector.extract_strided_slice %463 {offsets = [0, 55], sizes = [16, 9], strides = [1, 1]} : vector<16x64xf32> to vector<16x9xf32>
    %465 = vector.extract_strided_slice %463 {offsets = [0, 0], sizes = [16, 55], strides = [1, 1]} : vector<16x64xf32> to vector<16x55xf32>
    %466 = tpu.concatenate %464, %465 in 1 : vector<16x9xf32>, vector<16x55xf32> -> vector<16x64xf32>
    %c0_172 = arith.constant 0 : index
    %c0_173 = arith.constant 0 : index
    %467 = vector.load %arg17[%c0_172, %c0_173] : memref<9x64xf32, #tpu.memory_space<vmem>>, vector<1x64xf32>
    %468 = vector.broadcast %467 : vector<1x64xf32> to vector<16x64xf32>
    %469 = arith.mulf %466, %468 : vector<16x64xf32>
    %470 = vector.extract_strided_slice %463 {offsets = [0, 56], sizes = [16, 8], strides = [1, 1]} : vector<16x64xf32> to vector<16x8xf32>
    %471 = vector.extract_strided_slice %463 {offsets = [0, 0], sizes = [16, 56], strides = [1, 1]} : vector<16x64xf32> to vector<16x56xf32>
    %472 = tpu.concatenate %470, %471 in 1 : vector<16x8xf32>, vector<16x56xf32> -> vector<16x64xf32>
    %c1_174 = arith.constant 1 : index
    %c0_175 = arith.constant 0 : index
    %473 = vector.load %arg17[%c1_174, %c0_175] : memref<9x64xf32, #tpu.memory_space<vmem>>, vector<1x64xf32>
    %474 = vector.broadcast %473 : vector<1x64xf32> to vector<16x64xf32>
    %475 = arith.mulf %472, %474 : vector<16x64xf32>
    %476 = vector.extract_strided_slice %463 {offsets = [0, 57], sizes = [16, 7], strides = [1, 1]} : vector<16x64xf32> to vector<16x7xf32>
    %477 = vector.extract_strided_slice %463 {offsets = [0, 0], sizes = [16, 57], strides = [1, 1]} : vector<16x64xf32> to vector<16x57xf32>
    %478 = tpu.concatenate %476, %477 in 1 : vector<16x7xf32>, vector<16x57xf32> -> vector<16x64xf32>
    %c2_176 = arith.constant 2 : index
    %c0_177 = arith.constant 0 : index
    %479 = vector.load %arg17[%c2_176, %c0_177] : memref<9x64xf32, #tpu.memory_space<vmem>>, vector<1x64xf32>
    %480 = vector.broadcast %479 : vector<1x64xf32> to vector<16x64xf32>
    %481 = arith.mulf %478, %480 : vector<16x64xf32>
    %482 = vector.extract_strided_slice %463 {offsets = [0, 63], sizes = [16, 1], strides = [1, 1]} : vector<16x64xf32> to vector<16x1xf32>
    %483 = vector.extract_strided_slice %463 {offsets = [0, 0], sizes = [16, 63], strides = [1, 1]} : vector<16x64xf32> to vector<16x63xf32>
    %484 = tpu.concatenate %482, %483 in 1 : vector<16x1xf32>, vector<16x63xf32> -> vector<16x64xf32>
    %c3_178 = arith.constant 3 : index
    %c0_179 = arith.constant 0 : index
    %485 = vector.load %arg17[%c3_178, %c0_179] : memref<9x64xf32, #tpu.memory_space<vmem>>, vector<1x64xf32>
    %486 = vector.broadcast %485 : vector<1x64xf32> to vector<16x64xf32>
    %487 = arith.mulf %484, %486 : vector<16x64xf32>
    %488 = vector.extract_strided_slice %463 {offsets = [0, 1], sizes = [16, 63], strides = [1, 1]} : vector<16x64xf32> to vector<16x63xf32>
    %489 = vector.extract_strided_slice %463 {offsets = [0, 0], sizes = [16, 1], strides = [1, 1]} : vector<16x64xf32> to vector<16x1xf32>
    %490 = tpu.concatenate %488, %489 in 1 : vector<16x63xf32>, vector<16x1xf32> -> vector<16x64xf32>
    %c5_180 = arith.constant 5 : index
    %c0_181 = arith.constant 0 : index
    %491 = vector.load %arg17[%c5_180, %c0_181] : memref<9x64xf32, #tpu.memory_space<vmem>>, vector<1x64xf32>
    %492 = vector.broadcast %491 : vector<1x64xf32> to vector<16x64xf32>
    %493 = arith.mulf %490, %492 : vector<16x64xf32>
    %494 = vector.extract_strided_slice %463 {offsets = [0, 7], sizes = [16, 57], strides = [1, 1]} : vector<16x64xf32> to vector<16x57xf32>
    %495 = vector.extract_strided_slice %463 {offsets = [0, 0], sizes = [16, 7], strides = [1, 1]} : vector<16x64xf32> to vector<16x7xf32>
    %496 = tpu.concatenate %494, %495 in 1 : vector<16x57xf32>, vector<16x7xf32> -> vector<16x64xf32>
    %c6_182 = arith.constant 6 : index
    %c0_183 = arith.constant 0 : index
    %497 = vector.load %arg17[%c6_182, %c0_183] : memref<9x64xf32, #tpu.memory_space<vmem>>, vector<1x64xf32>
    %498 = vector.broadcast %497 : vector<1x64xf32> to vector<16x64xf32>
    %499 = arith.mulf %496, %498 : vector<16x64xf32>
    %500 = vector.extract_strided_slice %463 {offsets = [0, 8], sizes = [16, 56], strides = [1, 1]} : vector<16x64xf32> to vector<16x56xf32>
    %501 = vector.extract_strided_slice %463 {offsets = [0, 0], sizes = [16, 8], strides = [1, 1]} : vector<16x64xf32> to vector<16x8xf32>
    %502 = tpu.concatenate %500, %501 in 1 : vector<16x56xf32>, vector<16x8xf32> -> vector<16x64xf32>
    %c7_184 = arith.constant 7 : index
    %c0_185 = arith.constant 0 : index
    %503 = vector.load %arg17[%c7_184, %c0_185] : memref<9x64xf32, #tpu.memory_space<vmem>>, vector<1x64xf32>
    %504 = vector.broadcast %503 : vector<1x64xf32> to vector<16x64xf32>
    %505 = arith.mulf %502, %504 : vector<16x64xf32>
    %506 = vector.extract_strided_slice %463 {offsets = [0, 9], sizes = [16, 55], strides = [1, 1]} : vector<16x64xf32> to vector<16x55xf32>
    %507 = vector.extract_strided_slice %463 {offsets = [0, 0], sizes = [16, 9], strides = [1, 1]} : vector<16x64xf32> to vector<16x9xf32>
    %508 = tpu.concatenate %506, %507 in 1 : vector<16x55xf32>, vector<16x9xf32> -> vector<16x64xf32>
    %c8_186 = arith.constant 8 : index
    %c0_187 = arith.constant 0 : index
    %509 = vector.load %arg17[%c8_186, %c0_187] : memref<9x64xf32, #tpu.memory_space<vmem>>, vector<1x64xf32>
    %510 = vector.broadcast %509 : vector<1x64xf32> to vector<16x64xf32>
    %511 = arith.mulf %508, %510 : vector<16x64xf32>
    %512 = tpu.concatenate %469, %475, %481, %487, %463, %493, %499, %505, %511 in 0 : vector<16x64xf32>, vector<16x64xf32>, vector<16x64xf32>, vector<16x64xf32>, vector<16x64xf32>, vector<16x64xf32>, vector<16x64xf32>, vector<16x64xf32>, vector<16x64xf32> -> vector<144x64xf32>
    %c0_188 = arith.constant 0 : index
    %c0_189 = arith.constant 0 : index
    %513 = vector.load %arg9[%c0_188, %c0_189] : memref<8x144xf32, #tpu.memory_space<vmem>>, vector<8x144xf32>
    %cst_190 = arith.constant dense<0.000000e+00> : vector<8x64xf32>
    %514 = tpu.matmul %513, %512, %cst_190 {dimension_numbers = #tpu.dot_dimension_numbers<[1], [0], [0], [1], [0, 0, 1, 1], [], []>} : vector<8x144xf32>, vector<144x64xf32>, vector<8x64xf32> -> vector<8x64xf32>
    %cst_191 = arith.constant dense<0.000000e+00> : vector<8xf32>
    %515 = vector.multi_reduction <add>, %514, %cst_191 [1] : vector<8x64xf32> to vector<8xf32>
    %516 = vector.shape_cast %515 : vector<8xf32> to vector<8x1xf32>
    %cst_192 = arith.constant 1.562500e-02 : f32
    %517 = vector.broadcast %cst_192 : f32 to vector<8x1xf32>
    %518 = arith.mulf %516, %517 : vector<8x1xf32>
    %519 = vector.broadcast %518 : vector<8x1xf32> to vector<8x64xf32>
    %520 = arith.subf %514, %519 : vector<8x64xf32>
    %521 = arith.mulf %520, %520 : vector<8x64xf32>
    %cst_193 = arith.constant dense<0.000000e+00> : vector<8xf32>
    %522 = vector.multi_reduction <add>, %521, %cst_193 [1] : vector<8x64xf32> to vector<8xf32>
    %523 = vector.shape_cast %522 : vector<8xf32> to vector<8x1xf32>
    %cst_194 = arith.constant 1.562500e-02 : f32
    %524 = vector.broadcast %cst_194 : f32 to vector<8x1xf32>
    %525 = arith.mulf %523, %524 : vector<8x1xf32>
    %cst_195 = arith.constant 9.99999974E-6 : f32
    %526 = vector.broadcast %cst_195 : f32 to vector<8x1xf32>
    %527 = arith.addf %525, %526 : vector<8x1xf32>
    %528 = math.rsqrt %527 : vector<8x1xf32>
    %529 = vector.broadcast %528 : vector<8x1xf32> to vector<8x64xf32>
    %530 = arith.mulf %520, %529 : vector<8x64xf32>
    %cst_196 = arith.constant 0.000000e+00 : f32
    %531 = vector.broadcast %cst_196 : f32 to vector<8x64xf32>
    %532 = arith.cmpf oge, %530, %531 : vector<8x64xf32>
    %cst_197 = arith.constant 2.000000e-01 : f32
    %533 = vector.broadcast %cst_197 : f32 to vector<8x64xf32>
    %534 = arith.mulf %533, %530 : vector<8x64xf32>
    %535 = arith.select %532, %530, %534 : vector<8x64xi1>, vector<8x64xf32>
    %536 = vector.extract_strided_slice %535 {offsets = [0, 55], sizes = [8, 9], strides = [1, 1]} : vector<8x64xf32> to vector<8x9xf32>
    %537 = vector.extract_strided_slice %535 {offsets = [0, 0], sizes = [8, 55], strides = [1, 1]} : vector<8x64xf32> to vector<8x55xf32>
    %538 = tpu.concatenate %536, %537 in 1 : vector<8x9xf32>, vector<8x55xf32> -> vector<8x64xf32>
    %c0_198 = arith.constant 0 : index
    %c0_199 = arith.constant 0 : index
    %539 = vector.load %arg17[%c0_198, %c0_199] : memref<9x64xf32, #tpu.memory_space<vmem>>, vector<1x64xf32>
    %540 = vector.broadcast %539 : vector<1x64xf32> to vector<8x64xf32>
    %541 = arith.mulf %538, %540 : vector<8x64xf32>
    %542 = vector.extract_strided_slice %535 {offsets = [0, 56], sizes = [8, 8], strides = [1, 1]} : vector<8x64xf32> to vector<8x8xf32>
    %543 = vector.extract_strided_slice %535 {offsets = [0, 0], sizes = [8, 56], strides = [1, 1]} : vector<8x64xf32> to vector<8x56xf32>
    %544 = tpu.concatenate %542, %543 in 1 : vector<8x8xf32>, vector<8x56xf32> -> vector<8x64xf32>
    %c1_200 = arith.constant 1 : index
    %c0_201 = arith.constant 0 : index
    %545 = vector.load %arg17[%c1_200, %c0_201] : memref<9x64xf32, #tpu.memory_space<vmem>>, vector<1x64xf32>
    %546 = vector.broadcast %545 : vector<1x64xf32> to vector<8x64xf32>
    %547 = arith.mulf %544, %546 : vector<8x64xf32>
    %548 = vector.extract_strided_slice %535 {offsets = [0, 57], sizes = [8, 7], strides = [1, 1]} : vector<8x64xf32> to vector<8x7xf32>
    %549 = vector.extract_strided_slice %535 {offsets = [0, 0], sizes = [8, 57], strides = [1, 1]} : vector<8x64xf32> to vector<8x57xf32>
    %550 = tpu.concatenate %548, %549 in 1 : vector<8x7xf32>, vector<8x57xf32> -> vector<8x64xf32>
    %c2_202 = arith.constant 2 : index
    %c0_203 = arith.constant 0 : index
    %551 = vector.load %arg17[%c2_202, %c0_203] : memref<9x64xf32, #tpu.memory_space<vmem>>, vector<1x64xf32>
    %552 = vector.broadcast %551 : vector<1x64xf32> to vector<8x64xf32>
    %553 = arith.mulf %550, %552 : vector<8x64xf32>
    %554 = vector.extract_strided_slice %535 {offsets = [0, 63], sizes = [8, 1], strides = [1, 1]} : vector<8x64xf32> to vector<8x1xf32>
    %555 = vector.extract_strided_slice %535 {offsets = [0, 0], sizes = [8, 63], strides = [1, 1]} : vector<8x64xf32> to vector<8x63xf32>
    %556 = tpu.concatenate %554, %555 in 1 : vector<8x1xf32>, vector<8x63xf32> -> vector<8x64xf32>
    %c3_204 = arith.constant 3 : index
    %c0_205 = arith.constant 0 : index
    %557 = vector.load %arg17[%c3_204, %c0_205] : memref<9x64xf32, #tpu.memory_space<vmem>>, vector<1x64xf32>
    %558 = vector.broadcast %557 : vector<1x64xf32> to vector<8x64xf32>
    %559 = arith.mulf %556, %558 : vector<8x64xf32>
    %560 = vector.extract_strided_slice %535 {offsets = [0, 1], sizes = [8, 63], strides = [1, 1]} : vector<8x64xf32> to vector<8x63xf32>
    %561 = vector.extract_strided_slice %535 {offsets = [0, 0], sizes = [8, 1], strides = [1, 1]} : vector<8x64xf32> to vector<8x1xf32>
    %562 = tpu.concatenate %560, %561 in 1 : vector<8x63xf32>, vector<8x1xf32> -> vector<8x64xf32>
    %c5_206 = arith.constant 5 : index
    %c0_207 = arith.constant 0 : index
    %563 = vector.load %arg17[%c5_206, %c0_207] : memref<9x64xf32, #tpu.memory_space<vmem>>, vector<1x64xf32>
    %564 = vector.broadcast %563 : vector<1x64xf32> to vector<8x64xf32>
    %565 = arith.mulf %562, %564 : vector<8x64xf32>
    %566 = vector.extract_strided_slice %535 {offsets = [0, 7], sizes = [8, 57], strides = [1, 1]} : vector<8x64xf32> to vector<8x57xf32>
    %567 = vector.extract_strided_slice %535 {offsets = [0, 0], sizes = [8, 7], strides = [1, 1]} : vector<8x64xf32> to vector<8x7xf32>
    %568 = tpu.concatenate %566, %567 in 1 : vector<8x57xf32>, vector<8x7xf32> -> vector<8x64xf32>
    %c6_208 = arith.constant 6 : index
    %c0_209 = arith.constant 0 : index
    %569 = vector.load %arg17[%c6_208, %c0_209] : memref<9x64xf32, #tpu.memory_space<vmem>>, vector<1x64xf32>
    %570 = vector.broadcast %569 : vector<1x64xf32> to vector<8x64xf32>
    %571 = arith.mulf %568, %570 : vector<8x64xf32>
    %572 = vector.extract_strided_slice %535 {offsets = [0, 8], sizes = [8, 56], strides = [1, 1]} : vector<8x64xf32> to vector<8x56xf32>
    %573 = vector.extract_strided_slice %535 {offsets = [0, 0], sizes = [8, 8], strides = [1, 1]} : vector<8x64xf32> to vector<8x8xf32>
    %574 = tpu.concatenate %572, %573 in 1 : vector<8x56xf32>, vector<8x8xf32> -> vector<8x64xf32>
    %c7_210 = arith.constant 7 : index
    %c0_211 = arith.constant 0 : index
    %575 = vector.load %arg17[%c7_210, %c0_211] : memref<9x64xf32, #tpu.memory_space<vmem>>, vector<1x64xf32>
    %576 = vector.broadcast %575 : vector<1x64xf32> to vector<8x64xf32>
    %577 = arith.mulf %574, %576 : vector<8x64xf32>
    %578 = vector.extract_strided_slice %535 {offsets = [0, 9], sizes = [8, 55], strides = [1, 1]} : vector<8x64xf32> to vector<8x55xf32>
    %579 = vector.extract_strided_slice %535 {offsets = [0, 0], sizes = [8, 9], strides = [1, 1]} : vector<8x64xf32> to vector<8x9xf32>
    %580 = tpu.concatenate %578, %579 in 1 : vector<8x55xf32>, vector<8x9xf32> -> vector<8x64xf32>
    %c8_212 = arith.constant 8 : index
    %c0_213 = arith.constant 0 : index
    %581 = vector.load %arg17[%c8_212, %c0_213] : memref<9x64xf32, #tpu.memory_space<vmem>>, vector<1x64xf32>
    %582 = vector.broadcast %581 : vector<1x64xf32> to vector<8x64xf32>
    %583 = arith.mulf %580, %582 : vector<8x64xf32>
    %584 = tpu.concatenate %541, %547, %553, %559, %535, %565, %571, %577, %583 in 0 : vector<8x64xf32>, vector<8x64xf32>, vector<8x64xf32>, vector<8x64xf32>, vector<8x64xf32>, vector<8x64xf32>, vector<8x64xf32>, vector<8x64xf32>, vector<8x64xf32> -> vector<72x64xf32>
    %c0_214 = arith.constant 0 : index
    %c0_215 = arith.constant 0 : index
    %585 = vector.load %arg10[%c0_214, %c0_215] : memref<8x72xf32, #tpu.memory_space<vmem>>, vector<8x72xf32>
    %cst_216 = arith.constant dense<0.000000e+00> : vector<8x64xf32>
    %586 = tpu.matmul %585, %584, %cst_216 {dimension_numbers = #tpu.dot_dimension_numbers<[1], [0], [0], [1], [0, 0, 1, 1], [], []>} : vector<8x72xf32>, vector<72x64xf32>, vector<8x64xf32> -> vector<8x64xf32>
    %cst_217 = arith.constant dense<0.000000e+00> : vector<8xf32>
    %587 = vector.multi_reduction <add>, %586, %cst_217 [1] : vector<8x64xf32> to vector<8xf32>
    %588 = vector.shape_cast %587 : vector<8xf32> to vector<8x1xf32>
    %cst_218 = arith.constant 1.562500e-02 : f32
    %589 = vector.broadcast %cst_218 : f32 to vector<8x1xf32>
    %590 = arith.mulf %588, %589 : vector<8x1xf32>
    %591 = vector.broadcast %590 : vector<8x1xf32> to vector<8x64xf32>
    %592 = arith.subf %586, %591 : vector<8x64xf32>
    %593 = arith.mulf %592, %592 : vector<8x64xf32>
    %cst_219 = arith.constant dense<0.000000e+00> : vector<8xf32>
    %594 = vector.multi_reduction <add>, %593, %cst_219 [1] : vector<8x64xf32> to vector<8xf32>
    %595 = vector.shape_cast %594 : vector<8xf32> to vector<8x1xf32>
    %cst_220 = arith.constant 1.562500e-02 : f32
    %596 = vector.broadcast %cst_220 : f32 to vector<8x1xf32>
    %597 = arith.mulf %595, %596 : vector<8x1xf32>
    %cst_221 = arith.constant 9.99999974E-6 : f32
    %598 = vector.broadcast %cst_221 : f32 to vector<8x1xf32>
    %599 = arith.addf %597, %598 : vector<8x1xf32>
    %600 = math.rsqrt %599 : vector<8x1xf32>
    %601 = vector.broadcast %600 : vector<8x1xf32> to vector<8x64xf32>
    %602 = arith.mulf %592, %601 : vector<8x64xf32>
    %cst_222 = arith.constant 0.000000e+00 : f32
    %603 = vector.broadcast %cst_222 : f32 to vector<8x64xf32>
    %604 = arith.cmpf oge, %602, %603 : vector<8x64xf32>
    %cst_223 = arith.constant 2.000000e-01 : f32
    %605 = vector.broadcast %cst_223 : f32 to vector<8x64xf32>
    %606 = arith.mulf %605, %602 : vector<8x64xf32>
    %607 = arith.select %604, %602, %606 : vector<8x64xi1>, vector<8x64xf32>
    %c0_224 = arith.constant 0 : index
    %c0_225 = arith.constant 0 : index
    %608 = vector.load %arg11[%c0_224, %c0_225] : memref<4x32xf32, #tpu.memory_space<vmem>>, vector<4x32xf32>
    %609 = vector.extract_strided_slice %608 {offsets = [0, 0], sizes = [4, 8], strides = [1, 1]} : vector<4x32xf32> to vector<4x8xf32>
    %cst_226 = arith.constant dense<0.000000e+00> : vector<4x64xf32>
    %610 = tpu.matmul %609, %607, %cst_226 {dimension_numbers = #tpu.dot_dimension_numbers<[1], [0], [0], [1], [0, 0, 1, 1], [], []>} : vector<4x8xf32>, vector<8x64xf32>, vector<4x64xf32> -> vector<4x64xf32>
    %611 = vector.extract_strided_slice %608 {offsets = [0, 8], sizes = [4, 8], strides = [1, 1]} : vector<4x32xf32> to vector<4x8xf32>
    %cst_227 = arith.constant dense<0.000000e+00> : vector<4x64xf32>
    %612 = tpu.matmul %611, %607, %cst_227 {dimension_numbers = #tpu.dot_dimension_numbers<[1], [0], [0], [1], [0, 0, 1, 1], [], []>} : vector<4x8xf32>, vector<8x64xf32>, vector<4x64xf32> -> vector<4x64xf32>
    %613 = vector.extract_strided_slice %608 {offsets = [0, 16], sizes = [4, 8], strides = [1, 1]} : vector<4x32xf32> to vector<4x8xf32>
    %cst_228 = arith.constant dense<0.000000e+00> : vector<4x64xf32>
    %614 = tpu.matmul %613, %607, %cst_228 {dimension_numbers = #tpu.dot_dimension_numbers<[1], [0], [0], [1], [0, 0, 1, 1], [], []>} : vector<4x8xf32>, vector<8x64xf32>, vector<4x64xf32> -> vector<4x64xf32>
    %615 = vector.extract_strided_slice %608 {offsets = [0, 24], sizes = [4, 8], strides = [1, 1]} : vector<4x32xf32> to vector<4x8xf32>
    %cst_229 = arith.constant dense<0.000000e+00> : vector<4x64xf32>
    %616 = tpu.matmul %615, %607, %cst_229 {dimension_numbers = #tpu.dot_dimension_numbers<[1], [0], [0], [1], [0, 0, 1, 1], [], []>} : vector<4x8xf32>, vector<8x64xf32>, vector<4x64xf32> -> vector<4x64xf32>
    %617 = tpu.concatenate %610, %612, %614, %616 in 1 : vector<4x64xf32>, vector<4x64xf32>, vector<4x64xf32>, vector<4x64xf32> -> vector<4x256xf32>
    %c0_230 = arith.constant 0 : index
    %c0_231 = arith.constant 0 : index
    %618 = vector.load %arg22[%c0_230, %c0_231] : memref<256x256xf32, #tpu.memory_space<vmem>>, vector<256x256xf32>
    %cst_232 = arith.constant dense<0.000000e+00> : vector<4x256xf32>
    %619 = tpu.matmul %617, %618, %cst_232 {dimension_numbers = #tpu.dot_dimension_numbers<[1], [0], [0], [1], [0, 0, 1, 1], [], []>} : vector<4x256xf32>, vector<256x256xf32>, vector<4x256xf32> -> vector<4x256xf32>
    %cst_233 = arith.constant dense<0.000000e+00> : vector<4xf32>
    %620 = vector.multi_reduction <add>, %619, %cst_233 [1] : vector<4x256xf32> to vector<4xf32>
    %621 = vector.shape_cast %620 : vector<4xf32> to vector<4x1xf32>
    %cst_234 = arith.constant 3.906250e-03 : f32
    %622 = vector.broadcast %cst_234 : f32 to vector<4x1xf32>
    %623 = arith.mulf %621, %622 : vector<4x1xf32>
    %624 = vector.broadcast %623 : vector<4x1xf32> to vector<4x256xf32>
    %625 = arith.subf %619, %624 : vector<4x256xf32>
    %626 = arith.mulf %625, %625 : vector<4x256xf32>
    %cst_235 = arith.constant dense<0.000000e+00> : vector<4xf32>
    %627 = vector.multi_reduction <add>, %626, %cst_235 [1] : vector<4x256xf32> to vector<4xf32>
    %628 = vector.shape_cast %627 : vector<4xf32> to vector<4x1xf32>
    %cst_236 = arith.constant 3.906250e-03 : f32
    %629 = vector.broadcast %cst_236 : f32 to vector<4x1xf32>
    %630 = arith.mulf %628, %629 : vector<4x1xf32>
    %cst_237 = arith.constant 9.99999974E-6 : f32
    %631 = vector.broadcast %cst_237 : f32 to vector<4x1xf32>
    %632 = arith.addf %630, %631 : vector<4x1xf32>
    %633 = math.rsqrt %632 : vector<4x1xf32>
    %634 = vector.broadcast %633 : vector<4x1xf32> to vector<4x256xf32>
    %635 = arith.mulf %625, %634 : vector<4x256xf32>
    %cst_238 = arith.constant 0.000000e+00 : f32
    %636 = vector.broadcast %cst_238 : f32 to vector<4x256xf32>
    %637 = arith.cmpf oge, %635, %636 : vector<4x256xf32>
    %cst_239 = arith.constant 2.000000e-01 : f32
    %638 = vector.broadcast %cst_239 : f32 to vector<4x256xf32>
    %639 = arith.mulf %638, %635 : vector<4x256xf32>
    %640 = arith.select %637, %635, %639 : vector<4x256xi1>, vector<4x256xf32>
    %641 = tpu.concatenate %640, %137 in 0 : vector<4x256xf32>, vector<4x256xf32> -> vector<8x256xf32>
    %642 = vector.extract_strided_slice %641 {offsets = [0, 239], sizes = [8, 17], strides = [1, 1]} : vector<8x256xf32> to vector<8x17xf32>
    %643 = vector.extract_strided_slice %641 {offsets = [0, 0], sizes = [8, 239], strides = [1, 1]} : vector<8x256xf32> to vector<8x239xf32>
    %644 = tpu.concatenate %642, %643 in 1 : vector<8x17xf32>, vector<8x239xf32> -> vector<8x256xf32>
    %c0_240 = arith.constant 0 : index
    %c0_241 = arith.constant 0 : index
    %645 = vector.load %arg16[%c0_240, %c0_241] : memref<9x256xf32, #tpu.memory_space<vmem>>, vector<1x256xf32>
    %646 = vector.broadcast %645 : vector<1x256xf32> to vector<8x256xf32>
    %647 = arith.mulf %644, %646 : vector<8x256xf32>
    %648 = vector.extract_strided_slice %641 {offsets = [0, 240], sizes = [8, 16], strides = [1, 1]} : vector<8x256xf32> to vector<8x16xf32>
    %649 = vector.extract_strided_slice %641 {offsets = [0, 0], sizes = [8, 240], strides = [1, 1]} : vector<8x256xf32> to vector<8x240xf32>
    %650 = tpu.concatenate %648, %649 in 1 : vector<8x16xf32>, vector<8x240xf32> -> vector<8x256xf32>
    %c1_242 = arith.constant 1 : index
    %c0_243 = arith.constant 0 : index
    %651 = vector.load %arg16[%c1_242, %c0_243] : memref<9x256xf32, #tpu.memory_space<vmem>>, vector<1x256xf32>
    %652 = vector.broadcast %651 : vector<1x256xf32> to vector<8x256xf32>
    %653 = arith.mulf %650, %652 : vector<8x256xf32>
    %654 = vector.extract_strided_slice %641 {offsets = [0, 241], sizes = [8, 15], strides = [1, 1]} : vector<8x256xf32> to vector<8x15xf32>
    %655 = vector.extract_strided_slice %641 {offsets = [0, 0], sizes = [8, 241], strides = [1, 1]} : vector<8x256xf32> to vector<8x241xf32>
    %656 = tpu.concatenate %654, %655 in 1 : vector<8x15xf32>, vector<8x241xf32> -> vector<8x256xf32>
    %c2_244 = arith.constant 2 : index
    %c0_245 = arith.constant 0 : index
    %657 = vector.load %arg16[%c2_244, %c0_245] : memref<9x256xf32, #tpu.memory_space<vmem>>, vector<1x256xf32>
    %658 = vector.broadcast %657 : vector<1x256xf32> to vector<8x256xf32>
    %659 = arith.mulf %656, %658 : vector<8x256xf32>
    %660 = vector.extract_strided_slice %641 {offsets = [0, 255], sizes = [8, 1], strides = [1, 1]} : vector<8x256xf32> to vector<8x1xf32>
    %661 = vector.extract_strided_slice %641 {offsets = [0, 0], sizes = [8, 255], strides = [1, 1]} : vector<8x256xf32> to vector<8x255xf32>
    %662 = tpu.concatenate %660, %661 in 1 : vector<8x1xf32>, vector<8x255xf32> -> vector<8x256xf32>
    %c3_246 = arith.constant 3 : index
    %c0_247 = arith.constant 0 : index
    %663 = vector.load %arg16[%c3_246, %c0_247] : memref<9x256xf32, #tpu.memory_space<vmem>>, vector<1x256xf32>
    %664 = vector.broadcast %663 : vector<1x256xf32> to vector<8x256xf32>
    %665 = arith.mulf %662, %664 : vector<8x256xf32>
    %666 = vector.extract_strided_slice %641 {offsets = [0, 1], sizes = [8, 255], strides = [1, 1]} : vector<8x256xf32> to vector<8x255xf32>
    %667 = vector.extract_strided_slice %641 {offsets = [0, 0], sizes = [8, 1], strides = [1, 1]} : vector<8x256xf32> to vector<8x1xf32>
    %668 = tpu.concatenate %666, %667 in 1 : vector<8x255xf32>, vector<8x1xf32> -> vector<8x256xf32>
    %c5_248 = arith.constant 5 : index
    %c0_249 = arith.constant 0 : index
    %669 = vector.load %arg16[%c5_248, %c0_249] : memref<9x256xf32, #tpu.memory_space<vmem>>, vector<1x256xf32>
    %670 = vector.broadcast %669 : vector<1x256xf32> to vector<8x256xf32>
    %671 = arith.mulf %668, %670 : vector<8x256xf32>
    %672 = vector.extract_strided_slice %641 {offsets = [0, 15], sizes = [8, 241], strides = [1, 1]} : vector<8x256xf32> to vector<8x241xf32>
    %673 = vector.extract_strided_slice %641 {offsets = [0, 0], sizes = [8, 15], strides = [1, 1]} : vector<8x256xf32> to vector<8x15xf32>
    %674 = tpu.concatenate %672, %673 in 1 : vector<8x241xf32>, vector<8x15xf32> -> vector<8x256xf32>
    %c6_250 = arith.constant 6 : index
    %c0_251 = arith.constant 0 : index
    %675 = vector.load %arg16[%c6_250, %c0_251] : memref<9x256xf32, #tpu.memory_space<vmem>>, vector<1x256xf32>
    %676 = vector.broadcast %675 : vector<1x256xf32> to vector<8x256xf32>
    %677 = arith.mulf %674, %676 : vector<8x256xf32>
    %678 = vector.extract_strided_slice %641 {offsets = [0, 16], sizes = [8, 240], strides = [1, 1]} : vector<8x256xf32> to vector<8x240xf32>
    %679 = vector.extract_strided_slice %641 {offsets = [0, 0], sizes = [8, 16], strides = [1, 1]} : vector<8x256xf32> to vector<8x16xf32>
    %680 = tpu.concatenate %678, %679 in 1 : vector<8x240xf32>, vector<8x16xf32> -> vector<8x256xf32>
    %c7_252 = arith.constant 7 : index
    %c0_253 = arith.constant 0 : index
    %681 = vector.load %arg16[%c7_252, %c0_253] : memref<9x256xf32, #tpu.memory_space<vmem>>, vector<1x256xf32>
    %682 = vector.broadcast %681 : vector<1x256xf32> to vector<8x256xf32>
    %683 = arith.mulf %680, %682 : vector<8x256xf32>
    %684 = vector.extract_strided_slice %641 {offsets = [0, 17], sizes = [8, 239], strides = [1, 1]} : vector<8x256xf32> to vector<8x239xf32>
    %685 = vector.extract_strided_slice %641 {offsets = [0, 0], sizes = [8, 17], strides = [1, 1]} : vector<8x256xf32> to vector<8x17xf32>
    %686 = tpu.concatenate %684, %685 in 1 : vector<8x239xf32>, vector<8x17xf32> -> vector<8x256xf32>
    %c8_254 = arith.constant 8 : index
    %c0_255 = arith.constant 0 : index
    %687 = vector.load %arg16[%c8_254, %c0_255] : memref<9x256xf32, #tpu.memory_space<vmem>>, vector<1x256xf32>
    %688 = vector.broadcast %687 : vector<1x256xf32> to vector<8x256xf32>
    %689 = arith.mulf %686, %688 : vector<8x256xf32>
    %690 = tpu.concatenate %647, %653, %659, %665, %641, %671, %677, %683, %689 in 0 : vector<8x256xf32>, vector<8x256xf32>, vector<8x256xf32>, vector<8x256xf32>, vector<8x256xf32>, vector<8x256xf32>, vector<8x256xf32>, vector<8x256xf32>, vector<8x256xf32> -> vector<72x256xf32>
    %c0_256 = arith.constant 0 : index
    %c0_257 = arith.constant 0 : index
    %691 = vector.load %arg12[%c0_256, %c0_257] : memref<4x72xf32, #tpu.memory_space<vmem>>, vector<4x72xf32>
    %cst_258 = arith.constant dense<0.000000e+00> : vector<4x256xf32>
    %692 = tpu.matmul %691, %690, %cst_258 {dimension_numbers = #tpu.dot_dimension_numbers<[1], [0], [0], [1], [0, 0, 1, 1], [], []>} : vector<4x72xf32>, vector<72x256xf32>, vector<4x256xf32> -> vector<4x256xf32>
    %cst_259 = arith.constant dense<0.000000e+00> : vector<4xf32>
    %693 = vector.multi_reduction <add>, %692, %cst_259 [1] : vector<4x256xf32> to vector<4xf32>
    %694 = vector.shape_cast %693 : vector<4xf32> to vector<4x1xf32>
    %cst_260 = arith.constant 3.906250e-03 : f32
    %695 = vector.broadcast %cst_260 : f32 to vector<4x1xf32>
    %696 = arith.mulf %694, %695 : vector<4x1xf32>
    %697 = vector.broadcast %696 : vector<4x1xf32> to vector<4x256xf32>
    %698 = arith.subf %692, %697 : vector<4x256xf32>
    %699 = arith.mulf %698, %698 : vector<4x256xf32>
    %cst_261 = arith.constant dense<0.000000e+00> : vector<4xf32>
    %700 = vector.multi_reduction <add>, %699, %cst_261 [1] : vector<4x256xf32> to vector<4xf32>
    %701 = vector.shape_cast %700 : vector<4xf32> to vector<4x1xf32>
    %cst_262 = arith.constant 3.906250e-03 : f32
    %702 = vector.broadcast %cst_262 : f32 to vector<4x1xf32>
    %703 = arith.mulf %701, %702 : vector<4x1xf32>
    %cst_263 = arith.constant 9.99999974E-6 : f32
    %704 = vector.broadcast %cst_263 : f32 to vector<4x1xf32>
    %705 = arith.addf %703, %704 : vector<4x1xf32>
    %706 = math.rsqrt %705 : vector<4x1xf32>
    %707 = vector.broadcast %706 : vector<4x1xf32> to vector<4x256xf32>
    %708 = arith.mulf %698, %707 : vector<4x256xf32>
    %cst_264 = arith.constant 0.000000e+00 : f32
    %709 = vector.broadcast %cst_264 : f32 to vector<4x256xf32>
    %710 = arith.cmpf oge, %708, %709 : vector<4x256xf32>
    %cst_265 = arith.constant 2.000000e-01 : f32
    %711 = vector.broadcast %cst_265 : f32 to vector<4x256xf32>
    %712 = arith.mulf %711, %708 : vector<4x256xf32>
    %713 = arith.select %710, %708, %712 : vector<4x256xi1>, vector<4x256xf32>
    %714 = vector.extract_strided_slice %713 {offsets = [0, 239], sizes = [4, 17], strides = [1, 1]} : vector<4x256xf32> to vector<4x17xf32>
    %715 = vector.extract_strided_slice %713 {offsets = [0, 0], sizes = [4, 239], strides = [1, 1]} : vector<4x256xf32> to vector<4x239xf32>
    %716 = tpu.concatenate %714, %715 in 1 : vector<4x17xf32>, vector<4x239xf32> -> vector<4x256xf32>
    %c0_266 = arith.constant 0 : index
    %c0_267 = arith.constant 0 : index
    %717 = vector.load %arg16[%c0_266, %c0_267] : memref<9x256xf32, #tpu.memory_space<vmem>>, vector<1x256xf32>
    %718 = vector.broadcast %717 : vector<1x256xf32> to vector<4x256xf32>
    %719 = arith.mulf %716, %718 : vector<4x256xf32>
    %720 = vector.extract_strided_slice %713 {offsets = [0, 240], sizes = [4, 16], strides = [1, 1]} : vector<4x256xf32> to vector<4x16xf32>
    %721 = vector.extract_strided_slice %713 {offsets = [0, 0], sizes = [4, 240], strides = [1, 1]} : vector<4x256xf32> to vector<4x240xf32>
    %722 = tpu.concatenate %720, %721 in 1 : vector<4x16xf32>, vector<4x240xf32> -> vector<4x256xf32>
    %c1_268 = arith.constant 1 : index
    %c0_269 = arith.constant 0 : index
    %723 = vector.load %arg16[%c1_268, %c0_269] : memref<9x256xf32, #tpu.memory_space<vmem>>, vector<1x256xf32>
    %724 = vector.broadcast %723 : vector<1x256xf32> to vector<4x256xf32>
    %725 = arith.mulf %722, %724 : vector<4x256xf32>
    %726 = vector.extract_strided_slice %713 {offsets = [0, 241], sizes = [4, 15], strides = [1, 1]} : vector<4x256xf32> to vector<4x15xf32>
    %727 = vector.extract_strided_slice %713 {offsets = [0, 0], sizes = [4, 241], strides = [1, 1]} : vector<4x256xf32> to vector<4x241xf32>
    %728 = tpu.concatenate %726, %727 in 1 : vector<4x15xf32>, vector<4x241xf32> -> vector<4x256xf32>
    %c2_270 = arith.constant 2 : index
    %c0_271 = arith.constant 0 : index
    %729 = vector.load %arg16[%c2_270, %c0_271] : memref<9x256xf32, #tpu.memory_space<vmem>>, vector<1x256xf32>
    %730 = vector.broadcast %729 : vector<1x256xf32> to vector<4x256xf32>
    %731 = arith.mulf %728, %730 : vector<4x256xf32>
    %732 = vector.extract_strided_slice %713 {offsets = [0, 255], sizes = [4, 1], strides = [1, 1]} : vector<4x256xf32> to vector<4x1xf32>
    %733 = vector.extract_strided_slice %713 {offsets = [0, 0], sizes = [4, 255], strides = [1, 1]} : vector<4x256xf32> to vector<4x255xf32>
    %734 = tpu.concatenate %732, %733 in 1 : vector<4x1xf32>, vector<4x255xf32> -> vector<4x256xf32>
    %c3_272 = arith.constant 3 : index
    %c0_273 = arith.constant 0 : index
    %735 = vector.load %arg16[%c3_272, %c0_273] : memref<9x256xf32, #tpu.memory_space<vmem>>, vector<1x256xf32>
    %736 = vector.broadcast %735 : vector<1x256xf32> to vector<4x256xf32>
    %737 = arith.mulf %734, %736 : vector<4x256xf32>
    %738 = vector.extract_strided_slice %713 {offsets = [0, 1], sizes = [4, 255], strides = [1, 1]} : vector<4x256xf32> to vector<4x255xf32>
    %739 = vector.extract_strided_slice %713 {offsets = [0, 0], sizes = [4, 1], strides = [1, 1]} : vector<4x256xf32> to vector<4x1xf32>
    %740 = tpu.concatenate %738, %739 in 1 : vector<4x255xf32>, vector<4x1xf32> -> vector<4x256xf32>
    %c5_274 = arith.constant 5 : index
    %c0_275 = arith.constant 0 : index
    %741 = vector.load %arg16[%c5_274, %c0_275] : memref<9x256xf32, #tpu.memory_space<vmem>>, vector<1x256xf32>
    %742 = vector.broadcast %741 : vector<1x256xf32> to vector<4x256xf32>
    %743 = arith.mulf %740, %742 : vector<4x256xf32>
    %744 = vector.extract_strided_slice %713 {offsets = [0, 15], sizes = [4, 241], strides = [1, 1]} : vector<4x256xf32> to vector<4x241xf32>
    %745 = vector.extract_strided_slice %713 {offsets = [0, 0], sizes = [4, 15], strides = [1, 1]} : vector<4x256xf32> to vector<4x15xf32>
    %746 = tpu.concatenate %744, %745 in 1 : vector<4x241xf32>, vector<4x15xf32> -> vector<4x256xf32>
    %c6_276 = arith.constant 6 : index
    %c0_277 = arith.constant 0 : index
    %747 = vector.load %arg16[%c6_276, %c0_277] : memref<9x256xf32, #tpu.memory_space<vmem>>, vector<1x256xf32>
    %748 = vector.broadcast %747 : vector<1x256xf32> to vector<4x256xf32>
    %749 = arith.mulf %746, %748 : vector<4x256xf32>
    %750 = vector.extract_strided_slice %713 {offsets = [0, 16], sizes = [4, 240], strides = [1, 1]} : vector<4x256xf32> to vector<4x240xf32>
    %751 = vector.extract_strided_slice %713 {offsets = [0, 0], sizes = [4, 16], strides = [1, 1]} : vector<4x256xf32> to vector<4x16xf32>
    %752 = tpu.concatenate %750, %751 in 1 : vector<4x240xf32>, vector<4x16xf32> -> vector<4x256xf32>
    %c7_278 = arith.constant 7 : index
    %c0_279 = arith.constant 0 : index
    %753 = vector.load %arg16[%c7_278, %c0_279] : memref<9x256xf32, #tpu.memory_space<vmem>>, vector<1x256xf32>
    %754 = vector.broadcast %753 : vector<1x256xf32> to vector<4x256xf32>
    %755 = arith.mulf %752, %754 : vector<4x256xf32>
    %756 = vector.extract_strided_slice %713 {offsets = [0, 17], sizes = [4, 239], strides = [1, 1]} : vector<4x256xf32> to vector<4x239xf32>
    %757 = vector.extract_strided_slice %713 {offsets = [0, 0], sizes = [4, 17], strides = [1, 1]} : vector<4x256xf32> to vector<4x17xf32>
    %758 = tpu.concatenate %756, %757 in 1 : vector<4x239xf32>, vector<4x17xf32> -> vector<4x256xf32>
    %c8_280 = arith.constant 8 : index
    %c0_281 = arith.constant 0 : index
    %759 = vector.load %arg16[%c8_280, %c0_281] : memref<9x256xf32, #tpu.memory_space<vmem>>, vector<1x256xf32>
    %760 = vector.broadcast %759 : vector<1x256xf32> to vector<4x256xf32>
    %761 = arith.mulf %758, %760 : vector<4x256xf32>
    %762 = tpu.concatenate %719, %725, %731, %737, %713, %743, %749, %755, %761 in 0 : vector<4x256xf32>, vector<4x256xf32>, vector<4x256xf32>, vector<4x256xf32>, vector<4x256xf32>, vector<4x256xf32>, vector<4x256xf32>, vector<4x256xf32>, vector<4x256xf32> -> vector<36x256xf32>
    %c0_282 = arith.constant 0 : index
    %c0_283 = arith.constant 0 : index
    %763 = vector.load %arg13[%c0_282, %c0_283] : memref<4x36xf32, #tpu.memory_space<vmem>>, vector<4x36xf32>
    %cst_284 = arith.constant dense<0.000000e+00> : vector<4x256xf32>
    %764 = tpu.matmul %763, %762, %cst_284 {dimension_numbers = #tpu.dot_dimension_numbers<[1], [0], [0], [1], [0, 0, 1, 1], [], []>} : vector<4x36xf32>, vector<36x256xf32>, vector<4x256xf32> -> vector<4x256xf32>
    %cst_285 = arith.constant dense<0.000000e+00> : vector<4xf32>
    %765 = vector.multi_reduction <add>, %764, %cst_285 [1] : vector<4x256xf32> to vector<4xf32>
    %766 = vector.shape_cast %765 : vector<4xf32> to vector<4x1xf32>
    %cst_286 = arith.constant 3.906250e-03 : f32
    %767 = vector.broadcast %cst_286 : f32 to vector<4x1xf32>
    %768 = arith.mulf %766, %767 : vector<4x1xf32>
    %769 = vector.broadcast %768 : vector<4x1xf32> to vector<4x256xf32>
    %770 = arith.subf %764, %769 : vector<4x256xf32>
    %771 = arith.mulf %770, %770 : vector<4x256xf32>
    %cst_287 = arith.constant dense<0.000000e+00> : vector<4xf32>
    %772 = vector.multi_reduction <add>, %771, %cst_287 [1] : vector<4x256xf32> to vector<4xf32>
    %773 = vector.shape_cast %772 : vector<4xf32> to vector<4x1xf32>
    %cst_288 = arith.constant 3.906250e-03 : f32
    %774 = vector.broadcast %cst_288 : f32 to vector<4x1xf32>
    %775 = arith.mulf %773, %774 : vector<4x1xf32>
    %cst_289 = arith.constant 9.99999974E-6 : f32
    %776 = vector.broadcast %cst_289 : f32 to vector<4x1xf32>
    %777 = arith.addf %775, %776 : vector<4x1xf32>
    %778 = math.rsqrt %777 : vector<4x1xf32>
    %779 = vector.broadcast %778 : vector<4x1xf32> to vector<4x256xf32>
    %780 = arith.mulf %770, %779 : vector<4x256xf32>
    %cst_290 = arith.constant 0.000000e+00 : f32
    %781 = vector.broadcast %cst_290 : f32 to vector<4x256xf32>
    %782 = arith.cmpf oge, %780, %781 : vector<4x256xf32>
    %cst_291 = arith.constant 2.000000e-01 : f32
    %783 = vector.broadcast %cst_291 : f32 to vector<4x256xf32>
    %784 = arith.mulf %783, %780 : vector<4x256xf32>
    %785 = arith.select %782, %780, %784 : vector<4x256xi1>, vector<4x256xf32>
    %c0_292 = arith.constant 0 : index
    %c0_293 = arith.constant 0 : index
    %786 = vector.load %arg14[%c0_292, %c0_293] : memref<1x4xf32, #tpu.memory_space<vmem>>, vector<1x4xf32>
    %cst_294 = arith.constant dense<0.000000e+00> : vector<1x256xf32>
    %787 = tpu.matmul %786, %785, %cst_294 {dimension_numbers = #tpu.dot_dimension_numbers<[1], [0], [0], [1], [0, 0, 1, 1], [], []>} : vector<1x4xf32>, vector<4x256xf32>, vector<1x256xf32> -> vector<1x256xf32>
    %c0_295 = arith.constant 0 : index
    %c0_296 = arith.constant 0 : index
    %788 = vector.load %arg15[%c0_295, %c0_296] : memref<1x1xf32, #tpu.memory_space<vmem>>, vector<1x1xf32>
    %789 = vector.broadcast %788 : vector<1x1xf32> to vector<1x256xf32>
    %790 = arith.addf %787, %789 : vector<1x256xf32>
    %c0_297 = arith.constant 0 : index
    %c0_298 = arith.constant 0 : index
    %c0_299 = arith.constant 0 : index
    %791 = vector.load %arg23[%c0_297, %c0_298, %c0_299] : memref<1x1x256xf32, #tpu.memory_space<vmem>>, vector<1x1x256xf32>
    %792 = vector.shape_cast %791 : vector<1x1x256xf32> to vector<1x256xf32>
    %793 = vector.shape_cast %790 : vector<1x256xf32> to vector<1x1x256xf32>
    tpu.vector_store %arg23[%c0_297, %c0_298, %c0_299], %793 {strides = array<i32>} : memref<1x1x256xf32, #tpu.memory_space<vmem>>, vector<1x1x256xf32>,
    return
  }
  func.func @transform_0(%arg0: i32) -> (i32, i32, i32) {
    %c0_i32 = arith.constant 0 : i32
    %c0_i32_0 = arith.constant 0 : i32
    %c0_i32_1 = arith.constant 0 : i32
    return %arg0, %c0_i32, %c0_i32_0 : i32, i32, i32
  }
  func.func @transform_1(%arg0: i32) -> (i32, i32) {
    %c0_i32 = arith.constant 0 : i32
    %c0_i32_0 = arith.constant 0 : i32
    %c0_i32_1 = arith.constant 0 : i32
    return %c0_i32, %c0_i32_0 : i32, i32
  }
  func.func @transform_2(%arg0: i32) -> (i32, i32) {
    %c0_i32 = arith.constant 0 : i32
    %c0_i32_0 = arith.constant 0 : i32
    %c0_i32_1 = arith.constant 0 : i32
    return %c0_i32, %c0_i32_0 : i32, i32
  }
  func.func @transform_3(%arg0: i32) -> (i32, i32) {
    %c0_i32 = arith.constant 0 : i32
    %c0_i32_0 = arith.constant 0 : i32
    %c0_i32_1 = arith.constant 0 : i32
    return %c0_i32, %c0_i32_0 : i32, i32
  }
  func.func @transform_4(%arg0: i32) -> (i32, i32) {
    %c0_i32 = arith.constant 0 : i32
    %c0_i32_0 = arith.constant 0 : i32
    %c0_i32_1 = arith.constant 0 : i32
    return %c0_i32, %c0_i32_0 : i32, i32
  }
  func.func @transform_5(%arg0: i32) -> (i32, i32) {
    %c0_i32 = arith.constant 0 : i32
    %c0_i32_0 = arith.constant 0 : i32
    %c0_i32_1 = arith.constant 0 : i32
    return %c0_i32, %c0_i32_0 : i32, i32
  }
  func.func @transform_6(%arg0: i32) -> (i32, i32) {
    %c0_i32 = arith.constant 0 : i32
    %c0_i32_0 = arith.constant 0 : i32
    %c0_i32_1 = arith.constant 0 : i32
    return %c0_i32, %c0_i32_0 : i32, i32
  }
  func.func @transform_7(%arg0: i32) -> (i32, i32) {
    %c0_i32 = arith.constant 0 : i32
    %c0_i32_0 = arith.constant 0 : i32
    %c0_i32_1 = arith.constant 0 : i32
    return %c0_i32, %c0_i32_0 : i32, i32
  }
  func.func @transform_8(%arg0: i32) -> (i32, i32) {
    %c0_i32 = arith.constant 0 : i32
    %c0_i32_0 = arith.constant 0 : i32
    %c0_i32_1 = arith.constant 0 : i32
    return %c0_i32, %c0_i32_0 : i32, i32
  }
  func.func @transform_9(%arg0: i32) -> (i32, i32) {
    %c0_i32 = arith.constant 0 : i32
    %c0_i32_0 = arith.constant 0 : i32
    %c0_i32_1 = arith.constant 0 : i32
    return %c0_i32, %c0_i32_0 : i32, i32
  }
  func.func @transform_10(%arg0: i32) -> (i32, i32) {
    %c0_i32 = arith.constant 0 : i32
    %c0_i32_0 = arith.constant 0 : i32
    %c0_i32_1 = arith.constant 0 : i32
    return %c0_i32, %c0_i32_0 : i32, i32
  }
  func.func @transform_11(%arg0: i32) -> (i32, i32) {
    %c0_i32 = arith.constant 0 : i32
    %c0_i32_0 = arith.constant 0 : i32
    %c0_i32_1 = arith.constant 0 : i32
    return %c0_i32, %c0_i32_0 : i32, i32
  }
  func.func @transform_12(%arg0: i32) -> (i32, i32) {
    %c0_i32 = arith.constant 0 : i32
    %c0_i32_0 = arith.constant 0 : i32
    %c0_i32_1 = arith.constant 0 : i32
    return %c0_i32, %c0_i32_0 : i32, i32
  }
  func.func @transform_13(%arg0: i32) -> (i32, i32) {
    %c0_i32 = arith.constant 0 : i32
    %c0_i32_0 = arith.constant 0 : i32
    %c0_i32_1 = arith.constant 0 : i32
    return %c0_i32, %c0_i32_0 : i32, i32
  }
  func.func @transform_14(%arg0: i32) -> (i32, i32) {
    %c0_i32 = arith.constant 0 : i32
    %c0_i32_0 = arith.constant 0 : i32
    %c0_i32_1 = arith.constant 0 : i32
    return %c0_i32, %c0_i32_0 : i32, i32
  }
  func.func @transform_15(%arg0: i32) -> (i32, i32) {
    %c0_i32 = arith.constant 0 : i32
    %c0_i32_0 = arith.constant 0 : i32
    %c0_i32_1 = arith.constant 0 : i32
    return %c0_i32, %c0_i32_0 : i32, i32
  }
  func.func @transform_16(%arg0: i32) -> (i32, i32) {
    %c0_i32 = arith.constant 0 : i32
    %c0_i32_0 = arith.constant 0 : i32
    %c0_i32_1 = arith.constant 0 : i32
    return %c0_i32, %c0_i32_0 : i32, i32
  }
  func.func @transform_17(%arg0: i32) -> (i32, i32) {
    %c0_i32 = arith.constant 0 : i32
    %c0_i32_0 = arith.constant 0 : i32
    %c0_i32_1 = arith.constant 0 : i32
    return %c0_i32, %c0_i32_0 : i32, i32
  }
  func.func @transform_18(%arg0: i32) -> (i32, i32) {
    %c0_i32 = arith.constant 0 : i32
    %c0_i32_0 = arith.constant 0 : i32
    %c0_i32_1 = arith.constant 0 : i32
    return %c0_i32, %c0_i32_0 : i32, i32
  }
  func.func @transform_19(%arg0: i32) -> (i32, i32) {
    %c0_i32 = arith.constant 0 : i32
    %c0_i32_0 = arith.constant 0 : i32
    %c0_i32_1 = arith.constant 0 : i32
    return %c0_i32, %c0_i32_0 : i32, i32
  }
  func.func @transform_20(%arg0: i32) -> (i32, i32) {
    %c0_i32 = arith.constant 0 : i32
    %c0_i32_0 = arith.constant 0 : i32
    %c0_i32_1 = arith.constant 0 : i32
    return %c0_i32, %c0_i32_0 : i32, i32
  }
  func.func @transform_21(%arg0: i32) -> (i32, i32) {
    %c0_i32 = arith.constant 0 : i32
    %c0_i32_0 = arith.constant 0 : i32
    %c0_i32_1 = arith.constant 0 : i32
    return %c0_i32, %c0_i32_0 : i32, i32
  }
  func.func @transform_22(%arg0: i32) -> (i32, i32, i32) {
    %c0_i32 = arith.constant 0 : i32
    %c0_i32_0 = arith.constant 0 : i32
    %c0_i32_1 = arith.constant 0 : i32
    return %arg0, %c0_i32, %c0_i32_0 : i32, i32, i32
  }
}

module attributes {stable_mosaic.version = 11 : i64} {
  func.func @_dc_kernel(%arg0: memref<1x1x1xf32, #tpu.memory_space<vmem>>, %arg1: memref<2x2x256xf32, #tpu.memory_space<vmem>>, %arg2: memref<2x2x256xf32, #tpu.memory_space<vmem>>, %arg3: memref<2x2x256xf32, #tpu.memory_space<vmem>>, %arg4: memref<2x2x256xf32, #tpu.memory_space<vmem>>) attributes {dimension_semantics = [], scalar_prefetch = 0 : i64, scratch_operands = 0 : i64, tpu.core_type = #tpu.core_type<tc>} {
    %c0 = arith.constant 0 : index
    %c0_0 = arith.constant 0 : index
    %c0_1 = arith.constant 0 : index
    %0 = vector.load %arg0[%c0, %c0_0, %c0_1] : memref<1x1x1xf32, #tpu.memory_space<vmem>>, vector<1x1x1xf32>
    %cst = arith.constant 1.000000e+00 : f32
    %1 = vector.broadcast %cst : f32 to vector<1x1x1xf32>
    %2 = arith.addf %1, %0 : vector<1x1x1xf32>
    %cst_2 = arith.constant 1.000000e+00 : f32
    %3 = vector.broadcast %cst_2 : f32 to vector<1x1x1xf32>
    %4 = arith.divf %3, %2 : vector<1x1x1xf32>
    %c0_3 = arith.constant 0 : index
    %c0_4 = arith.constant 0 : index
    %c0_5 = arith.constant 0 : index
    %5 = vector.load %arg1[%c0_3, %c0_4, %c0_5] : memref<2x2x256xf32, #tpu.memory_space<vmem>>, vector<2x2x256xf32>
    %c0_6 = arith.constant 0 : index
    %c0_7 = arith.constant 0 : index
    %c0_8 = arith.constant 0 : index
    %6 = vector.load %arg3[%c0_6, %c0_7, %c0_8] : memref<2x2x256xf32, #tpu.memory_space<vmem>>, vector<2x2x256xf32>
    %cst_9 = arith.constant 1.000000e+00 : f32
    %7 = vector.broadcast %cst_9 : f32 to vector<2x2x256xf32>
    %8 = arith.subf %7, %6 : vector<2x2x256xf32>
    %9 = arith.mulf %8, %5 : vector<2x2x256xf32>
    %10 = vector.broadcast %4 : vector<1x1x1xf32> to vector<2x2x256xf32>
    %11 = arith.mulf %6, %10 : vector<2x2x256xf32>
    %c0_10 = arith.constant 0 : index
    %c0_11 = arith.constant 0 : index
    %c0_12 = arith.constant 0 : index
    %12 = vector.load %arg2[%c0_10, %c0_11, %c0_12] : memref<2x2x256xf32, #tpu.memory_space<vmem>>, vector<2x2x256xf32>
    %13 = vector.broadcast %0 : vector<1x1x1xf32> to vector<2x2x256xf32>
    %14 = arith.mulf %13, %12 : vector<2x2x256xf32>
    %15 = arith.addf %5, %14 : vector<2x2x256xf32>
    %16 = arith.mulf %11, %15 : vector<2x2x256xf32>
    %17 = arith.addf %9, %16 : vector<2x2x256xf32>
    %c0_13 = arith.constant 0 : index
    %c0_14 = arith.constant 0 : index
    %c0_15 = arith.constant 0 : index
    %18 = vector.load %arg4[%c0_13, %c0_14, %c0_15] : memref<2x2x256xf32, #tpu.memory_space<vmem>>, vector<2x2x256xf32>
    tpu.vector_store %arg4[%c0_13, %c0_14, %c0_15], %17 {strides = array<i32>} : memref<2x2x256xf32, #tpu.memory_space<vmem>>, vector<2x2x256xf32>,
    return
  }
}

</mosaic_0001>

<llo_original>
// kernel: custom-call
$region0: #{custom-call}
  %s0 = inlined_call_operand.hbm [shape: c64[2,1,16,16], index: 0, kind: input, shape index: {}]
  %s1 = inlined_call_operand.vmem [shape: f32[2,1,16,16], index: 1, kind: output, shape index: {}]
  $region1: #{custom-call} parent=0
    #allocation0 [shape = 's32[1]{0}', space=sflag, size = 0x4, scoped, tag = 'scoped memory for custom-call']
    %2 = vsyncpa [#allocation0], 0
    %s3 = sshll.u32 %s1, 4
    %s4 = int_to_ptr.vmem [resolvable:$true] %s3
    %6 = dma.hbm_to_vmem [thread:$0]  %s0, 512, %s4, [#allocation0]
    %7 = dma.done [#allocation0], 512
    %8 = vsyncpa [#allocation0], 1

// kernel: custom-call.1
$region0: #{custom-call.1}
  %s0 = inlined_call_operand.hbm [shape: c64[2,1,16,16], index: 0, kind: input, shape index: {}]
  %s1 = inlined_call_operand.vmem [shape: f32[2,1,16,16], index: 1, kind: output, shape index: {}]
  %s2 = scalar_lea.hbm %s0, 512
  $region1: #{custom-call.1} parent=0
    #allocation0 [shape = 's32[1]{0}', space=sflag, size = 0x4, scoped, tag = 'scoped memory for custom-call.1']
    %3 = vsyncpa [#allocation0], 0
    %s4 = sshll.u32 %s1, 4
    %s5 = int_to_ptr.vmem [resolvable:$true] %s4
    %7 = dma.hbm_to_vmem [thread:$0]  %s2, 512, %s5, [#allocation0]
    %8 = dma.done [#allocation0], 512
    %9 = vsyncpa [#allocation0], 1

// kernel: unet_dcl_cascade.3
$region0: #{unet_dcl_cascade.3}
  #allocation0 [shape = 'u32[]', space=smem, size = 0x4, offset = 0x4, fixed_abs, tag = 'smem constant byte address 0x4 - core index']
  #allocation1 [shape = 'u32[144,128]{1,0:T(1,128)}', space=vmem, size = 0x12000, scoped, tag = 'internal scratch']
  #allocation2 [shape = 'f32[1,1,1]{2,1,0:T(1,128)S(1)}', space=vmem, size = 0x200, scoped, tag = 'scoped memory for unet_dcl_cascade.3']
  %s0 = inlined_call_operand.<no memory space> [shape: f32[1,1,1], index: 0, kind: input, shape index: {}]
  %s1 = inlined_call_operand.vmem [shape: f32[2,2,256], index: 1, kind: input, shape index: {}]
  %s2 = inlined_call_operand.vmem [shape: f32[2,2,256], index: 2, kind: input, shape index: {}]
  %s3 = inlined_call_operand.vmem [shape: f32[2,2,256], index: 3, kind: input, shape index: {}]
  %s4 = inlined_call_operand.vmem [shape: f32[2,2,256], index: 4, kind: output, shape index: {}]
  %s5 = sld [smem:[#allocation0]]
  $region26: #{unet_dcl_cascade.3} parent=0
    _
  %s7 = ssub.s32 1, %s5
  %s8 = scalar_select 0, %s7, %s5
  %v9 = vstv %s0
  %10 = vst [vmem:[#allocation2] sm:$0x1] %v9
  // Predicated region
  $region2: #{unet_dcl_cascade.3} parent=0 // pred_check
    _
  $region3: #{unet_dcl_cascade.3} parent=0 // pred_check_branch
    %12 = sbr.rel (0) target = $region5
  $region4: #{unet_dcl_cascade.3} parent=0 // pred_region
    _
  $region5: #{unet_dcl_cascade.3} parent=0 // pred_fallthru
    _
  // Predicated region
  $region6: #{unet_dcl_cascade.3} parent=0 // pred_check
    _
  $region7: #{unet_dcl_cascade.3} parent=0 // pred_check_branch
    %14 = sbr.rel (0) target = $region9
  $region8: #{unet_dcl_cascade.3} parent=0 // pred_region
    _
  $region9: #{unet_dcl_cascade.3} parent=0 // pred_fallthru
    _
  // Predicated region
  $region10: #{unet_dcl_cascade.3} parent=0 // pred_check
    _
  $region11: #{unet_dcl_cascade.3} parent=0 // pred_check_branch
    %16 = sbr.rel (0) target = $region13
  $region12: #{unet_dcl_cascade.3} parent=0 // pred_region
    _
  $region13: #{unet_dcl_cascade.3} parent=0 // pred_fallthru
    _
  // Predicated region
  $region14: #{unet_dcl_cascade.3} parent=0 // pred_check
    _
  $region15: #{unet_dcl_cascade.3} parent=0 // pred_check_branch
    %18 = sbr.rel (0) target = $region17
  $region16: #{unet_dcl_cascade.3} parent=0 // pred_region
    _
  $region17: #{unet_dcl_cascade.3} parent=0 // pred_fallthru
    _
  %v19 = vld [vmem:[#allocation2] sm:$0x1]
  %v20 = vadd.f32 %v19, 1.0
  %v21 = vrcp.pop %v20
  %v22 = vmul.f32 1.0, %v21
  %v23 = vld [vmem:[%s1] sm:$0xf]
  %v24 = vld [vmem:[%s1 + $0x4] sm:$0xf]
  %v25 = vld [vmem:[%s3] sm:$0xf]
  %v26 = vld [vmem:[%s3 + $0x4] sm:$0xf]
  %v27 = vsub.f32 1.0, %v25
  %v28 = vsub.f32 1.0, %v26
  %v29 = vmul.f32 %v27, %v23
  %v30 = vmul.f32 %v28, %v24
  %v32 = vlaneseq
  %v33 = vshrl.u32 %v32, 7
  %v34 = vsub.s32 0, %v33
  %v35 = vrot.slane %v22, %v34
  %36 = vset.pattern.permute.xlu0 0
  %37 = vperm.xlu0 %36, %v35
  %v38 = vpop.permute.xlu0 %37
  %v40 = vmul.f32 %v25, %v38
  %v41 = vmul.f32 %v26, %v38
  %v42 = vld [vmem:[%s2] sm:$0xf]
  %v43 = vld [vmem:[%s2 + $0x4] sm:$0xf]
  %v45 = vlaneseq
  %v46 = vshrl.u32 %v45, 7
  %v47 = vsub.s32 0, %v46
  %v48 = vrot.slane %v19, %v47
  %49 = vset.pattern.permute.xlu0 0
  %50 = vperm.xlu0 %49, %v48
  %v51 = vpop.permute.xlu0 %50
  %v53 = vmul.f32 %v51, %v42
  %v54 = vmul.f32 %v51, %v43
  %v55 = vadd.f32 %v23, %v53
  %v56 = vadd.f32 %v24, %v54
  %v57 = vmul.f32 %v40, %v55
  %v58 = vmul.f32 %v41, %v56
  %v59 = vadd.f32 %v29, %v57
  %v60 = vadd.f32 %v30, %v58
  %61 = vst [vmem:[%s4] sm:$0xf] %v59
  %62 = vst [vmem:[%s4 + $0x4] sm:$0xf] %v60
  // Predicated region
  $region18: #{unet_dcl_cascade.3} parent=0 // pred_check
    _
  $region19: #{unet_dcl_cascade.3} parent=0 // pred_check_branch
    %64 = sbr.rel (0) target = $region21
  $region20: #{unet_dcl_cascade.3} parent=0 // pred_region
    _
  $region21: #{unet_dcl_cascade.3} parent=0 // pred_fallthru
    _
  // Predicated region
  $region22: #{unet_dcl_cascade.3} parent=0 // pred_check
    _
  $region23: #{unet_dcl_cascade.3} parent=0 // pred_check_branch
    %66 = sbr.rel (0) target = $region25
  $region24: #{unet_dcl_cascade.3} parent=0 // pred_region
    _
  $region25: #{unet_dcl_cascade.3} parent=0 // pred_fallthru
    _

// kernel: unet_dcl_cascade.2
$region0: #{unet_dcl_cascade.2}
  #allocation0 [shape = 'u32[]', space=smem, size = 0x4, offset = 0x4, fixed_abs, tag = 'smem constant byte address 0x4 - core index']
  #allocation1 [shape = 'u32[144,128]{1,0:T(1,128)}', space=vmem, size = 0x12000, scoped, tag = 'internal scratch']
  #allocation2 [shape = 'f32[1,1]{1,0:T(1,128)S(1)}', space=vmem, size = 0x200, scoped, tag = 'scoped memory for unet_dcl_cascade.2']
  %s0 = inlined_call_operand.vmem [shape: f32[2,1,256], index: 0, kind: input, shape index: {}]
  %s1 = inlined_call_operand.vmem [shape: f32[4,9], index: 1, kind: input, shape index: {}]
  %s2 = inlined_call_operand.vmem [shape: f32[4,36], index: 2, kind: input, shape index: {}]
  %s3 = inlined_call_operand.vmem [shape: f32[8,36], index: 3, kind: input, shape index: {}]
  %s4 = inlined_call_operand.vmem [shape: f32[8,72], index: 4, kind: input, shape index: {}]
  %s5 = inlined_call_operand.vmem [shape: f32[16,72], index: 5, kind: input, shape index: {}]
  %s6 = inlined_call_operand.vmem [shape: f32[16,144], index: 6, kind: input, shape index: {}]
  %s7 = inlined_call_operand.vmem [shape: f32[8,64], index: 7, kind: input, shape index: {}]
  %s8 = inlined_call_operand.vmem [shape: f32[8,144], index: 8, kind: input, shape index: {}]
  %s9 = inlined_call_operand.vmem [shape: f32[8,72], index: 9, kind: input, shape index: {}]
  %s10 = inlined_call_operand.vmem [shape: f32[4,32], index: 10, kind: input, shape index: {}]
  %s11 = inlined_call_operand.vmem [shape: f32[4,72], index: 11, kind: input, shape index: {}]
  %s12 = inlined_call_operand.vmem [shape: f32[4,36], index: 12, kind: input, shape index: {}]
  %s13 = inlined_call_operand.vmem [shape: f32[1,4], index: 13, kind: input, shape index: {}]
  %s14 = inlined_call_operand.<no memory space> [shape: f32[1,1], index: 14, kind: input, shape index: {}]
  %s15 = inlined_call_operand.vmem [shape: f32[9,256], index: 15, kind: input, shape index: {}]
  %s16 = inlined_call_operand.hbm [shape: f32[9,64], index: 16, kind: input, shape index: {}]
  %s17 = inlined_call_operand.hbm [shape: f32[9,16], index: 17, kind: input, shape index: {}]
  %s18 = inlined_call_operand.vmem [shape: f32[256,64], index: 18, kind: input, shape index: {}]
  %s19 = inlined_call_operand.vmem [shape: f32[64,16], index: 19, kind: input, shape index: {}]
  %s20 = inlined_call_operand.vmem [shape: f32[64,64], index: 20, kind: input, shape index: {}]
  %s21 = inlined_call_operand.vmem [shape: f32[256,256], index: 21, kind: input, shape index: {}]
  %s22 = inlined_call_operand.vmem [shape: f32[2,1,256], index: 22, kind: output, shape index: {}]
  %s23 = sld [smem:[#allocation0]]
  $region129: #{unet_dcl_cascade.2} parent=0
    _
  %s25 = ssub.s32 1, %s23
  %s26 = scalar_select 0, %s25, %s23
  %v27 = vstv %s14
  %28 = vst [vmem:[#allocation2] sm:$0x1] %v27
  $region1: #{unet_dcl_cascade.2} parent=0
    #allocation3 [shape = 'u8[8192]{0}', space=vmem, size = 0x2000, scoped, tag = 'input window, operand 16, single buffered']
    #allocation4 [shape = 's32[2]{0}', space=sflag, size = 0x8, scoped, tag = 'scoped memory for unet_dcl_cascade.2']
    #allocation5 [shape = 'u8[8192]{0}', space=vmem, size = 0x2000, scoped, tag = 'input window, operand 17, single buffered']
    #allocation6 [shape = 's32[1]{0}', space=sflag, size = 0x4, scoped, tag = 'scoped memory for unet_dcl_cascade.2']
    %29 = vsyncpa [#allocation4], 0
    %30 = vsyncpa [#allocation6], 0
    loop: start=0, step=1, limit=4
    $region2: #{unet_dcl_cascade.2} parent=1 // loop_pre_header
      _
    $region3: #{unet_dcl_cascade.2} parent=1 // loop_header
      %s32 = sphi 0, %s36
      %p33 = scmp.ge.s32.totalorder %s32, 4
      %s42 = sphi 0, %s44
      %s45 = sphi 0, %s42
      %s46 = sphi 0, %s45
      %s62 = sphi 0, %s46
      %s66 = sphi 0, %s66
      %s68 = sphi 0, %s66
      %s69 = sphi 0, %s68
      %s83 = sphi 0, %s69
      %s87 = sphi 0, %s87
      %s89 = sphi 0, %s87
      %s90 = sphi 0, %s89
      %s104 = sphi 0, %s90
      %s108 = sphi 0, %s108
      %s110 = sphi 0, %s108
      %s111 = sphi 0, %s110
      %s125 = sphi 0, %s111
      %s129 = sphi 0, %s129
      %s131 = sphi 0, %s129
      %s132 = sphi 0, %s131
      %s146 = sphi 0, %s132
      %s150 = sphi 0, %s150
      %s152 = sphi 0, %s150
      %s153 = sphi 0, %s152
      %s167 = sphi 0, %s153
      %s171 = sphi 0, %s171
      %s173 = sphi 0, %s171
      %s174 = sphi 0, %s173
      %s188 = sphi 0, %s174
      %s192 = sphi 0, %s192
      %s194 = sphi 0, %s192
      %s195 = sphi 0, %s194
      %s209 = sphi 0, %s195
      %s213 = sphi 0, %s213
      %s215 = sphi 0, %s213
      %s216 = sphi 0, %s215
      %s230 = sphi 0, %s216
      %s234 = sphi 0, %s234
      %s236 = sphi 0, %s234
      %s237 = sphi 0, %s236
      %s251 = sphi 0, %s237
      %s255 = sphi 0, %s255
      %s257 = sphi 0, %s255
      %s258 = sphi 0, %s257
      %s272 = sphi 0, %s258
      %s276 = sphi 0, %s276
      %s278 = sphi 0, %s276
      %s279 = sphi 0, %s278
      %s293 = sphi 0, %s279
      %s297 = sphi 0, %s297
      %s299 = sphi 0, %s297
      %s300 = sphi 0, %s299
      %s314 = sphi 0, %s300
      %s318 = sphi 0, %s318
      %s320 = sphi 0, %s318
      %s321 = sphi 0, %s320
      %s335 = sphi 0, %s321
      %s339 = sphi 0, %s339
      %s341 = sphi 0, %s339
      %s342 = sphi 0, %s341
      %s356 = sphi 0, %s342
      %s360 = sphi 0, %s360
      %s362 = sphi 0, %s360
      %s363 = sphi 0, %s362
      %s377 = sphi 0, %s363
      %s381 = sphi 0, %s381
      %s383 = sphi 0, %s381
      %s384 = sphi 0, %s383
      %s398 = sphi 0, %s384
      %s402 = sphi 0, %s402
      %s404 = sphi 0, %s402
      %s405 = sphi 0, %s404
      %s419 = sphi 0, %s405
      %s423 = sphi 0, %s423
      %s425 = sphi 0, %s423
      %s426 = sphi 0, %s425
      %s440 = sphi 0, %s426
      %s444 = sphi 0, %s444
      %s446 = sphi 0, %s444
      %s447 = sphi 0, %s446
      %s461 = sphi 0, %s447
      %s465 = sphi 0, %s465
      %s467 = sphi 0, %s465
      %s468 = sphi 0, %s467
      %s482 = sphi 0, %s468
      %s486 = sphi 0, %s486
      %s488 = sphi 0, %s486
      %s489 = sphi 0, %s488
      %s503 = sphi 0, %s489
      %s509 = sphi 0, %s511
      %s512 = sphi 0, %s509
      %s513 = sphi 0, %s512
      %s529 = sphi 0, %s513
    $region4: #{unet_dcl_cascade.2} parent=1 // loop_header_branch
      %35 = sbr.rel (%p33) target = $region8
    $region5: #{unet_dcl_cascade.2} parent=1 // loop_body
      %s37 = ssub.s32 %s32, 1
      %s38 = ssub.s32 %s32, 2
      %s39 = sadd.s32 %s32, 1
      %s40 = ssub.s32 %s32, %s39
      %p41 = scmp.eq.s32.totalorder %s40, 0
      %s43 = sadd.s32 %s42, 1
      %s44 = scalar_select %p41, %s42, %s43
      %p47 = pneg %p41
      %p48 = scmp.eq.s32.totalorder %s32, 1
      %p49 = por %p47, %p48
      %p50 = scmp.ne.s32.totalorder %s42, %s45
      %p51 = scmp.eq.s32.totalorder %s32, 0
      %p52 = por %p50, %p51
      %p53 = scmp.ne.s32.totalorder %s42, %s45
      %p54 = scmp.eq.s32.totalorder %s37, 1
      %p55 = por %p53, %p54
      %p56 = scmp.ne.s32.totalorder %s45, %s46
      %p57 = scmp.eq.s32.totalorder %s37, 0
      %p58 = por %p56, %p57
      %p59 = scmp.ne.s32.totalorder %s45, %s46
      %p60 = scmp.eq.s32.totalorder %s38, 1
      %p61 = por %p59, %p60
      %p63 = scmp.ne.s32.totalorder %s46, %s62
      %p64 = scmp.eq.s32.totalorder %s38, 0
      %p65 = por %p63, %p64
      %s67 = sadd.s32 %s66, 1
      %p70 = scmp.eq.s32.totalorder %s32, 1
      %p71 = scmp.ne.s32.totalorder %s66, %s68
      %p72 = scmp.eq.s32.totalorder %s32, 0
      %p73 = por %p71, %p72
      %p74 = scmp.ne.s32.totalorder %s66, %s68
      %p75 = scmp.eq.s32.totalorder %s37, 1
      %p76 = por %p74, %p75
      %p77 = scmp.ne.s32.totalorder %s68, %s69
      %p78 = scmp.eq.s32.totalorder %s37, 0
      %p79 = por %p77, %p78
      %p80 = scmp.ne.s32.totalorder %s68, %s69
      %p81 = scmp.eq.s32.totalorder %s38, 1
      %p82 = por %p80, %p81
      %p84 = scmp.ne.s32.totalorder %s69, %s83
      %p85 = scmp.eq.s32.totalorder %s38, 0
      %p86 = por %p84, %p85
      %s88 = sadd.s32 %s87, 1
      %p91 = scmp.eq.s32.totalorder %s32, 1
      %p92 = scmp.ne.s32.totalorder %s87, %s89
      %p93 = scmp.eq.s32.totalorder %s32, 0
      %p94 = por %p92, %p93
      %p95 = scmp.ne.s32.totalorder %s87, %s89
      %p96 = scmp.eq.s32.totalorder %s37, 1
      %p97 = por %p95, %p96
      %p98 = scmp.ne.s32.totalorder %s89, %s90
      %p99 = scmp.eq.s32.totalorder %s37, 0
      %p100 = por %p98, %p99
      %p101 = scmp.ne.s32.totalorder %s89, %s90
      %p102 = scmp.eq.s32.totalorder %s38, 1
      %p103 = por %p101, %p102
      %p105 = scmp.ne.s32.totalorder %s90, %s104
      %p106 = scmp.eq.s32.totalorder %s38, 0
      %p107 = por %p105, %p106
      %s109 = sadd.s32 %s108, 1
      %p112 = scmp.eq.s32.totalorder %s32, 1
      %p113 = scmp.ne.s32.totalorder %s108, %s110
      %p114 = scmp.eq.s32.totalorder %s32, 0
      %p115 = por %p113, %p114
      %p116 = scmp.ne.s32.totalorder %s108, %s110
      %p117 = scmp.eq.s32.totalorder %s37, 1
      %p118 = por %p116, %p117
      %p119 = scmp.ne.s32.totalorder %s110, %s111
      %p120 = scmp.eq.s32.totalorder %s37, 0
      %p121 = por %p119, %p120
      %p122 = scmp.ne.s32.totalorder %s110, %s111
      %p123 = scmp.eq.s32.totalorder %s38, 1
      %p124 = por %p122, %p123
      %p126 = scmp.ne.s32.totalorder %s111, %s125
      %p127 = scmp.eq.s32.totalorder %s38, 0
      %p128 = por %p126, %p127
      %s130 = sadd.s32 %s129, 1
      %p133 = scmp.eq.s32.totalorder %s32, 1
      %p134 = scmp.ne.s32.totalorder %s129, %s131
      %p135 = scmp.eq.s32.totalorder %s32, 0
      %p136 = por %p134, %p135
      %p137 = scmp.ne.s32.totalorder %s129, %s131
      %p138 = scmp.eq.s32.totalorder %s37, 1
      %p139 = por %p137, %p138
      %p140 = scmp.ne.s32.totalorder %s131, %s132
      %p141 = scmp.eq.s32.totalorder %s37, 0
      %p142 = por %p140, %p141
      %p143 = scmp.ne.s32.totalorder %s131, %s132
      %p144 = scmp.eq.s32.totalorder %s38, 1
      %p145 = por %p143, %p144
      %p147 = scmp.ne.s32.totalorder %s132, %s146
      %p148 = scmp.eq.s32.totalorder %s38, 0
      %p149 = por %p147, %p148
      %s151 = sadd.s32 %s150, 1
      %p154 = scmp.eq.s32.totalorder %s32, 1
      %p155 = scmp.ne.s32.totalorder %s150, %s152
      %p156 = scmp.eq.s32.totalorder %s32, 0
      %p157 = por %p155, %p156
      %p158 = scmp.ne.s32.totalorder %s150, %s152
      %p159 = scmp.eq.s32.totalorder %s37, 1
      %p160 = por %p158, %p159
      %p161 = scmp.ne.s32.totalorder %s152, %s153
      %p162 = scmp.eq.s32.totalorder %s37, 0
      %p163 = por %p161, %p162
      %p164 = scmp.ne.s32.totalorder %s152, %s153
      %p165 = scmp.eq.s32.totalorder %s38, 1
      %p166 = por %p164, %p165
      %p168 = scmp.ne.s32.totalorder %s153, %s167
      %p169 = scmp.eq.s32.totalorder %s38, 0
      %p170 = por %p168, %p169
      %s172 = sadd.s32 %s171, 1
      %p175 = scmp.eq.s32.totalorder %s32, 1
      %p176 = scmp.ne.s32.totalorder %s171, %s173
      %p177 = scmp.eq.s32.totalorder %s32, 0
      %p178 = por %p176, %p177
      %p179 = scmp.ne.s32.totalorder %s171, %s173
      %p180 = scmp.eq.s32.totalorder %s37, 1
      %p181 = por %p179, %p180
      %p182 = scmp.ne.s32.totalorder %s173, %s174
      %p183 = scmp.eq.s32.totalorder %s37, 0
      %p184 = por %p182, %p183
      %p185 = scmp.ne.s32.totalorder %s173, %s174
      %p186 = scmp.eq.s32.totalorder %s38, 1
      %p187 = por %p185, %p186
      %p189 = scmp.ne.s32.totalorder %s174, %s188
      %p190 = scmp.eq.s32.totalorder %s38, 0
      %p191 = por %p189, %p190
      %s193 = sadd.s32 %s192, 1
      %p196 = scmp.eq.s32.totalorder %s32, 1
      %p197 = scmp.ne.s32.totalorder %s192, %s194
      %p198 = scmp.eq.s32.totalorder %s32, 0
      %p199 = por %p197, %p198
      %p200 = scmp.ne.s32.totalorder %s192, %s194
      %p201 = scmp.eq.s32.totalorder %s37, 1
      %p202 = por %p200, %p201
      %p203 = scmp.ne.s32.totalorder %s194, %s195
      %p204 = scmp.eq.s32.totalorder %s37, 0
      %p205 = por %p203, %p204
      %p206 = scmp.ne.s32.totalorder %s194, %s195
      %p207 = scmp.eq.s32.totalorder %s38, 1
      %p208 = por %p206, %p207
      %p210 = scmp.ne.s32.totalorder %s195, %s209
      %p211 = scmp.eq.s32.totalorder %s38, 0
      %p212 = por %p210, %p211
      %s214 = sadd.s32 %s213, 1
      %p217 = scmp.eq.s32.totalorder %s32, 1
      %p218 = scmp.ne.s32.totalorder %s213, %s215
      %p219 = scmp.eq.s32.totalorder %s32, 0
      %p220 = por %p218, %p219
      %p221 = scmp.ne.s32.totalorder %s213, %s215
      %p222 = scmp.eq.s32.totalorder %s37, 1
      %p223 = por %p221, %p222
      %p224 = scmp.ne.s32.totalorder %s215, %s216
      %p225 = scmp.eq.s32.totalorder %s37, 0
      %p226 = por %p224, %p225
      %p227 = scmp.ne.s32.totalorder %s215, %s216
      %p228 = scmp.eq.s32.totalorder %s38, 1
      %p229 = por %p227, %p228
      %p231 = scmp.ne.s32.totalorder %s216, %s230
      %p232 = scmp.eq.s32.totalorder %s38, 0
      %p233 = por %p231, %p232
      %s235 = sadd.s32 %s234, 1
      %p238 = scmp.eq.s32.totalorder %s32, 1
      %p239 = scmp.ne.s32.totalorder %s234, %s236
      %p240 = scmp.eq.s32.totalorder %s32, 0
      %p241 = por %p239, %p240
      %p242 = scmp.ne.s32.totalorder %s234, %s236
      %p243 = scmp.eq.s32.totalorder %s37, 1
      %p244 = por %p242, %p243
      %p245 = scmp.ne.s32.totalorder %s236, %s237
      %p246 = scmp.eq.s32.totalorder %s37, 0
      %p247 = por %p245, %p246
      %p248 = scmp.ne.s32.totalorder %s236, %s237
      %p249 = scmp.eq.s32.totalorder %s38, 1
      %p250 = por %p248, %p249
      %p252 = scmp.ne.s32.totalorder %s237, %s251
      %p253 = scmp.eq.s32.totalorder %s38, 0
      %p254 = por %p252, %p253
      %s256 = sadd.s32 %s255, 1
      %p259 = scmp.eq.s32.totalorder %s32, 1
      %p260 = scmp.ne.s32.totalorder %s255, %s257
      %p261 = scmp.eq.s32.totalorder %s32, 0
      %p262 = por %p260, %p261
      %p263 = scmp.ne.s32.totalorder %s255, %s257
      %p264 = scmp.eq.s32.totalorder %s37, 1
      %p265 = por %p263, %p264
      %p266 = scmp.ne.s32.totalorder %s257, %s258
      %p267 = scmp.eq.s32.totalorder %s37, 0
      %p268 = por %p266, %p267
      %p269 = scmp.ne.s32.totalorder %s257, %s258
      %p270 = scmp.eq.s32.totalorder %s38, 1
      %p271 = por %p269, %p270
      %p273 = scmp.ne.s32.totalorder %s258, %s272
      %p274 = scmp.eq.s32.totalorder %s38, 0
      %p275 = por %p273, %p274
      %s277 = sadd.s32 %s276, 1
      %p280 = scmp.eq.s32.totalorder %s32, 1
      %p281 = scmp.ne.s32.totalorder %s276, %s278
      %p282 = scmp.eq.s32.totalorder %s32, 0
      %p283 = por %p281, %p282
      %p284 = scmp.ne.s32.totalorder %s276, %s278
      %p285 = scmp.eq.s32.totalorder %s37, 1
      %p286 = por %p284, %p285
      %p287 = scmp.ne.s32.totalorder %s278, %s279
      %p288 = scmp.eq.s32.totalorder %s37, 0
      %p289 = por %p287, %p288
      %p290 = scmp.ne.s32.totalorder %s278, %s279
      %p291 = scmp.eq.s32.totalorder %s38, 1
      %p292 = por %p290, %p291
      %p294 = scmp.ne.s32.totalorder %s279, %s293
      %p295 = scmp.eq.s32.totalorder %s38, 0
      %p296 = por %p294, %p295
      %s298 = sadd.s32 %s297, 1
      %p301 = scmp.eq.s32.totalorder %s32, 1
      %p302 = scmp.ne.s32.totalorder %s297, %s299
      %p303 = scmp.eq.s32.totalorder %s32, 0
      %p304 = por %p302, %p303
      %p305 = scmp.ne.s32.totalorder %s297, %s299
      %p306 = scmp.eq.s32.totalorder %s37, 1
      %p307 = por %p305, %p306
      %p308 = scmp.ne.s32.totalorder %s299, %s300
      %p309 = scmp.eq.s32.totalorder %s37, 0
      %p310 = por %p308, %p309
      %p311 = scmp.ne.s32.totalorder %s299, %s300
      %p312 = scmp.eq.s32.totalorder %s38, 1
      %p313 = por %p311, %p312
      %p315 = scmp.ne.s32.totalorder %s300, %s314
      %p316 = scmp.eq.s32.totalorder %s38, 0
      %p317 = por %p315, %p316
      %s319 = sadd.s32 %s318, 1
      %p322 = scmp.eq.s32.totalorder %s32, 1
      %p323 = scmp.ne.s32.totalorder %s318, %s320
      %p324 = scmp.eq.s32.totalorder %s32, 0
      %p325 = por %p323, %p324
      %p326 = scmp.ne.s32.totalorder %s318, %s320
      %p327 = scmp.eq.s32.totalorder %s37, 1
      %p328 = por %p326, %p327
      %p329 = scmp.ne.s32.totalorder %s320, %s321
      %p330 = scmp.eq.s32.totalorder %s37, 0
      %p331 = por %p329, %p330
      %p332 = scmp.ne.s32.totalorder %s320, %s321
      %p333 = scmp.eq.s32.totalorder %s38, 1
      %p334 = por %p332, %p333
      %p336 = scmp.ne.s32.totalorder %s321, %s335
      %p337 = scmp.eq.s32.totalorder %s38, 0
      %p338 = por %p336, %p337
      %s340 = sadd.s32 %s339, 1
      %p343 = scmp.eq.s32.totalorder %s32, 1
      %p344 = scmp.ne.s32.totalorder %s339, %s341
      %p345 = scmp.eq.s32.totalorder %s32, 0
      %p346 = por %p344, %p345
      %p347 = scmp.ne.s32.totalorder %s339, %s341
      %p348 = scmp.eq.s32.totalorder %s37, 1
      %p349 = por %p347, %p348
      %p350 = scmp.ne.s32.totalorder %s341, %s342
      %p351 = scmp.eq.s32.totalorder %s37, 0
      %p352 = por %p350, %p351
      %p353 = scmp.ne.s32.totalorder %s341, %s342
      %p354 = scmp.eq.s32.totalorder %s38, 1
      %p355 = por %p353, %p354
      %p357 = scmp.ne.s32.totalorder %s342, %s356
      %p358 = scmp.eq.s32.totalorder %s38, 0
      %p359 = por %p357, %p358
      %s361 = sadd.s32 %s360, 1
      %p364 = scmp.eq.s32.totalorder %s32, 1
      %p365 = scmp.ne.s32.totalorder %s360, %s362
      %p366 = scmp.eq.s32.totalorder %s32, 0
      %p367 = por %p365, %p366
      %p368 = scmp.ne.s32.totalorder %s360, %s362
      %p369 = scmp.eq.s32.totalorder %s37, 1
      %p370 = por %p368, %p369
      %p371 = scmp.ne.s32.totalorder %s362, %s363
      %p372 = scmp.eq.s32.totalorder %s37, 0
      %p373 = por %p371, %p372
      %p374 = scmp.ne.s32.totalorder %s362, %s363
      %p375 = scmp.eq.s32.totalorder %s38, 1
      %p376 = por %p374, %p375
      %p378 = scmp.ne.s32.totalorder %s363, %s377
      %p379 = scmp.eq.s32.totalorder %s38, 0
      %p380 = por %p378, %p379
      %s382 = sadd.s32 %s381, 1
      %p385 = scmp.eq.s32.totalorder %s32, 1
      %p386 = scmp.ne.s32.totalorder %s381, %s383
      %p387 = scmp.eq.s32.totalorder %s32, 0
      %p388 = por %p386, %p387
      %p389 = scmp.ne.s32.totalorder %s381, %s383
      %p390 = scmp.eq.s32.totalorder %s37, 1
      %p391 = por %p389, %p390
      %p392 = scmp.ne.s32.totalorder %s383, %s384
      %p393 = scmp.eq.s32.totalorder %s37, 0
      %p394 = por %p392, %p393
      %p395 = scmp.ne.s32.totalorder %s383, %s384
      %p396 = scmp.eq.s32.totalorder %s38, 1
      %p397 = por %p395, %p396
      %p399 = scmp.ne.s32.totalorder %s384, %s398
      %p400 = scmp.eq.s32.totalorder %s38, 0
      %p401 = por %p399, %p400
      %s403 = sadd.s32 %s402, 1
      %p406 = scmp.eq.s32.totalorder %s32, 1
      %p407 = scmp.ne.s32.totalorder %s402, %s404
      %p408 = scmp.eq.s32.totalorder %s32, 0
      %p409 = por %p407, %p408
      %p410 = scmp.ne.s32.totalorder %s402, %s404
      %p411 = scmp.eq.s32.totalorder %s37, 1
      %p412 = por %p410, %p411
      %p413 = scmp.ne.s32.totalorder %s404, %s405
      %p414 = scmp.eq.s32.totalorder %s37, 0
      %p415 = por %p413, %p414
      %p416 = scmp.ne.s32.totalorder %s404, %s405
      %p417 = scmp.eq.s32.totalorder %s38, 1
      %p418 = por %p416, %p417
      %p420 = scmp.ne.s32.totalorder %s405, %s419
      %p421 = scmp.eq.s32.totalorder %s38, 0
      %p422 = por %p420, %p421
      %s424 = sadd.s32 %s423, 1
      %p427 = scmp.eq.s32.totalorder %s32, 1
      %p428 = scmp.ne.s32.totalorder %s423, %s425
      %p429 = scmp.eq.s32.totalorder %s32, 0
      %p430 = por %p428, %p429
      %p431 = scmp.ne.s32.totalorder %s423, %s425
      %p432 = scmp.eq.s32.totalorder %s37, 1
      %p433 = por %p431, %p432
      %p434 = scmp.ne.s32.totalorder %s425, %s426
      %p435 = scmp.eq.s32.totalorder %s37, 0
      %p436 = por %p434, %p435
      %p437 = scmp.ne.s32.totalorder %s425, %s426
      %p438 = scmp.eq.s32.totalorder %s38, 1
      %p439 = por %p437, %p438
      %p441 = scmp.ne.s32.totalorder %s426, %s440
      %p442 = scmp.eq.s32.totalorder %s38, 0
      %p443 = por %p441, %p442
      %s445 = sadd.s32 %s444, 1
      %p448 = scmp.eq.s32.totalorder %s32, 1
      %p449 = scmp.ne.s32.totalorder %s444, %s446
      %p450 = scmp.eq.s32.totalorder %s32, 0
      %p451 = por %p449, %p450
      %p452 = scmp.ne.s32.totalorder %s444, %s446
      %p453 = scmp.eq.s32.totalorder %s37, 1
      %p454 = por %p452, %p453
      %p455 = scmp.ne.s32.totalorder %s446, %s447
      %p456 = scmp.eq.s32.totalorder %s37, 0
      %p457 = por %p455, %p456
      %p458 = scmp.ne.s32.totalorder %s446, %s447
      %p459 = scmp.eq.s32.totalorder %s38, 1
      %p460 = por %p458, %p459
      %p462 = scmp.ne.s32.totalorder %s447, %s461
      %p463 = scmp.eq.s32.totalorder %s38, 0
      %p464 = por %p462, %p463
      %s466 = sadd.s32 %s465, 1
      %p469 = scmp.eq.s32.totalorder %s32, 1
      %p470 = scmp.ne.s32.totalorder %s465, %s467
      %p471 = scmp.eq.s32.totalorder %s32, 0
      %p472 = por %p470, %p471
      %p473 = scmp.ne.s32.totalorder %s465, %s467
      %p474 = scmp.eq.s32.totalorder %s37, 1
      %p475 = por %p473, %p474
      %p476 = scmp.ne.s32.totalorder %s467, %s468
      %p477 = scmp.eq.s32.totalorder %s37, 0
      %p478 = por %p476, %p477
      %p479 = scmp.ne.s32.totalorder %s467, %s468
      %p480 = scmp.eq.s32.totalorder %s38, 1
      %p481 = por %p479, %p480
      %p483 = scmp.ne.s32.totalorder %s468, %s482
      %p484 = scmp.eq.s32.totalorder %s38, 0
      %p485 = por %p483, %p484
      %s487 = sadd.s32 %s486, 1
      %p490 = scmp.eq.s32.totalorder %s32, 1
      %p491 = scmp.ne.s32.totalorder %s486, %s488
      %p492 = scmp.eq.s32.totalorder %s32, 0
      %p493 = por %p491, %p492
      %p494 = scmp.ne.s32.totalorder %s486, %s488
      %p495 = scmp.eq.s32.totalorder %s37, 1
      %p496 = por %p494, %p495
      %p497 = scmp.ne.s32.totalorder %s488, %s489
      %p498 = scmp.eq.s32.totalorder %s37, 0
      %p499 = por %p497, %p498
      %p500 = scmp.ne.s32.totalorder %s488, %s489
      %p501 = scmp.eq.s32.totalorder %s38, 1
      %p502 = por %p500, %p501
      %p504 = scmp.ne.s32.totalorder %s489, %s503
      %p505 = scmp.eq.s32.totalorder %s38, 0
      %p506 = por %p504, %p505
      %s507 = ssub.s32 %s32, %s39
      %p508 = scmp.eq.s32.totalorder %s507, 0
      %s510 = sadd.s32 %s509, 1
      %s511 = scalar_select %p508, %s509, %s510
      %p514 = pneg %p508
      %p515 = scmp.eq.s32.totalorder %s32, 1
      %p516 = por %p514, %p515
      %p517 = scmp.ne.s32.totalorder %s509, %s512
      %p518 = scmp.eq.s32.totalorder %s32, 0
      %p519 = por %p517, %p518
      %p520 = scmp.ne.s32.totalorder %s509, %s512
      %p521 = scmp.eq.s32.totalorder %s37, 1
      %p522 = por %p520, %p521
      %p523 = scmp.ne.s32.totalorder %s512, %s513
      %p524 = scmp.eq.s32.totalorder %s37, 0
      %p525 = por %p523, %p524
      %p526 = scmp.ne.s32.totalorder %s512, %s513
      %p527 = scmp.eq.s32.totalorder %s38, 1
      %p528 = por %p526, %p527
      %p530 = scmp.ne.s32.totalorder %s513, %s529
      %p531 = scmp.eq.s32.totalorder %s38, 0
      %p532 = por %p530, %p531
      %p533 = scmp.le.s32.totalorder 1, %s32
      %p534 = scmp.lt.s32.totalorder %s32, 3
      %p535 = pnand %p533, %p534
      %p536 = pneg %p535
      // Predicated region
      $region9: #{unet_dcl_cascade.2} parent=5 // pred_check
        _
      $region10: #{unet_dcl_cascade.2} parent=5 // pred_check_branch
        %538 = sbr.rel (%p535) target = $region12
      $region11: #{unet_dcl_cascade.2} parent=5 // pred_region
        %s539 = ssub.s32 %s32, 1
        // Predicated region
        $region13: #{unet_dcl_cascade.2} parent=11 // pred_check
          %p540 = pneg %p79
        $region14: #{unet_dcl_cascade.2} parent=11 // pred_check_branch
          %542 = sbr.rel (%p540) target = $region16
        $region15: #{unet_dcl_cascade.2} parent=11 // pred_region
          _
        $region16: #{unet_dcl_cascade.2} parent=11 // pred_fallthru
          _
        // Predicated region
        $region17: #{unet_dcl_cascade.2} parent=11 // pred_check
          %p543 = pneg %p100
        $region18: #{unet_dcl_cascade.2} parent=11 // pred_check_branch
          %545 = sbr.rel (%p543) target = $region20
        $region19: #{unet_dcl_cascade.2} parent=11 // pred_region
          _
        $region20: #{unet_dcl_cascade.2} parent=11 // pred_fallthru
          _
        // Predicated region
        $region21: #{unet_dcl_cascade.2} parent=11 // pred_check
          %p546 = pneg %p121
        $region22: #{unet_dcl_cascade.2} parent=11 // pred_check_branch
          %548 = sbr.rel (%p546) target = $region24
        $region23: #{unet_dcl_cascade.2} parent=11 // pred_region
          _
        $region24: #{unet_dcl_cascade.2} parent=11 // pred_fallthru
          _
        // Predicated region
        $region25: #{unet_dcl_cascade.2} parent=11 // pred_check
          %p549 = pneg %p142
        $region26: #{unet_dcl_cascade.2} parent=11 // pred_check_branch
          %551 = sbr.rel (%p549) target = $region28
        $region27: #{unet_dcl_cascade.2} parent=11 // pred_region
          _
        $region28: #{unet_dcl_cascade.2} parent=11 // pred_fallthru
          _
        // Predicated region
        $region29: #{unet_dcl_cascade.2} parent=11 // pred_check
          %p552 = pneg %p163
        $region30: #{unet_dcl_cascade.2} parent=11 // pred_check_branch
          %554 = sbr.rel (%p552) target = $region32
        $region31: #{unet_dcl_cascade.2} parent=11 // pred_region
          _
        $region32: #{unet_dcl_cascade.2} parent=11 // pred_fallthru
          _
        // Predicated region
        $region33: #{unet_dcl_cascade.2} parent=11 // pred_check
          %p555 = pneg %p184
        $region34: #{unet_dcl_cascade.2} parent=11 // pred_check_branch
          %557 = sbr.rel (%p555) target = $region36
        $region35: #{unet_dcl_cascade.2} parent=11 // pred_region
          _
        $region36: #{unet_dcl_cascade.2} parent=11 // pred_fallthru
          _
        // Predicated region
        $region37: #{unet_dcl_cascade.2} parent=11 // pred_check
          %p558 = pneg %p205
        $region38: #{unet_dcl_cascade.2} parent=11 // pred_check_branch
          %560 = sbr.rel (%p558) target = $region40
        $region39: #{unet_dcl_cascade.2} parent=11 // pred_region
          _
        $region40: #{unet_dcl_cascade.2} parent=11 // pred_fallthru
          _
        // Predicated region
        $region41: #{unet_dcl_cascade.2} parent=11 // pred_check
          %p561 = pneg %p226
        $region42: #{unet_dcl_cascade.2} parent=11 // pred_check_branch
          %563 = sbr.rel (%p561) target = $region44
        $region43: #{unet_dcl_cascade.2} parent=11 // pred_region
          _
        $region44: #{unet_dcl_cascade.2} parent=11 // pred_fallthru
          _
        // Predicated region
        $region45: #{unet_dcl_cascade.2} parent=11 // pred_check
          %p564 = pneg %p247
        $region46: #{unet_dcl_cascade.2} parent=11 // pred_check_branch
          %566 = sbr.rel (%p564) target = $region48
        $region47: #{unet_dcl_cascade.2} parent=11 // pred_region
          _
        $region48: #{unet_dcl_cascade.2} parent=11 // pred_fallthru
          _
        // Predicated region
        $region49: #{unet_dcl_cascade.2} parent=11 // pred_check
          %p567 = pneg %p268
        $region50: #{unet_dcl_cascade.2} parent=11 // pred_check_branch
          %569 = sbr.rel (%p567) target = $region52
        $region51: #{unet_dcl_cascade.2} parent=11 // pred_region
          _
        $region52: #{unet_dcl_cascade.2} parent=11 // pred_fallthru
          _
        // Predicated region
        $region53: #{unet_dcl_cascade.2} parent=11 // pred_check
          %p570 = pneg %p289
        $region54: #{unet_dcl_cascade.2} parent=11 // pred_check_branch
          %572 = sbr.rel (%p570) target = $region56
        $region55: #{unet_dcl_cascade.2} parent=11 // pred_region
          _
        $region56: #{unet_dcl_cascade.2} parent=11 // pred_fallthru
          _
        // Predicated region
        $region57: #{unet_dcl_cascade.2} parent=11 // pred_check
          %p573 = pneg %p310
        $region58: #{unet_dcl_cascade.2} parent=11 // pred_check_branch
          %575 = sbr.rel (%p573) target = $region60
        $region59: #{unet_dcl_cascade.2} parent=11 // pred_region
          _
        $region60: #{unet_dcl_cascade.2} parent=11 // pred_fallthru
          _
        // Predicated region
        $region61: #{unet_dcl_cascade.2} parent=11 // pred_check
          %p576 = pneg %p331
        $region62: #{unet_dcl_cascade.2} parent=11 // pred_check_branch
          %578 = sbr.rel (%p576) target = $region64
        $region63: #{unet_dcl_cascade.2} parent=11 // pred_region
          _
        $region64: #{unet_dcl_cascade.2} parent=11 // pred_fallthru
          _
        // Predicated region
        $region65: #{unet_dcl_cascade.2} parent=11 // pred_check
          %p579 = pneg %p352
        $region66: #{unet_dcl_cascade.2} parent=11 // pred_check_branch
          %581 = sbr.rel (%p579) target = $region68
        $region67: #{unet_dcl_cascade.2} parent=11 // pred_region
          _
        $region68: #{unet_dcl_cascade.2} parent=11 // pred_fallthru
          _
        // Predicated region
        $region69: #{unet_dcl_cascade.2} parent=11 // pred_check
          %p582 = pneg %p373
        $region70: #{unet_dcl_cascade.2} parent=11 // pred_check_branch
          %584 = sbr.rel (%p582) target = $region72
        $region71: #{unet_dcl_cascade.2} parent=11 // pred_region
          _
        $region72: #{unet_dcl_cascade.2} parent=11 // pred_fallthru
          _
        // Predicated region
        $region73: #{unet_dcl_cascade.2} parent=11 // pred_check
          %p585 = pneg %p394
        $region74: #{unet_dcl_cascade.2} parent=11 // pred_check_branch
          %587 = sbr.rel (%p585) target = $region76
        $region75: #{unet_dcl_cascade.2} parent=11 // pred_region
          %s589 = ssub.s32 256, 256
          %590 = vsyncadd [#allocation4], %s589
          %s591 = sshll.u32 [#allocation3], 4
          %s592 = int_to_ptr.vmem [resolvable:$true] %s591
          %597 = dma.hbm_to_vmem [thread:$0]  %s16, 256, %s592, [#allocation4], 128, 128, 8
        $region76: #{unet_dcl_cascade.2} parent=11 // pred_fallthru
          _
        // Predicated region
        $region77: #{unet_dcl_cascade.2} parent=11 // pred_check
          %p598 = pneg %p415
        $region78: #{unet_dcl_cascade.2} parent=11 // pred_check_branch
          %600 = sbr.rel (%p598) target = $region80
        $region79: #{unet_dcl_cascade.2} parent=11 // pred_region
          %s602 = ssub.s32 256, 256
          %603 = vsyncadd [#allocation6], %s602
          %s604 = sshll.u32 [#allocation5], 4
          %s605 = int_to_ptr.vmem [resolvable:$true] %s604
          %610 = dma.hbm_to_vmem [thread:$0]  %s17, 256, %s605, [#allocation6], 128, 128, 8
        $region80: #{unet_dcl_cascade.2} parent=11 // pred_fallthru
          _
        // Predicated region
        $region81: #{unet_dcl_cascade.2} parent=11 // pred_check
          %p611 = pneg %p436
        $region82: #{unet_dcl_cascade.2} parent=11 // pred_check_branch
          %613 = sbr.rel (%p611) target = $region84
        $region83: #{unet_dcl_cascade.2} parent=11 // pred_region
          _
        $region84: #{unet_dcl_cascade.2} parent=11 // pred_fallthru
          _
        // Predicated region
        $region85: #{unet_dcl_cascade.2} parent=11 // pred_check
          %p614 = pneg %p457
        $region86: #{unet_dcl_cascade.2} parent=11 // pred_check_branch
          %616 = sbr.rel (%p614) target = $region88
        $region87: #{unet_dcl_cascade.2} parent=11 // pred_region
          _
        $region88: #{unet_dcl_cascade.2} parent=11 // pred_fallthru
          _
        // Predicated region
        $region89: #{unet_dcl_cascade.2} parent=11 // pred_check
          %p617 = pneg %p478
        $region90: #{unet_dcl_cascade.2} parent=11 // pred_check_branch
          %619 = sbr.rel (%p617) target = $region92
        $region91: #{unet_dcl_cascade.2} parent=11 // pred_region
          _
        $region92: #{unet_dcl_cascade.2} parent=11 // pred_fallthru
          _
        // Predicated region
        $region93: #{unet_dcl_cascade.2} parent=11 // pred_check
          %p620 = pneg %p499
        $region94: #{unet_dcl_cascade.2} parent=11 // pred_check_branch
          %622 = sbr.rel (%p620) target = $region96
        $region95: #{unet_dcl_cascade.2} parent=11 // pred_region
          _
        $region96: #{unet_dcl_cascade.2} parent=11 // pred_fallthru
          _
      $region12: #{unet_dcl_cascade.2} parent=5 // pred_fallthru
        _
      %p623 = scmp.lt.s32.totalorder %s32, 2
      // Predicated region
      $region97: #{unet_dcl_cascade.2} parent=5 // pred_check
        %p624 = pneg %p623
      $region98: #{unet_dcl_cascade.2} parent=5 // pred_check_branch
        %626 = sbr.rel (%p624) target = $region100
      $region99: #{unet_dcl_cascade.2} parent=5 // pred_region
        // Predicated region
        $region101: #{unet_dcl_cascade.2} parent=99 // pred_check
          %p627 = pneg %p52
        $region102: #{unet_dcl_cascade.2} parent=99 // pred_check_branch
          %629 = sbr.rel (%p627) target = $region104
        $region103: #{unet_dcl_cascade.2} parent=99 // pred_region
          %p630 = scmp.lt.s32.totalorder %s32, 1
          %s631 = scalar_select %p630, %s32, 1
          %s632 = smul.addr %s631, 2
          %s633 = scalar_lea.vmem %s0, %s632
        $region104: #{unet_dcl_cascade.2} parent=99 // pred_fallthru
          _
      $region100: #{unet_dcl_cascade.2} parent=5 // pred_fallthru
        _
      %p634 = scmp.le.s32.totalorder 1, %s32
      %p635 = scmp.lt.s32.totalorder %s32, 3
      %p636 = pnand %p634, %p635
      %p637 = pneg %p636
      // Predicated region
      $region105: #{unet_dcl_cascade.2} parent=5 // pred_check
        _
      $region106: #{unet_dcl_cascade.2} parent=5 // pred_check_branch
        %639 = sbr.rel (%p636) target = $region108
      $region107: #{unet_dcl_cascade.2} parent=5 // pred_region
        %s640 = ssub.s32 %s32, 1
        // Predicated region
        $region109: #{unet_dcl_cascade.2} parent=107 // pred_check
          %p641 = pneg %p394
        $region110: #{unet_dcl_cascade.2} parent=107 // pred_check_branch
          %643 = sbr.rel (%p641) target = $region112
        $region111: #{unet_dcl_cascade.2} parent=107 // pred_region
          %644 = dma.done [#allocation4], 256
        $region112: #{unet_dcl_cascade.2} parent=107 // pred_fallthru
          _
        // Predicated region
        $region113: #{unet_dcl_cascade.2} parent=107 // pred_check
          %p645 = pneg %p415
        $region114: #{unet_dcl_cascade.2} parent=107 // pred_check_branch
          %647 = sbr.rel (%p645) target = $region116
        $region115: #{unet_dcl_cascade.2} parent=107 // pred_region
          %648 = dma.done [#allocation6], 256
        $region116: #{unet_dcl_cascade.2} parent=107 // pred_fallthru
          _
        %p649 = scmp.lt.s32.totalorder %s37, 1
        %s650 = scalar_select %p649, %s37, 1
        %s651 = smul.addr %s650, 2
        %s652 = scalar_lea.vmem %s0, %s651
        %p653 = pneg %p58
        %p654 = pneg %p55
        %p655 = pneg %p79
        %p656 = pneg %p76
        %p657 = pneg %p100
        %p658 = pneg %p97
        %p659 = pneg %p121
        %p660 = pneg %p118
        %p661 = pneg %p142
        %p662 = pneg %p139
        %p663 = pneg %p163
        %p664 = pneg %p160
        %p665 = pneg %p184
        %p666 = pneg %p181
        %p667 = pneg %p205
        %p668 = pneg %p202
        %p669 = pneg %p226
        %p670 = pneg %p223
        %p671 = pneg %p247
        %p672 = pneg %p244
        %p673 = pneg %p268
        %p674 = pneg %p265
        %p675 = pneg %p289
        %p676 = pneg %p286
        %p677 = pneg %p310
        %p678 = pneg %p307
        %p679 = pneg %p331
        %p680 = pneg %p328
        %p681 = pneg %p352
        %p682 = pneg %p349
        %p683 = pneg %p373
        %p684 = pneg %p370
        %p685 = pneg %p394
        %p686 = pneg %p391
        %p687 = pneg %p415
        %p688 = pneg %p412
        %p689 = pneg %p436
        %p690 = pneg %p433
        %p691 = pneg %p457
        %p692 = pneg %p454
        %p693 = pneg %p478
        %p694 = pneg %p475
        %p695 = pneg %p499
        %p696 = pneg %p496
        %p697 = pneg %p525
        %p698 = pneg %p522
        %p699 = scmp.lt.s32.totalorder %s37, 1
        %s700 = scalar_select %p699, %s37, 1
        %s701 = smul.addr %s700, 2
        %s702 = scalar_lea.vmem %s22, %s701
        %p703 = scmp.lt.s32.totalorder %s37, 1
        %s704 = scalar_select %p703, %s37, 1
        %s705 = smul.addr %s704, 2
        %s706 = scalar_lea.vmem %s0, %s705
        %p707 = scmp.lt.s32.totalorder %s37, 1
        %s708 = scalar_select %p707, %s37, 1
        %s709 = smul.addr %s708, 2
        %s710 = scalar_lea.vmem %s22, %s709
        %v711 = vld [vmem:[%s706] sm:$0x3]
        %v713 = vlaneseq
        %v714 = vshrl.u32 %v713, 7
        %v715 = vsub.s32 1, %v714
        %v716 = vrot.slane %v711, %v715
        %717 = vrot.lane.b32.xlu0 %v716, 17
        %v718 = vpop.permute.xlu0 %717
        %v720 = vlaneseq
        %v721 = vshrl.u32 %v720, 7
        %v722 = vsub.s32 0, %v721
        %v723 = vrot.slane %v711, %v722
        %724 = vrot.lane.b32.xlu0 %v723, 17
        %v725 = vpop.permute.xlu0 %724
        %vm726 = vcmask 138240
        %v727 = vsel %vm726, %v725, %v718
        %v730 = vsel %vm726, %v718, %v725
        %v731 = vld [vmem:[%s15] ss:$8 sm:$0x3]
        %v733 = vlaneseq
        %v734 = vshrl.u32 %v733, 7
        %v735 = vsub.s32 0, %v734
        %v736 = vrot.slane %v731, %v735
        %v737 = vlaneseq
        %v738 = vshrl.u32 %v737, 7
        %v739 = vsub.s32 1, %v738
        %v740 = vrot.slane %v731, %v739
        %v743 = vmul.f32 %v730, %v736
        %v744 = vmul.f32 %v727, %v740
        %745 = vrot.lane.b32.xlu0 %v716, 16
        %v746 = vpop.permute.xlu0 %745
        %748 = vrot.lane.b32.xlu0 %v723, 16
        %v749 = vpop.permute.xlu0 %748
        %vm750 = vcmask 130048
        %v751 = vsel %vm750, %v749, %v746
        %v754 = vsel %vm750, %v746, %v749
        %s755 = scalar_lea.vmem %s15, 1
        %v756 = vld [vmem:[%s755] ss:$8 sm:$0x3]
        %v758 = vlaneseq
        %v759 = vshrl.u32 %v758, 7
        %v760 = vsub.s32 0, %v759
        %v761 = vrot.slane %v756, %v760
        %v762 = vlaneseq
        %v763 = vshrl.u32 %v762, 7
        %v764 = vsub.s32 1, %v763
        %v765 = vrot.slane %v756, %v764
        %v768 = vmul.f32 %v754, %v761
        %v769 = vmul.f32 %v751, %v765
        %770 = vrot.lane.b32.xlu0 %v716, 15
        %v771 = vpop.permute.xlu0 %770
        %773 = vrot.lane.b32.xlu0 %v723, 15
        %v774 = vpop.permute.xlu0 %773
        %vm775 = vcmask 121856
        %v776 = vsel %vm775, %v774, %v771
        %v779 = vsel %vm775, %v771, %v774
        %s780 = scalar_lea.vmem %s15, 2
        %v781 = vld [vmem:[%s780] ss:$8 sm:$0x3]
        %v783 = vlaneseq
        %v784 = vshrl.u32 %v783, 7
        %v785 = vsub.s32 0, %v784
        %v786 = vrot.slane %v781, %v785
        %v787 = vlaneseq
        %v788 = vshrl.u32 %v787, 7
        %v789 = vsub.s32 1, %v788
        %v790 = vrot.slane %v781, %v789
        %v793 = vmul.f32 %v779, %v786
        %v794 = vmul.f32 %v776, %v790
        %795 = vrot.lane.b32.xlu0 %v716, 1
        %v796 = vpop.permute.xlu0 %795
        %798 = vrot.lane.b32.xlu0 %v723, 1
        %v799 = vpop.permute.xlu0 %798
        %vm800 = vcmask 7168
        %v801 = vsel %vm800, %v799, %v796
        %v804 = vsel %vm800, %v796, %v799
        %s805 = scalar_lea.vmem %s15, 3
        %v806 = vld [vmem:[%s805] ss:$8 sm:$0x3]
        %v808 = vlaneseq
        %v809 = vshrl.u32 %v808, 7
        %v810 = vsub.s32 0, %v809
        %v811 = vrot.slane %v806, %v810
        %v812 = vlaneseq
        %v813 = vshrl.u32 %v812, 7
        %v814 = vsub.s32 1, %v813
        %v815 = vrot.slane %v806, %v814
        %v818 = vmul.f32 %v804, %v811
        %v819 = vmul.f32 %v801, %v815
        %820 = vrot.lane.b32.xlu0 %v723, 127
        %v821 = vpop.permute.xlu0 %820
        %822 = vrot.lane.b32.xlu0 %v716, 127
        %v823 = vpop.permute.xlu0 %822
        %vm824 = vcmask 1039360
        %v825 = vsel %vm824, %v821, %v823
        %v829 = vsel %vm824, %v823, %v821
        %s830 = scalar_lea.vmem %s15, 5
        %v831 = vld [vmem:[%s830] ss:$8 sm:$0x3]
        %v833 = vlaneseq
        %v834 = vshrl.u32 %v833, 7
        %v835 = vsub.s32 0, %v834
        %v836 = vrot.slane %v831, %v835
        %v837 = vlaneseq
        %v838 = vshrl.u32 %v837, 7
        %v839 = vsub.s32 1, %v838
        %v840 = vrot.slane %v831, %v839
        %v843 = vmul.f32 %v825, %v836
        %v844 = vmul.f32 %v829, %v840
        %845 = vrot.lane.b32.xlu0 %v723, 113
        %v846 = vpop.permute.xlu0 %845
        %847 = vrot.lane.b32.xlu0 %v716, 113
        %v848 = vpop.permute.xlu0 %847
        %vm849 = vcmask 924672
        %v850 = vsel %vm849, %v846, %v848
        %v854 = vsel %vm849, %v848, %v846
        %s855 = scalar_lea.vmem %s15, 6
        %v856 = vld [vmem:[%s855] ss:$8 sm:$0x3]
        %v858 = vlaneseq
        %v859 = vshrl.u32 %v858, 7
        %v860 = vsub.s32 0, %v859
        %v861 = vrot.slane %v856, %v860
        %v862 = vlaneseq
        %v863 = vshrl.u32 %v862, 7
        %v864 = vsub.s32 1, %v863
        %v865 = vrot.slane %v856, %v864
        %v868 = vmul.f32 %v850, %v861
        %v869 = vmul.f32 %v854, %v865
        %870 = vrot.lane.b32.xlu0 %v723, 112
        %v871 = vpop.permute.xlu0 %870
        %872 = vrot.lane.b32.xlu0 %v716, 112
        %v873 = vpop.permute.xlu0 %872
        %vm874 = vcmask 916480
        %v875 = vsel %vm874, %v871, %v873
        %v879 = vsel %vm874, %v873, %v871
        %s880 = scalar_lea.vmem %s15, 7
        %v881 = vld [vmem:[%s880] ss:$8 sm:$0x3]
        %v883 = vlaneseq
        %v884 = vshrl.u32 %v883, 7
        %v885 = vsub.s32 0, %v884
        %v886 = vrot.slane %v881, %v885
        %v887 = vlaneseq
        %v888 = vshrl.u32 %v887, 7
        %v889 = vsub.s32 1, %v888
        %v890 = vrot.slane %v881, %v889
        %v893 = vmul.f32 %v875, %v886
        %v894 = vmul.f32 %v879, %v890
        %895 = vrot.lane.b32.xlu0 %v723, 111
        %v896 = vpop.permute.xlu0 %895
        %897 = vrot.lane.b32.xlu0 %v716, 111
        %v898 = vpop.permute.xlu0 %897
        %vm899 = vcmask 908288
        %v900 = vsel %vm899, %v896, %v898
        %v904 = vsel %vm899, %v898, %v896
        %s905 = scalar_lea.vmem %s15, 16
        %v906 = vld [vmem:[%s905] ss:$8 sm:$0x3]
        %v908 = vlaneseq
        %v909 = vshrl.u32 %v908, 7
        %v910 = vsub.s32 0, %v909
        %v911 = vrot.slane %v906, %v910
        %v912 = vlaneseq
        %v913 = vshrl.u32 %v912, 7
        %v914 = vsub.s32 1, %v913
        %v915 = vrot.slane %v906, %v914
        %v918 = vmul.f32 %v900, %v911
        %v919 = vmul.f32 %v904, %v915
        %v922 = vrot.slane %v768, 7
        %v923 = vrot.slane %v769, 7
        %v928 = vrot.slane %v793, 6
        %v929 = vrot.slane %v794, 6
        %v934 = vrot.slane %v818, 5
        %v935 = vrot.slane %v819, 5
        %v942 = vrot.slane %v843, 3
        %v943 = vrot.slane %v844, 3
        %v948 = vrot.slane %v868, 2
        %v949 = vrot.slane %v869, 2
        %v954 = vrot.slane %v893, 1
        %v955 = vrot.slane %v894, 1
        %vm958 = vcmask 1040384
        %v959 = vsel %vm958, %v743, %v922
        %v960 = vsel %vm958, %v744, %v923
        %vm961 = vcmask 1041408
        %v962 = vsel %vm961, %v959, %v928
        %v963 = vsel %vm961, %v960, %v929
        %vm964 = vcmask 1042432
        %v965 = vsel %vm964, %v962, %v934
        %v966 = vsel %vm964, %v963, %v935
        %vm967 = vcmask 1043456
        %v968 = vsel %vm967, %v965, %v723
        %v969 = vsel %vm967, %v966, %v716
        %vm970 = vcmask 1044480
        %v971 = vsel %vm970, %v968, %v942
        %v972 = vsel %vm970, %v969, %v943
        %vm973 = vcmask 1045504
        %v974 = vsel %vm973, %v971, %v948
        %v975 = vsel %vm973, %v972, %v949
        %vm976 = vcmask 1046528
        %v977 = vsel %vm976, %v974, %v954
        %v978 = vsel %vm976, %v975, %v955
        %v979 = vld [vmem:[%s1] sm:$0xf]
        %vm980 = vcmask 72704
        %v982 = vsel %vm980, %v979, 0
        %v985 = vsel %vm958, %v918, 0
        %v988 = vsel %vm958, %v919, 0
        %990 = vmatprep.subr.mxu0 0.0
        %991 = vmatpush1.msra.mxu0 0.0
        %992 = vmatprep.subr.mxu0 0.0
        %993 = vmatpush1.msra.mxu0 0.0
        %994 = vmatprep.subr.mxu0 0.0
        %995 = vmatpush1.msra.mxu0 0.0
        %996 = vmatprep.subr.mxu0 0.0
        %997 = vmatpush1.msra.mxu0 0.0
        %998 = vmatprep.subr.mxu0 0.0
        %999 = vmatpush1.msra.mxu0 0.0
        %1000 = vmatprep.subr.mxu0 0.0
        %1001 = vmatpush1.msra.mxu0 0.0
        %1002 = vmatprep.subr.mxu0 0.0
        %1003 = vmatpush1.msra.mxu0 0.0
        %1004 = vmatprep.subr.mxu0 0.0
        %1005 = vmatpush1.msra.mxu0 0.0
        %1006 = vmatprep.subr.mxu0 0.0
        %1007 = vmatpush1.msra.mxu0 0.0
        %1008 = vmatprep.subr.mxu0 0.0
        %1009 = vmatpush1.msra.mxu0 0.0
        %1010 = vmatprep.subr.mxu0 0.0
        %1011 = vmatpush1.msra.mxu0 0.0
        %1012 = vmatprep.subr.mxu0 0.0
        %1013 = vmatpush1.msra.mxu0 0.0
        %1014 = vmatprep.subr.mxu0 0.0
        %1015 = vmatpush1.msra.mxu0 0.0
        %1016 = vmatprep.subr.mxu0 0.0
        %1017 = vmatpush1.msra.mxu0 0.0
        %1018 = vmatprep.subr.mxu0 %v988
        %1019 = vmatpush1.msra.mxu0 %v985
        %1020 = vmatprep.subr.mxu0 %v978
        %1021 = vmatpush1.msra.mxu0 %v977
        %1022 = vmatprep.subr.mxu0 0.0
        %1023 = vmatpush2.msra.mxu0 0.0
        %1024 = vmatprep.subr.mxu0 0.0
        %1025 = vmatpush2.msra.mxu0 0.0
        %1026 = vmatprep.subr.mxu0 0.0
        %1027 = vmatpush2.msra.mxu0 0.0
        %1028 = vmatprep.subr.mxu0 0.0
        %1029 = vmatpush2.msra.mxu0 0.0
        %1030 = vmatprep.subr.mxu0 0.0
        %1031 = vmatpush2.msra.mxu0 0.0
        %1032 = vmatprep.subr.mxu0 0.0
        %1033 = vmatpush2.msra.mxu0 0.0
        %1034 = vmatprep.subr.mxu0 0.0
        %1035 = vmatpush2.msra.mxu0 0.0
        %1036 = vmatprep.subr.mxu0 0.0
        %1037 = vmatpush2.msra.mxu0 0.0
        %1038 = vmatprep.subr.mxu0 0.0
        %1039 = vmatpush2.msra.mxu0 0.0
        %1040 = vmatprep.subr.mxu0 0.0
        %1041 = vmatpush2.msra.mxu0 0.0
        %1042 = vmatprep.subr.mxu0 0.0
        %1043 = vmatpush2.msra.mxu0 0.0
        %1044 = vmatprep.subr.mxu0 0.0
        %1045 = vmatpush2.msra.mxu0 0.0
        %1046 = vmatprep.subr.mxu0 0.0
        %1047 = vmatpush2.msra.mxu0 0.0
        %1048 = vmatprep.subr.mxu0 0.0
        %1049 = vmatpush2.msra.mxu0 0.0
        %1050 = vmatprep.subr.mxu0 0.0
        %1051 = vmatpush2.msra.mxu0 0.0
        %1052 = vmatprep.subr.mxu0 0.0
        %1053 = vmatpush2.msra.mxu0 0.0
        %1054 = vmatprep.mubr.f32.mxu0 0.0
        %1055 = vmatmul.mubr.f32.gmra.mxu0 %v982
        %v1056 = vpop.f32.mrf.mxu0
        %v1057 = vadd.f32 0.0, %v1056
        %v1058 = vpop.f32.mrf.mxu0
        %v1059 = vadd.f32 0.0, %v1058
        %1060 = vdwg.mxu0
        %v1061 = vsel %vm967, %v1057, 0.0
        %v1062 = vsel %vm967, %v1059, 0.0
        %v1063 = vadd.f32 %v1061, %v1062
        %1064 = vadd.xlane.f32.xlu0 %v1063
        %v1065 = vpop.xlane.xlu0 %1064
        %v1066 = vmul.f32 %v1065, 0.00390625
        %v1067 = vsub.f32 %v1057, %v1066
        %v1068 = vsub.f32 %v1059, %v1066
        %v1069 = vmul.f32 %v1067, %v1067
        %v1070 = vmul.f32 %v1068, %v1068
        %v1071 = vsel %vm967, %v1069, 0.0
        %v1072 = vsel %vm967, %v1070, 0.0
        %v1073 = vadd.f32 %v1071, %v1072
        %1074 = vadd.xlane.f32.xlu0 %v1073
        %v1075 = vpop.xlane.xlu0 %1074
        %v1076 = vmul.f32 %v1075, 0.00390625
        %v1077 = vadd.f32 %v1076, 1e-05
        %v1078 = vrsqrt.pop %v1077
        %v1079 = vmul.f32 %v1067, %v1078
        %v1080 = vmul.f32 %v1068, %v1078
        %vm1081 = vcmp.ge.f32.partialorder %v1079, 0.0
        %vm1082 = vcmp.ge.f32.partialorder %v1080, 0.0
        %v1083 = vmul.f32 %v1079, 0.2
        %v1084 = vmul.f32 %v1080, 0.2
        %v1085 = vsel %vm1081, %v1079, %v1083
        %v1086 = vsel %vm1082, %v1080, %v1084
        %1088 = vrot.lane.b32.xlu0 %v1086, 17
        %v1089 = vpop.permute.xlu0 %1088
        %1092 = vrot.lane.b32.xlu0 %v1085, 17
        %v1093 = vpop.permute.xlu0 %1092
        %v1094 = vsel %vm726, %v1093, %v1089
        %v1097 = vsel %vm726, %v1089, %v1093
        %v1098 = vmul.f32 %v1097, %v736
        %v1099 = vmul.f32 %v1094, %v740
        %1100 = vrot.lane.b32.xlu0 %v1086, 16
        %v1101 = vpop.permute.xlu0 %1100
        %1103 = vrot.lane.b32.xlu0 %v1085, 16
        %v1104 = vpop.permute.xlu0 %1103
        %v1105 = vsel %vm750, %v1104, %v1101
        %v1108 = vsel %vm750, %v1101, %v1104
        %v1109 = vmul.f32 %v1108, %v761
        %v1110 = vmul.f32 %v1105, %v765
        %1111 = vrot.lane.b32.xlu0 %v1086, 15
        %v1112 = vpop.permute.xlu0 %1111
        %1114 = vrot.lane.b32.xlu0 %v1085, 15
        %v1115 = vpop.permute.xlu0 %1114
        %v1116 = vsel %vm775, %v1115, %v1112
        %v1119 = vsel %vm775, %v1112, %v1115
        %v1120 = vmul.f32 %v1119, %v786
        %v1121 = vmul.f32 %v1116, %v790
        %1122 = vrot.lane.b32.xlu0 %v1086, 1
        %v1123 = vpop.permute.xlu0 %1122
        %1125 = vrot.lane.b32.xlu0 %v1085, 1
        %v1126 = vpop.permute.xlu0 %1125
        %v1127 = vsel %vm800, %v1126, %v1123
        %v1130 = vsel %vm800, %v1123, %v1126
        %v1131 = vmul.f32 %v1130, %v811
        %v1132 = vmul.f32 %v1127, %v815
        %1133 = vrot.lane.b32.xlu0 %v1085, 127
        %v1134 = vpop.permute.xlu0 %1133
        %1135 = vrot.lane.b32.xlu0 %v1086, 127
        %v1136 = vpop.permute.xlu0 %1135
        %v1137 = vsel %vm824, %v1134, %v1136
        %v1141 = vsel %vm824, %v1136, %v1134
        %v1142 = vmul.f32 %v1137, %v836
        %v1143 = vmul.f32 %v1141, %v840
        %1144 = vrot.lane.b32.xlu0 %v1085, 113
        %v1145 = vpop.permute.xlu0 %1144
        %1146 = vrot.lane.b32.xlu0 %v1086, 113
        %v1147 = vpop.permute.xlu0 %1146
        %v1148 = vsel %vm849, %v1145, %v1147
        %v1152 = vsel %vm849, %v1147, %v1145
        %v1153 = vmul.f32 %v1148, %v861
        %v1154 = vmul.f32 %v1152, %v865
        %1155 = vrot.lane.b32.xlu0 %v1085, 112
        %v1156 = vpop.permute.xlu0 %1155
        %1157 = vrot.lane.b32.xlu0 %v1086, 112
        %v1158 = vpop.permute.xlu0 %1157
        %v1159 = vsel %vm874, %v1156, %v1158
        %v1163 = vsel %vm874, %v1158, %v1156
        %v1164 = vmul.f32 %v1159, %v886
        %v1165 = vmul.f32 %v1163, %v890
        %1166 = vrot.lane.b32.xlu0 %v1085, 111
        %v1167 = vpop.permute.xlu0 %1166
        %1168 = vrot.lane.b32.xlu0 %v1086, 111
        %v1169 = vpop.permute.xlu0 %1168
        %v1170 = vsel %vm899, %v1167, %v1169
        %v1174 = vsel %vm899, %v1169, %v1167
        %v1175 = vmul.f32 %v1170, %v911
        %v1176 = vmul.f32 %v1174, %v915
        %v1179 = vrot.slane %v1109, 4
        %v1180 = vrot.slane %v1110, 4
        %v1185 = vrot.slane %v1131, 4
        %v1186 = vrot.slane %v1132, 4
        %v1191 = vrot.slane %v1142, 4
        %v1192 = vrot.slane %v1143, 4
        %v1197 = vrot.slane %v1164, 4
        %v1198 = vrot.slane %v1165, 4
        %v1201 = vsel %vm967, %v1098, %v1179
        %v1202 = vsel %vm967, %v1099, %v1180
        %v1203 = vsel %vm967, %v1120, %v1185
        %v1204 = vsel %vm967, %v1121, %v1186
        %v1205 = vsel %vm967, %v1085, %v1191
        %v1206 = vsel %vm967, %v1086, %v1192
        %v1207 = vsel %vm967, %v1153, %v1197
        %v1208 = vsel %vm967, %v1154, %v1198
        %v1209 = vld [vmem:[%s2] sm:$0xf]
        %vm1210 = vcmask 293888
        %v1212 = vsel %vm1210, %v1209, 0
        %v1215 = vsel %vm967, %v1175, 0
        %v1218 = vsel %vm967, %v1176, 0
        %1220 = vmatprep.subr.mxu0 0.0
        %1221 = vmatpush1.msra.mxu0 0.0
        %1222 = vmatprep.subr.mxu0 0.0
        %1223 = vmatpush1.msra.mxu0 0.0
        %1224 = vmatprep.subr.mxu0 0.0
        %1225 = vmatpush1.msra.mxu0 0.0
        %1226 = vmatprep.subr.mxu0 0.0
        %1227 = vmatpush1.msra.mxu0 0.0
        %1228 = vmatprep.subr.mxu0 0.0
        %1229 = vmatpush1.msra.mxu0 0.0
        %1230 = vmatprep.subr.mxu0 0.0
        %1231 = vmatpush1.msra.mxu0 0.0
        %1232 = vmatprep.subr.mxu0 0.0
        %1233 = vmatpush1.msra.mxu0 0.0
        %1234 = vmatprep.subr.mxu0 0.0
        %1235 = vmatpush1.msra.mxu0 0.0
        %1236 = vmatprep.subr.mxu0 0.0
        %1237 = vmatpush1.msra.mxu0 0.0
        %1238 = vmatprep.subr.mxu0 0.0
        %1239 = vmatpush1.msra.mxu0 0.0
        %1240 = vmatprep.subr.mxu0 0.0
        %1241 = vmatpush1.msra.mxu0 0.0
        %1242 = vmatprep.subr.mxu0 %v1218
        %1243 = vmatpush1.msra.mxu0 %v1215
        %1244 = vmatprep.subr.mxu0 %v1208
        %1245 = vmatpush1.msra.mxu0 %v1207
        %1246 = vmatprep.subr.mxu0 %v1206
        %1247 = vmatpush1.msra.mxu0 %v1205
        %1248 = vmatprep.subr.mxu0 %v1204
        %1249 = vmatpush1.msra.mxu0 %v1203
        %1250 = vmatprep.subr.mxu0 %v1202
        %1251 = vmatpush1.msra.mxu0 %v1201
        %1252 = vmatprep.subr.mxu0 0.0
        %1253 = vmatpush2.msra.mxu0 0.0
        %1254 = vmatprep.subr.mxu0 0.0
        %1255 = vmatpush2.msra.mxu0 0.0
        %1256 = vmatprep.subr.mxu0 0.0
        %1257 = vmatpush2.msra.mxu0 0.0
        %1258 = vmatprep.subr.mxu0 0.0
        %1259 = vmatpush2.msra.mxu0 0.0
        %1260 = vmatprep.subr.mxu0 0.0
        %1261 = vmatpush2.msra.mxu0 0.0
        %1262 = vmatprep.subr.mxu0 0.0
        %1263 = vmatpush2.msra.mxu0 0.0
        %1264 = vmatprep.subr.mxu0 0.0
        %1265 = vmatpush2.msra.mxu0 0.0
        %1266 = vmatprep.subr.mxu0 0.0
        %1267 = vmatpush2.msra.mxu0 0.0
        %1268 = vmatprep.subr.mxu0 0.0
        %1269 = vmatpush2.msra.mxu0 0.0
        %1270 = vmatprep.subr.mxu0 0.0
        %1271 = vmatpush2.msra.mxu0 0.0
        %1272 = vmatprep.subr.mxu0 0.0
        %1273 = vmatpush2.msra.mxu0 0.0
        %1274 = vmatprep.subr.mxu0 0.0
        %1275 = vmatpush2.msra.mxu0 0.0
        %1276 = vmatprep.subr.mxu0 0.0
        %1277 = vmatpush2.msra.mxu0 0.0
        %1278 = vmatprep.subr.mxu0 0.0
        %1279 = vmatpush2.msra.mxu0 0.0
        %1280 = vmatprep.subr.mxu0 0.0
        %1281 = vmatpush2.msra.mxu0 0.0
        %1282 = vmatprep.subr.mxu0 0.0
        %1283 = vmatpush2.msra.mxu0 0.0
        %1284 = vmatprep.mubr.f32.mxu0 0.0
        %1285 = vmatmul.mubr.f32.gmra.mxu0 %v1212
        %v1286 = vpop.f32.mrf.mxu0
        %v1287 = vadd.f32 0.0, %v1286
        %v1288 = vpop.f32.mrf.mxu0
        %v1289 = vadd.f32 0.0, %v1288
        %1290 = vdwg.mxu0
        %v1291 = vsel %vm967, %v1287, 0.0
        %v1292 = vsel %vm967, %v1289, 0.0
        %v1293 = vadd.f32 %v1291, %v1292
        %1294 = vadd.xlane.f32.xlu0 %v1293
        %v1295 = vpop.xlane.xlu0 %1294
        %v1296 = vmul.f32 %v1295, 0.00390625
        %v1297 = vsub.f32 %v1287, %v1296
        %v1298 = vsub.f32 %v1289, %v1296
        %v1299 = vmul.f32 %v1297, %v1297
        %v1300 = vmul.f32 %v1298, %v1298
        %v1301 = vsel %vm967, %v1299, 0.0
        %v1302 = vsel %vm967, %v1300, 0.0
        %v1303 = vadd.f32 %v1301, %v1302
        %1304 = vadd.xlane.f32.xlu0 %v1303
        %v1305 = vpop.xlane.xlu0 %1304
        %v1306 = vmul.f32 %v1305, 0.00390625
        %v1307 = vadd.f32 %v1306, 1e-05
        %v1308 = vrsqrt.pop %v1307
        %v1309 = vmul.f32 %v1297, %v1308
        %v1310 = vmul.f32 %v1298, %v1308
        %vm1311 = vcmp.ge.f32.partialorder %v1309, 0.0
        %vm1312 = vcmp.ge.f32.partialorder %v1310, 0.0
        %v1313 = vmul.f32 %v1309, 0.2
        %v1314 = vmul.f32 %v1310, 0.2
        %v1315 = vsel %vm1311, %v1309, %v1313
        %v1316 = vsel %vm1312, %v1310, %v1314
        %v1317 = vld [vmem:[%s18] sm:$0xff]
        %v1318 = vld [vmem:[%s18 + $0x8] sm:$0xff]
        %v1319 = vld [vmem:[%s18 + $0x10] sm:$0xff]
        %v1320 = vld [vmem:[%s18 + $0x18] sm:$0xff]
        %v1321 = vld [vmem:[%s18 + $0x20] sm:$0xff]
        %v1322 = vld [vmem:[%s18 + $0x28] sm:$0xff]
        %v1323 = vld [vmem:[%s18 + $0x30] sm:$0xff]
        %v1324 = vld [vmem:[%s18 + $0x38] sm:$0xff]
        %v1325 = vld [vmem:[%s18 + $0x40] sm:$0xff]
        %v1326 = vld [vmem:[%s18 + $0x48] sm:$0xff]
        %v1327 = vld [vmem:[%s18 + $0x50] sm:$0xff]
        %v1328 = vld [vmem:[%s18 + $0x58] sm:$0xff]
        %v1329 = vld [vmem:[%s18 + $0x60] sm:$0xff]
        %v1330 = vld [vmem:[%s18 + $0x68] sm:$0xff]
        %v1331 = vld [vmem:[%s18 + $0x70] sm:$0xff]
        %v1332 = vld [vmem:[%s18 + $0x78] sm:$0xff]
        %v1333 = vld [vmem:[%s18 + $0x80] sm:$0xff]
        %v1334 = vld [vmem:[%s18 + $0x88] sm:$0xff]
        %v1335 = vld [vmem:[%s18 + $0x90] sm:$0xff]
        %v1336 = vld [vmem:[%s18 + $0x98] sm:$0xff]
        %v1337 = vld [vmem:[%s18 + $0xa0] sm:$0xff]
        %v1338 = vld [vmem:[%s18 + $0xa8] sm:$0xff]
        %v1339 = vld [vmem:[%s18 + $0xb0] sm:$0xff]
        %v1340 = vld [vmem:[%s18 + $0xb8] sm:$0xff]
        %v1341 = vld [vmem:[%s18 + $0xc0] sm:$0xff]
        %v1342 = vld [vmem:[%s18 + $0xc8] sm:$0xff]
        %v1343 = vld [vmem:[%s18 + $0xd0] sm:$0xff]
        %v1344 = vld [vmem:[%s18 + $0xd8] sm:$0xff]
        %v1345 = vld [vmem:[%s18 + $0xe0] sm:$0xff]
        %v1346 = vld [vmem:[%s18 + $0xe8] sm:$0xff]
        %v1347 = vld [vmem:[%s18 + $0xf0] sm:$0xff]
        %v1348 = vld [vmem:[%s18 + $0xf8] sm:$0xff]
        %1349 = vmatprep.subr.mxu0 0.0
        %1350 = vmatpush1.msra.mxu0 %v1332
        %1351 = vmatprep.subr.mxu0 0.0
        %1352 = vmatpush1.msra.mxu0 %v1331
        %1353 = vmatprep.subr.mxu0 0.0
        %1354 = vmatpush1.msra.mxu0 %v1330
        %1355 = vmatprep.subr.mxu0 0.0
        %1356 = vmatpush1.msra.mxu0 %v1329
        %1357 = vmatprep.subr.mxu0 0.0
        %1358 = vmatpush1.msra.mxu0 %v1328
        %1359 = vmatprep.subr.mxu0 0.0
        %1360 = vmatpush1.msra.mxu0 %v1327
        %1361 = vmatprep.subr.mxu0 0.0
        %1362 = vmatpush1.msra.mxu0 %v1326
        %1363 = vmatprep.subr.mxu0 0.0
        %1364 = vmatpush1.msra.mxu0 %v1325
        %1365 = vmatprep.subr.mxu0 0.0
        %1366 = vmatpush1.msra.mxu0 %v1324
        %1367 = vmatprep.subr.mxu0 0.0
        %1368 = vmatpush1.msra.mxu0 %v1323
        %1369 = vmatprep.subr.mxu0 0.0
        %1370 = vmatpush1.msra.mxu0 %v1322
        %1371 = vmatprep.subr.mxu0 0.0
        %1372 = vmatpush1.msra.mxu0 %v1321
        %1373 = vmatprep.subr.mxu0 0.0
        %1374 = vmatpush1.msra.mxu0 %v1320
        %1375 = vmatprep.subr.mxu0 0.0
        %1376 = vmatpush1.msra.mxu0 %v1319
        %1377 = vmatprep.subr.mxu0 0.0
        %1378 = vmatpush1.msra.mxu0 %v1318
        %1379 = vmatprep.subr.mxu0 0.0
        %1380 = vmatpush1.msra.mxu0 %v1317
        %1381 = vmatprep.subr.mxu0 0.0
        %1382 = vmatpush2.msra.mxu0 %v1348
        %1383 = vmatprep.subr.mxu0 0.0
        %1384 = vmatpush2.msra.mxu0 %v1347
        %1385 = vmatprep.subr.mxu0 0.0
        %1386 = vmatpush2.msra.mxu0 %v1346
        %1387 = vmatprep.subr.mxu0 0.0
        %1388 = vmatpush2.msra.mxu0 %v1345
        %1389 = vmatprep.subr.mxu0 0.0
        %1390 = vmatpush2.msra.mxu0 %v1344
        %1391 = vmatprep.subr.mxu0 0.0
        %1392 = vmatpush2.msra.mxu0 %v1343
        %1393 = vmatprep.subr.mxu0 0.0
        %1394 = vmatpush2.msra.mxu0 %v1342
        %1395 = vmatprep.subr.mxu0 0.0
        %1396 = vmatpush2.msra.mxu0 %v1341
        %1397 = vmatprep.subr.mxu0 0.0
        %1398 = vmatpush2.msra.mxu0 %v1340
        %1399 = vmatprep.subr.mxu0 0.0
        %1400 = vmatpush2.msra.mxu0 %v1339
        %1401 = vmatprep.subr.mxu0 0.0
        %1402 = vmatpush2.msra.mxu0 %v1338
        %1403 = vmatprep.subr.mxu0 0.0
        %1404 = vmatpush2.msra.mxu0 %v1337
        %1405 = vmatprep.subr.mxu0 0.0
        %1406 = vmatpush2.msra.mxu0 %v1336
        %1407 = vmatprep.subr.mxu0 0.0
        %1408 = vmatpush2.msra.mxu0 %v1335
        %1409 = vmatprep.subr.mxu0 0.0
        %1410 = vmatpush2.msra.mxu0 %v1334
        %1411 = vmatprep.subr.mxu0 0.0
        %1412 = vmatpush2.msra.mxu0 %v1333
        %1413 = vmatprep.mubr.f32.mxu0 %v1316
        %1414 = vmatmul.mubr.f32.gmra.mxu0 %v1315
        %v1415 = vpop.f32.mrf.mxu0
        %v1416 = vadd.f32 0.0, %v1415
        %v1417 = vpop.f32.mrf.mxu0
        %1418 = vdwg.mxu0
        %1420 = vrot.lane.b32.xlu0 %v1416, 73
        %v1421 = vpop.permute.xlu0 %1420
        %1423 = vrot.lane.b32.xlu0 %v1416, 9
        %v1424 = vpop.permute.xlu0 %1423
        %v1426 = vsel %vm980, %v1421, %v1424
        %v1427 = vld [vmem:[#allocation3] sm:$0x1]
        %v1428 = vlaneseq
        %v1429 = vshrl.u32 %v1428, 7
        %v1430 = vsub.s32 0, %v1429
        %v1431 = vrot.slane %v1427, %v1430
        %v1432 = vmul.f32 %v1426, %v1431
        %1433 = vrot.lane.b32.xlu0 %v1416, 72
        %v1434 = vpop.permute.xlu0 %1433
        %1436 = vrot.lane.b32.xlu0 %v1416, 8
        %v1437 = vpop.permute.xlu0 %1436
        %vm1439 = vcmask 64512
        %v1440 = vsel %vm1439, %v1434, %v1437
        %v1441 = vld [vmem:[#allocation3 + $0x1] sm:$0x1]
        %v1442 = vlaneseq
        %v1443 = vshrl.u32 %v1442, 7
        %v1444 = vsub.s32 0, %v1443
        %v1445 = vrot.slane %v1441, %v1444
        %v1446 = vmul.f32 %v1440, %v1445
        %1447 = vrot.lane.b32.xlu0 %v1416, 71
        %v1448 = vpop.permute.xlu0 %1447
        %1450 = vrot.lane.b32.xlu0 %v1416, 7
        %v1451 = vpop.permute.xlu0 %1450
        %vm1453 = vcmask 56320
        %v1454 = vsel %vm1453, %v1448, %v1451
        %v1455 = vld [vmem:[#allocation3 + $0x2] sm:$0x1]
        %v1456 = vlaneseq
        %v1457 = vshrl.u32 %v1456, 7
        %v1458 = vsub.s32 0, %v1457
        %v1459 = vrot.slane %v1455, %v1458
        %v1460 = vmul.f32 %v1454, %v1459
        %1461 = vrot.lane.b32.xlu0 %v1416, 65
        %v1462 = vpop.permute.xlu0 %1461
        %1464 = vrot.lane.b32.xlu0 %v1416, 1
        %v1465 = vpop.permute.xlu0 %1464
        %v1467 = vsel %vm800, %v1462, %v1465
        %v1468 = vld [vmem:[#allocation3 + $0x3] sm:$0x1]
        %v1469 = vlaneseq
        %v1470 = vshrl.u32 %v1469, 7
        %v1471 = vsub.s32 0, %v1470
        %v1472 = vrot.slane %v1468, %v1471
        %v1473 = vmul.f32 %v1467, %v1472
        %1474 = vrot.lane.b32.xlu0 %v1416, 127
        %v1475 = vpop.permute.xlu0 %1474
        %1477 = vrot.lane.b32.xlu0 %v1416, 63
        %v1478 = vpop.permute.xlu0 %1477
        %vm1480 = vcmask 515072
        %v1481 = vsel %vm1480, %v1475, %v1478
        %v1482 = vld [vmem:[#allocation3 + $0x5] sm:$0x1]
        %v1483 = vlaneseq
        %v1484 = vshrl.u32 %v1483, 7
        %v1485 = vsub.s32 0, %v1484
        %v1486 = vrot.slane %v1482, %v1485
        %v1487 = vmul.f32 %v1481, %v1486
        %1488 = vrot.lane.b32.xlu0 %v1416, 121
        %v1489 = vpop.permute.xlu0 %1488
        %1491 = vrot.lane.b32.xlu0 %v1416, 57
        %v1492 = vpop.permute.xlu0 %1491
        %vm1494 = vcmask 465920
        %v1495 = vsel %vm1494, %v1489, %v1492
        %v1496 = vld [vmem:[#allocation3 + $0x6] sm:$0x1]
        %v1497 = vlaneseq
        %v1498 = vshrl.u32 %v1497, 7
        %v1499 = vsub.s32 0, %v1498
        %v1500 = vrot.slane %v1496, %v1499
        %v1501 = vmul.f32 %v1495, %v1500
        %1502 = vrot.lane.b32.xlu0 %v1416, 120
        %v1503 = vpop.permute.xlu0 %1502
        %1505 = vrot.lane.b32.xlu0 %v1416, 56
        %v1506 = vpop.permute.xlu0 %1505
        %vm1508 = vcmask 457728
        %v1509 = vsel %vm1508, %v1503, %v1506
        %v1510 = vld [vmem:[#allocation3 + $0x7] sm:$0x1]
        %v1511 = vlaneseq
        %v1512 = vshrl.u32 %v1511, 7
        %v1513 = vsub.s32 0, %v1512
        %v1514 = vrot.slane %v1510, %v1513
        %v1515 = vmul.f32 %v1509, %v1514
        %1516 = vrot.lane.b32.xlu0 %v1416, 119
        %v1517 = vpop.permute.xlu0 %1516
        %1519 = vrot.lane.b32.xlu0 %v1416, 55
        %v1520 = vpop.permute.xlu0 %1519
        %vm1522 = vcmask 449536
        %v1523 = vsel %vm1522, %v1517, %v1520
        %v1524 = vld [vmem:[#allocation3 + $0x8] sm:$0x1]
        %v1525 = vlaneseq
        %v1526 = vshrl.u32 %v1525, 7
        %v1527 = vsub.s32 0, %v1526
        %v1528 = vrot.slane %v1524, %v1527
        %v1529 = vmul.f32 %v1523, %v1528
        %v1531 = vrot.slane %v1446, 4
        %v1534 = vrot.slane %v1473, 4
        %v1537 = vrot.slane %v1487, 4
        %v1540 = vrot.slane %v1515, 4
        %v1542 = vsel %vm967, %v1432, %v1531
        %v1543 = vsel %vm967, %v1460, %v1534
        %v1544 = vsel %vm967, %v1416, %v1537
        %v1545 = vsel %vm967, %v1501, %v1540
        %v1546 = vld [vmem:[%s3] sm:$0xff]
        %v1548 = vsel %vm1210, %v1546, 0
        %v1551 = vsel %vm967, %v1529, 0
        %1553 = vmatprep.subr.mxu0 0.0
        %1554 = vmatpush1.msra.mxu0 0.0
        %1555 = vmatprep.subr.mxu0 0.0
        %1556 = vmatpush1.msra.mxu0 0.0
        %1557 = vmatprep.subr.mxu0 0.0
        %1558 = vmatpush1.msra.mxu0 0.0
        %1559 = vmatprep.subr.mxu0 0.0
        %1560 = vmatpush1.msra.mxu0 0.0
        %1561 = vmatprep.subr.mxu0 0.0
        %1562 = vmatpush1.msra.mxu0 0.0
        %1563 = vmatprep.subr.mxu0 0.0
        %1564 = vmatpush1.msra.mxu0 0.0
        %1565 = vmatprep.subr.mxu0 0.0
        %1566 = vmatpush1.msra.mxu0 0.0
        %1567 = vmatprep.subr.mxu0 0.0
        %1568 = vmatpush1.msra.mxu0 0.0
        %1569 = vmatprep.subr.mxu0 0.0
        %1570 = vmatpush1.msra.mxu0 0.0
        %1571 = vmatprep.subr.mxu0 0.0
        %1572 = vmatpush1.msra.mxu0 0.0
        %1573 = vmatprep.subr.mxu0 0.0
        %1574 = vmatpush1.msra.mxu0 0.0
        %1575 = vmatprep.subr.mxu0 0.0
        %1576 = vmatpush1.msra.mxu0 %v1551
        %1577 = vmatprep.subr.mxu0 0.0
        %1578 = vmatpush1.msra.mxu0 %v1545
        %1579 = vmatprep.subr.mxu0 0.0
        %1580 = vmatpush1.msra.mxu0 %v1544
        %1581 = vmatprep.subr.mxu0 0.0
        %1582 = vmatpush1.msra.mxu0 %v1543
        %1583 = vmatprep.subr.mxu0 0.0
        %1584 = vmatpush1.msra.mxu0 %v1542
        %1585 = vmatprep.subr.mxu0 0.0
        %1586 = vmatpush2.msra.mxu0 0.0
        %1587 = vmatprep.subr.mxu0 0.0
        %1588 = vmatpush2.msra.mxu0 0.0
        %1589 = vmatprep.subr.mxu0 0.0
        %1590 = vmatpush2.msra.mxu0 0.0
        %1591 = vmatprep.subr.mxu0 0.0
        %1592 = vmatpush2.msra.mxu0 0.0
        %1593 = vmatprep.subr.mxu0 0.0
        %1594 = vmatpush2.msra.mxu0 0.0
        %1595 = vmatprep.subr.mxu0 0.0
        %1596 = vmatpush2.msra.mxu0 0.0
        %1597 = vmatprep.subr.mxu0 0.0
        %1598 = vmatpush2.msra.mxu0 0.0
        %1599 = vmatprep.subr.mxu0 0.0
        %1600 = vmatpush2.msra.mxu0 0.0
        %1601 = vmatprep.subr.mxu0 0.0
        %1602 = vmatpush2.msra.mxu0 0.0
        %1603 = vmatprep.subr.mxu0 0.0
        %1604 = vmatpush2.msra.mxu0 0.0
        %1605 = vmatprep.subr.mxu0 0.0
        %1606 = vmatpush2.msra.mxu0 0.0
        %1607 = vmatprep.subr.mxu0 0.0
        %1608 = vmatpush2.msra.mxu0 0.0
        %1609 = vmatprep.subr.mxu0 0.0
        %1610 = vmatpush2.msra.mxu0 0.0
        %1611 = vmatprep.subr.mxu0 0.0
        %1612 = vmatpush2.msra.mxu0 0.0
        %1613 = vmatprep.subr.mxu0 0.0
        %1614 = vmatpush2.msra.mxu0 0.0
        %1615 = vmatprep.subr.mxu0 0.0
        %1616 = vmatpush2.msra.mxu0 0.0
        %1617 = vmatprep.mubr.f32.mxu0 0.0
        %1618 = vmatmul.mubr.f32.gmra.mxu0 %v1548
        %v1619 = vpop.f32.mrf.mxu0
        %v1620 = vadd.f32 0.0, %v1619
        %v1621 = vpop.f32.mrf.mxu0
        %1622 = vdwg.mxu0
        %vm1623 = vcmask 523264
        %v1624 = vsel %vm1623, %v1620, 0.0
        %1625 = vadd.xlane.f32.xlu0 %v1624
        %v1626 = vpop.xlane.xlu0 %1625
        %v1627 = vmul.f32 %v1626, 0.015625
        %v1628 = vsub.f32 %v1620, %v1627
        %v1629 = vmul.f32 %v1628, %v1628
        %v1630 = vsel %vm1623, %v1629, 0.0
        %1631 = vadd.xlane.f32.xlu0 %v1630
        %v1632 = vpop.xlane.xlu0 %1631
        %v1633 = vmul.f32 %v1632, 0.015625
        %v1634 = vadd.f32 %v1633, 1e-05
        %v1635 = vrsqrt.pop %v1634
        %v1636 = vmul.f32 %v1628, %v1635
        %vm1637 = vcmp.ge.f32.partialorder %v1636, 0.0
        %v1638 = vmul.f32 %v1636, 0.2
        %v1639 = vsel %vm1637, %v1636, %v1638
        %1641 = vrot.lane.b32.xlu0 %v1639, 73
        %v1642 = vpop.permute.xlu0 %1641
        %1644 = vrot.lane.b32.xlu0 %v1639, 9
        %v1645 = vpop.permute.xlu0 %1644
        %v1647 = vsel %vm980, %v1642, %v1645
        %v1648 = vmul.f32 %v1647, %v1431
        %1649 = vrot.lane.b32.xlu0 %v1639, 72
        %v1650 = vpop.permute.xlu0 %1649
        %1652 = vrot.lane.b32.xlu0 %v1639, 8
        %v1653 = vpop.permute.xlu0 %1652
        %v1655 = vsel %vm1439, %v1650, %v1653
        %v1656 = vmul.f32 %v1655, %v1445
        %1657 = vrot.lane.b32.xlu0 %v1639, 71
        %v1658 = vpop.permute.xlu0 %1657
        %1660 = vrot.lane.b32.xlu0 %v1639, 7
        %v1661 = vpop.permute.xlu0 %1660
        %v1663 = vsel %vm1453, %v1658, %v1661
        %v1664 = vmul.f32 %v1663, %v1459
        %1665 = vrot.lane.b32.xlu0 %v1639, 65
        %v1666 = vpop.permute.xlu0 %1665
        %1668 = vrot.lane.b32.xlu0 %v1639, 1
        %v1669 = vpop.permute.xlu0 %1668
        %v1671 = vsel %vm800, %v1666, %v1669
        %v1672 = vmul.f32 %v1671, %v1472
        %1673 = vrot.lane.b32.xlu0 %v1639, 127
        %v1674 = vpop.permute.xlu0 %1673
        %1676 = vrot.lane.b32.xlu0 %v1639, 63
        %v1677 = vpop.permute.xlu0 %1676
        %v1679 = vsel %vm1480, %v1674, %v1677
        %v1680 = vmul.f32 %v1679, %v1486
        %1681 = vrot.lane.b32.xlu0 %v1639, 121
        %v1682 = vpop.permute.xlu0 %1681
        %1684 = vrot.lane.b32.xlu0 %v1639, 57
        %v1685 = vpop.permute.xlu0 %1684
        %v1687 = vsel %vm1494, %v1682, %v1685
        %v1688 = vmul.f32 %v1687, %v1500
        %1689 = vrot.lane.b32.xlu0 %v1639, 120
        %v1690 = vpop.permute.xlu0 %1689
        %1692 = vrot.lane.b32.xlu0 %v1639, 56
        %v1693 = vpop.permute.xlu0 %1692
        %v1695 = vsel %vm1508, %v1690, %v1693
        %v1696 = vmul.f32 %v1695, %v1514
        %1697 = vrot.lane.b32.xlu0 %v1639, 119
        %v1698 = vpop.permute.xlu0 %1697
        %1700 = vrot.lane.b32.xlu0 %v1639, 55
        %v1701 = vpop.permute.xlu0 %1700
        %v1703 = vsel %vm1522, %v1698, %v1701
        %v1704 = vmul.f32 %v1703, %v1528
        %v1705 = vld [vmem:[%s4] sm:$0xff]
        %vm1706 = vcmask 588800
        %v1708 = vsel %vm1706, %v1705, 0
        %1710 = vmatprep.subr.mxu0 0.0
        %1711 = vmatpush1.msra.mxu0 0.0
        %1712 = vmatprep.subr.mxu0 0.0
        %1713 = vmatpush1.msra.mxu0 0.0
        %1714 = vmatprep.subr.mxu0 0.0
        %1715 = vmatpush1.msra.mxu0 0.0
        %1716 = vmatprep.subr.mxu0 0.0
        %1717 = vmatpush1.msra.mxu0 0.0
        %1718 = vmatprep.subr.mxu0 0.0
        %1719 = vmatpush1.msra.mxu0 0.0
        %1720 = vmatprep.subr.mxu0 0.0
        %1721 = vmatpush1.msra.mxu0 0.0
        %1722 = vmatprep.subr.mxu0 0.0
        %1723 = vmatpush1.msra.mxu0 0.0
        %1724 = vmatprep.subr.mxu0 0.0
        %1725 = vmatpush1.msra.mxu0 %v1704
        %1726 = vmatprep.subr.mxu0 0.0
        %1727 = vmatpush1.msra.mxu0 %v1696
        %1728 = vmatprep.subr.mxu0 0.0
        %1729 = vmatpush1.msra.mxu0 %v1688
        %1730 = vmatprep.subr.mxu0 0.0
        %1731 = vmatpush1.msra.mxu0 %v1680
        %1732 = vmatprep.subr.mxu0 0.0
        %1733 = vmatpush1.msra.mxu0 %v1639
        %1734 = vmatprep.subr.mxu0 0.0
        %1735 = vmatpush1.msra.mxu0 %v1672
        %1736 = vmatprep.subr.mxu0 0.0
        %1737 = vmatpush1.msra.mxu0 %v1664
        %1738 = vmatprep.subr.mxu0 0.0
        %1739 = vmatpush1.msra.mxu0 %v1656
        %1740 = vmatprep.subr.mxu0 0.0
        %1741 = vmatpush1.msra.mxu0 %v1648
        %1742 = vmatprep.subr.mxu0 0.0
        %1743 = vmatpush2.msra.mxu0 0.0
        %1744 = vmatprep.subr.mxu0 0.0
        %1745 = vmatpush2.msra.mxu0 0.0
        %1746 = vmatprep.subr.mxu0 0.0
        %1747 = vmatpush2.msra.mxu0 0.0
        %1748 = vmatprep.subr.mxu0 0.0
        %1749 = vmatpush2.msra.mxu0 0.0
        %1750 = vmatprep.subr.mxu0 0.0
        %1751 = vmatpush2.msra.mxu0 0.0
        %1752 = vmatprep.subr.mxu0 0.0
        %1753 = vmatpush2.msra.mxu0 0.0
        %1754 = vmatprep.subr.mxu0 0.0
        %1755 = vmatpush2.msra.mxu0 0.0
        %1756 = vmatprep.subr.mxu0 0.0
        %1757 = vmatpush2.msra.mxu0 0.0
        %1758 = vmatprep.subr.mxu0 0.0
        %1759 = vmatpush2.msra.mxu0 0.0
        %1760 = vmatprep.subr.mxu0 0.0
        %1761 = vmatpush2.msra.mxu0 0.0
        %1762 = vmatprep.subr.mxu0 0.0
        %1763 = vmatpush2.msra.mxu0 0.0
        %1764 = vmatprep.subr.mxu0 0.0
        %1765 = vmatpush2.msra.mxu0 0.0
        %1766 = vmatprep.subr.mxu0 0.0
        %1767 = vmatpush2.msra.mxu0 0.0
        %1768 = vmatprep.subr.mxu0 0.0
        %1769 = vmatpush2.msra.mxu0 0.0
        %1770 = vmatprep.subr.mxu0 0.0
        %1771 = vmatpush2.msra.mxu0 0.0
        %1772 = vmatprep.subr.mxu0 0.0
        %1773 = vmatpush2.msra.mxu0 0.0
        %1774 = vmatprep.mubr.f32.mxu0 0.0
        %1775 = vmatmul.mubr.f32.gmra.mxu0 %v1708
        %v1776 = vpop.f32.mrf.mxu0
        %v1777 = vadd.f32 0.0, %v1776
        %v1778 = vpop.f32.mrf.mxu0
        %1779 = vdwg.mxu0
        %v1780 = vsel %vm1623, %v1777, 0.0
        %1781 = vadd.xlane.f32.xlu0 %v1780
        %v1782 = vpop.xlane.xlu0 %1781
        %v1783 = vmul.f32 %v1782, 0.015625
        %v1784 = vsub.f32 %v1777, %v1783
        %v1785 = vmul.f32 %v1784, %v1784
        %v1786 = vsel %vm1623, %v1785, 0.0
        %1787 = vadd.xlane.f32.xlu0 %v1786
        %v1788 = vpop.xlane.xlu0 %1787
        %v1789 = vmul.f32 %v1788, 0.015625
        %v1790 = vadd.f32 %v1789, 1e-05
        %v1791 = vrsqrt.pop %v1790
        %v1792 = vmul.f32 %v1784, %v1791
        %vm1793 = vcmp.ge.f32.partialorder %v1792, 0.0
        %v1794 = vmul.f32 %v1792, 0.2
        %v1795 = vsel %vm1793, %v1792, %v1794
        %v1796 = vld [vmem:[%s19] sm:$0xff]
        %v1797 = vld [vmem:[%s19 + $0x8] sm:$0xff]
        %v1798 = vld [vmem:[%s19 + $0x10] sm:$0xff]
        %v1799 = vld [vmem:[%s19 + $0x18] sm:$0xff]
        %v1800 = vld [vmem:[%s19 + $0x20] sm:$0xff]
        %v1801 = vld [vmem:[%s19 + $0x28] sm:$0xff]
        %v1802 = vld [vmem:[%s19 + $0x30] sm:$0xff]
        %v1803 = vld [vmem:[%s19 + $0x38] sm:$0xff]
        %v1805 = vsel %vm1623, %v1795, 0
        %1807 = vmatprep.subr.mxu0 0.0
        %1808 = vmatpush1.msra.mxu0 0.0
        %1809 = vmatprep.subr.mxu0 0.0
        %1810 = vmatpush1.msra.mxu0 0.0
        %1811 = vmatprep.subr.mxu0 0.0
        %1812 = vmatpush1.msra.mxu0 0.0
        %1813 = vmatprep.subr.mxu0 0.0
        %1814 = vmatpush1.msra.mxu0 0.0
        %1815 = vmatprep.subr.mxu0 0.0
        %1816 = vmatpush1.msra.mxu0 0.0
        %1817 = vmatprep.subr.mxu0 0.0
        %1818 = vmatpush1.msra.mxu0 0.0
        %1819 = vmatprep.subr.mxu0 0.0
        %1820 = vmatpush1.msra.mxu0 0.0
        %1821 = vmatprep.subr.mxu0 0.0
        %1822 = vmatpush1.msra.mxu0 0.0
        %1823 = vmatprep.subr.mxu0 0.0
        %1824 = vmatpush1.msra.mxu0 %v1803
        %1825 = vmatprep.subr.mxu0 0.0
        %1826 = vmatpush1.msra.mxu0 %v1802
        %1827 = vmatprep.subr.mxu0 0.0
        %1828 = vmatpush1.msra.mxu0 %v1801
        %1829 = vmatprep.subr.mxu0 0.0
        %1830 = vmatpush1.msra.mxu0 %v1800
        %1831 = vmatprep.subr.mxu0 0.0
        %1832 = vmatpush1.msra.mxu0 %v1799
        %1833 = vmatprep.subr.mxu0 0.0
        %1834 = vmatpush1.msra.mxu0 %v1798
        %1835 = vmatprep.subr.mxu0 0.0
        %1836 = vmatpush1.msra.mxu0 %v1797
        %1837 = vmatprep.subr.mxu0 0.0
        %1838 = vmatpush1.msra.mxu0 %v1796
        %1839 = vmatprep.subr.mxu0 0.0
        %1840 = vmatpush2.msra.mxu0 0.0
        %1841 = vmatprep.subr.mxu0 0.0
        %1842 = vmatpush2.msra.mxu0 0.0
        %1843 = vmatprep.subr.mxu0 0.0
        %1844 = vmatpush2.msra.mxu0 0.0
        %1845 = vmatprep.subr.mxu0 0.0
        %1846 = vmatpush2.msra.mxu0 0.0
        %1847 = vmatprep.subr.mxu0 0.0
        %1848 = vmatpush2.msra.mxu0 0.0
        %1849 = vmatprep.subr.mxu0 0.0
        %1850 = vmatpush2.msra.mxu0 0.0
        %1851 = vmatprep.subr.mxu0 0.0
        %1852 = vmatpush2.msra.mxu0 0.0
        %1853 = vmatprep.subr.mxu0 0.0
        %1854 = vmatpush2.msra.mxu0 0.0
        %1855 = vmatprep.subr.mxu0 0.0
        %1856 = vmatpush2.msra.mxu0 0.0
        %1857 = vmatprep.subr.mxu0 0.0
        %1858 = vmatpush2.msra.mxu0 0.0
        %1859 = vmatprep.subr.mxu0 0.0
        %1860 = vmatpush2.msra.mxu0 0.0
        %1861 = vmatprep.subr.mxu0 0.0
        %1862 = vmatpush2.msra.mxu0 0.0
        %1863 = vmatprep.subr.mxu0 0.0
        %1864 = vmatpush2.msra.mxu0 0.0
        %1865 = vmatprep.subr.mxu0 0.0
        %1866 = vmatpush2.msra.mxu0 0.0
        %1867 = vmatprep.subr.mxu0 0.0
        %1868 = vmatpush2.msra.mxu0 0.0
        %1869 = vmatprep.subr.mxu0 0.0
        %1870 = vmatpush2.msra.mxu0 0.0
        %1871 = vmatprep.mubr.f32.mxu0 0.0
        %1872 = vmatmul.mubr.f32.gmra.mxu0 %v1805
        %v1873 = vpop.f32.mrf.mxu0
        %v1874 = vadd.f32 0.0, %v1873
        %v1875 = vpop.f32.mrf.mxu0
        %1876 = vdwg.mxu0
        %1878 = vrot.lane.b32.xlu0 %v1874, 117
        %v1879 = vpop.permute.xlu0 %1878
        %1881 = vrot.lane.b32.xlu0 %v1874, 5
        %v1882 = vpop.permute.xlu0 %1881
        %vm1884 = vcmask 39936
        %v1885 = vsel %vm1884, %v1879, %v1882
        %v1886 = vld [vmem:[#allocation5] sm:$0x1]
        %v1887 = vlaneseq
        %v1888 = vshrl.u32 %v1887, 7
        %v1889 = vsub.s32 0, %v1888
        %v1890 = vrot.slane %v1886, %v1889
        %v1891 = vmul.f32 %v1885, %v1890
        %1892 = vrot.lane.b32.xlu0 %v1874, 116
        %v1893 = vpop.permute.xlu0 %1892
        %1895 = vrot.lane.b32.xlu0 %v1874, 4
        %v1896 = vpop.permute.xlu0 %1895
        %vm1898 = vcmask 31744
        %v1899 = vsel %vm1898, %v1893, %v1896
        %v1900 = vld [vmem:[#allocation5 + $0x1] sm:$0x1]
        %v1901 = vlaneseq
        %v1902 = vshrl.u32 %v1901, 7
        %v1903 = vsub.s32 0, %v1902
        %v1904 = vrot.slane %v1900, %v1903
        %v1905 = vmul.f32 %v1899, %v1904
        %1906 = vrot.lane.b32.xlu0 %v1874, 115
        %v1907 = vpop.permute.xlu0 %1906
        %1909 = vrot.lane.b32.xlu0 %v1874, 3
        %v1910 = vpop.permute.xlu0 %1909
        %vm1912 = vcmask 23552
        %v1913 = vsel %vm1912, %v1907, %v1910
        %v1914 = vld [vmem:[#allocation5 + $0x2] sm:$0x1]
        %v1915 = vlaneseq
        %v1916 = vshrl.u32 %v1915, 7
        %v1917 = vsub.s32 0, %v1916
        %v1918 = vrot.slane %v1914, %v1917
        %v1919 = vmul.f32 %v1913, %v1918
        %1920 = vrot.lane.b32.xlu0 %v1874, 113
        %v1921 = vpop.permute.xlu0 %1920
        %1923 = vrot.lane.b32.xlu0 %v1874, 1
        %v1924 = vpop.permute.xlu0 %1923
        %v1926 = vsel %vm800, %v1921, %v1924
        %v1927 = vld [vmem:[#allocation5 + $0x3] sm:$0x1]
        %v1928 = vlaneseq
        %v1929 = vshrl.u32 %v1928, 7
        %v1930 = vsub.s32 0, %v1929
        %v1931 = vrot.slane %v1927, %v1930
        %v1932 = vmul.f32 %v1926, %v1931
        %1933 = vrot.lane.b32.xlu0 %v1874, 127
        %v1934 = vpop.permute.xlu0 %1933
        %1936 = vrot.lane.b32.xlu0 %v1874, 15
        %v1937 = vpop.permute.xlu0 %1936
        %v1939 = vsel %vm775, %v1934, %v1937
        %v1940 = vld [vmem:[#allocation5 + $0x5] sm:$0x1]
        %v1941 = vlaneseq
        %v1942 = vshrl.u32 %v1941, 7
        %v1943 = vsub.s32 0, %v1942
        %v1944 = vrot.slane %v1940, %v1943
        %v1945 = vmul.f32 %v1939, %v1944
        %1946 = vrot.lane.b32.xlu0 %v1874, 125
        %v1947 = vpop.permute.xlu0 %1946
        %1949 = vrot.lane.b32.xlu0 %v1874, 13
        %v1950 = vpop.permute.xlu0 %1949
        %vm1952 = vcmask 105472
        %v1953 = vsel %vm1952, %v1947, %v1950
        %v1954 = vld [vmem:[#allocation5 + $0x6] sm:$0x1]
        %v1955 = vlaneseq
        %v1956 = vshrl.u32 %v1955, 7
        %v1957 = vsub.s32 0, %v1956
        %v1958 = vrot.slane %v1954, %v1957
        %v1959 = vmul.f32 %v1953, %v1958
        %1960 = vrot.lane.b32.xlu0 %v1874, 124
        %v1961 = vpop.permute.xlu0 %1960
        %1963 = vrot.lane.b32.xlu0 %v1874, 12
        %v1964 = vpop.permute.xlu0 %1963
        %vm1966 = vcmask 97280
        %v1967 = vsel %vm1966, %v1961, %v1964
        %v1968 = vld [vmem:[#allocation5 + $0x7] sm:$0x1]
        %v1969 = vlaneseq
        %v1970 = vshrl.u32 %v1969, 7
        %v1971 = vsub.s32 0, %v1970
        %v1972 = vrot.slane %v1968, %v1971
        %v1973 = vmul.f32 %v1967, %v1972
        %1974 = vrot.lane.b32.xlu0 %v1874, 123
        %v1975 = vpop.permute.xlu0 %1974
        %1977 = vrot.lane.b32.xlu0 %v1874, 11
        %v1978 = vpop.permute.xlu0 %1977
        %vm1980 = vcmask 89088
        %v1981 = vsel %vm1980, %v1975, %v1978
        %v1982 = vld [vmem:[#allocation5 + $0x8] sm:$0x1]
        %v1983 = vlaneseq
        %v1984 = vshrl.u32 %v1983, 7
        %v1985 = vsub.s32 0, %v1984
        %v1986 = vrot.slane %v1982, %v1985
        %v1987 = vmul.f32 %v1981, %v1986
        %v1988 = vld [vmem:[%s5] sm:$0xff]
        %v1989 = vld [vmem:[%s5 + $0x8] sm:$0xff]
        %v1991 = vsel %vm1706, %v1988, 0
        %v1994 = vsel %vm1706, %v1989, 0
        %1996 = vmatprep.subr.mxu0 0.0
        %1997 = vmatpush1.msra.mxu0 0.0
        %1998 = vmatprep.subr.mxu0 0.0
        %1999 = vmatpush1.msra.mxu0 0.0
        %2000 = vmatprep.subr.mxu0 0.0
        %2001 = vmatpush1.msra.mxu0 0.0
        %2002 = vmatprep.subr.mxu0 0.0
        %2003 = vmatpush1.msra.mxu0 0.0
        %2004 = vmatprep.subr.mxu0 0.0
        %2005 = vmatpush1.msra.mxu0 0.0
        %2006 = vmatprep.subr.mxu0 0.0
        %2007 = vmatpush1.msra.mxu0 0.0
        %2008 = vmatprep.subr.mxu0 0.0
        %2009 = vmatpush1.msra.mxu0 0.0
        %2010 = vmatprep.subr.mxu0 0.0
        %2011 = vmatpush1.msra.mxu0 %v1987
        %2012 = vmatprep.subr.mxu0 0.0
        %2013 = vmatpush1.msra.mxu0 %v1973
        %2014 = vmatprep.subr.mxu0 0.0
        %2015 = vmatpush1.msra.mxu0 %v1959
        %2016 = vmatprep.subr.mxu0 0.0
        %2017 = vmatpush1.msra.mxu0 %v1945
        %2018 = vmatprep.subr.mxu0 0.0
        %2019 = vmatpush1.msra.mxu0 %v1874
        %2020 = vmatprep.subr.mxu0 0.0
        %2021 = vmatpush1.msra.mxu0 %v1932
        %2022 = vmatprep.subr.mxu0 0.0
        %2023 = vmatpush1.msra.mxu0 %v1919
        %2024 = vmatprep.subr.mxu0 0.0
        %2025 = vmatpush1.msra.mxu0 %v1905
        %2026 = vmatprep.subr.mxu0 0.0
        %2027 = vmatpush1.msra.mxu0 %v1891
        %2028 = vmatprep.subr.mxu0 0.0
        %2029 = vmatpush2.msra.mxu0 0.0
        %2030 = vmatprep.subr.mxu0 0.0
        %2031 = vmatpush2.msra.mxu0 0.0
        %2032 = vmatprep.subr.mxu0 0.0
        %2033 = vmatpush2.msra.mxu0 0.0
        %2034 = vmatprep.subr.mxu0 0.0
        %2035 = vmatpush2.msra.mxu0 0.0
        %2036 = vmatprep.subr.mxu0 0.0
        %2037 = vmatpush2.msra.mxu0 0.0
        %2038 = vmatprep.subr.mxu0 0.0
        %2039 = vmatpush2.msra.mxu0 0.0
        %2040 = vmatprep.subr.mxu0 0.0
        %2041 = vmatpush2.msra.mxu0 0.0
        %2042 = vmatprep.subr.mxu0 0.0
        %2043 = vmatpush2.msra.mxu0 0.0
        %2044 = vmatprep.subr.mxu0 0.0
        %2045 = vmatpush2.msra.mxu0 0.0
        %2046 = vmatprep.subr.mxu0 0.0
        %2047 = vmatpush2.msra.mxu0 0.0
        %2048 = vmatprep.subr.mxu0 0.0
        %2049 = vmatpush2.msra.mxu0 0.0
        %2050 = vmatprep.subr.mxu0 0.0
        %2051 = vmatpush2.msra.mxu0 0.0
        %2052 = vmatprep.subr.mxu0 0.0
        %2053 = vmatpush2.msra.mxu0 0.0
        %2054 = vmatprep.subr.mxu0 0.0
        %2055 = vmatpush2.msra.mxu0 0.0
        %2056 = vmatprep.subr.mxu0 0.0
        %2057 = vmatpush2.msra.mxu0 0.0
        %2058 = vmatprep.subr.mxu0 0.0
        %2059 = vmatpush2.msra.mxu0 0.0
        %2060 = vmatprep.mubr.f32.mxu0 0.0
        %2061 = vmatmul.mubr.f32.gmra.mxu0 %v1991
        %v2062 = vpop.f32.mrf.mxu0
        %v2063 = vadd.f32 0.0, %v2062
        %v2064 = vpop.f32.mrf.mxu0
        %2065 = vmatprep.mubr.f32.mxu0 0.0
        %2066 = vmatmul.mubr.f32.gmra.mxu0 %v1994
        %v2067 = vpop.f32.mrf.mxu0
        %v2068 = vadd.f32 0.0, %v2067
        %v2069 = vpop.f32.mrf.mxu0
        %2070 = vdwg.mxu0
        %v2071 = vsel %vm750, %v2063, 0.0
        %2072 = vadd.xlane.f32.xlu0 %v2071
        %v2073 = vpop.xlane.xlu0 %2072
        %v2074 = vsel %vm750, %v2068, 0.0
        %2075 = vadd.xlane.f32.xlu0 %v2074
        %v2076 = vpop.xlane.xlu0 %2075
        %v2077 = vmul.f32 %v2073, 0.0625
        %v2078 = vmul.f32 %v2076, 0.0625
        %v2079 = vsub.f32 %v2063, %v2077
        %v2080 = vsub.f32 %v2068, %v2078
        %v2081 = vmul.f32 %v2079, %v2079
        %v2082 = vmul.f32 %v2080, %v2080
        %v2083 = vsel %vm750, %v2081, 0.0
        %2084 = vadd.xlane.f32.xlu0 %v2083
        %v2085 = vpop.xlane.xlu0 %2084
        %v2086 = vsel %vm750, %v2082, 0.0
        %2087 = vadd.xlane.f32.xlu0 %v2086
        %v2088 = vpop.xlane.xlu0 %2087
        %v2089 = vmul.f32 %v2085, 0.0625
        %v2090 = vmul.f32 %v2088, 0.0625
        %v2091 = vadd.f32 %v2089, 1e-05
        %v2092 = vadd.f32 %v2090, 1e-05
        %v2093 = vrsqrt.pop %v2091
        %v2094 = vrsqrt.pop %v2092
        %v2095 = vmul.f32 %v2079, %v2093
        %v2096 = vmul.f32 %v2080, %v2094
        %vm2097 = vcmp.ge.f32.partialorder %v2095, 0.0
        %vm2098 = vcmp.ge.f32.partialorder %v2096, 0.0
        %v2099 = vmul.f32 %v2095, 0.2
        %v2100 = vmul.f32 %v2096, 0.2
        %v2101 = vsel %vm2097, %v2095, %v2099
        %v2102 = vsel %vm2098, %v2096, %v2100
        %2105 = vrot.lane.b32.xlu0 %v2101, 117
        %v2106 = vpop.permute.xlu0 %2105
        %2107 = vrot.lane.b32.xlu0 %v2102, 117
        %v2108 = vpop.permute.xlu0 %2107
        %2111 = vrot.lane.b32.xlu0 %v2101, 5
        %v2112 = vpop.permute.xlu0 %2111
        %2113 = vrot.lane.b32.xlu0 %v2102, 5
        %v2114 = vpop.permute.xlu0 %2113
        %v2117 = vsel %vm1884, %v2106, %v2112
        %v2118 = vsel %vm1884, %v2108, %v2114
        %v2119 = vmul.f32 %v2117, %v1890
        %v2120 = vmul.f32 %v2118, %v1890
        %2121 = vrot.lane.b32.xlu0 %v2101, 116
        %v2122 = vpop.permute.xlu0 %2121
        %2123 = vrot.lane.b32.xlu0 %v2102, 116
        %v2124 = vpop.permute.xlu0 %2123
        %2127 = vrot.lane.b32.xlu0 %v2101, 4
        %v2128 = vpop.permute.xlu0 %2127
        %2129 = vrot.lane.b32.xlu0 %v2102, 4
        %v2130 = vpop.permute.xlu0 %2129
        %v2133 = vsel %vm1898, %v2122, %v2128
        %v2134 = vsel %vm1898, %v2124, %v2130
        %v2135 = vmul.f32 %v2133, %v1904
        %v2136 = vmul.f32 %v2134, %v1904
        %2137 = vrot.lane.b32.xlu0 %v2101, 115
        %v2138 = vpop.permute.xlu0 %2137
        %2139 = vrot.lane.b32.xlu0 %v2102, 115
        %v2140 = vpop.permute.xlu0 %2139
        %2143 = vrot.lane.b32.xlu0 %v2101, 3
        %v2144 = vpop.permute.xlu0 %2143
        %2145 = vrot.lane.b32.xlu0 %v2102, 3
        %v2146 = vpop.permute.xlu0 %2145
        %v2149 = vsel %vm1912, %v2138, %v2144
        %v2150 = vsel %vm1912, %v2140, %v2146
        %v2151 = vmul.f32 %v2149, %v1918
        %v2152 = vmul.f32 %v2150, %v1918
        %2153 = vrot.lane.b32.xlu0 %v2101, 113
        %v2154 = vpop.permute.xlu0 %2153
        %2155 = vrot.lane.b32.xlu0 %v2102, 113
        %v2156 = vpop.permute.xlu0 %2155
        %2159 = vrot.lane.b32.xlu0 %v2101, 1
        %v2160 = vpop.permute.xlu0 %2159
        %2161 = vrot.lane.b32.xlu0 %v2102, 1
        %v2162 = vpop.permute.xlu0 %2161
        %v2165 = vsel %vm800, %v2154, %v2160
        %v2166 = vsel %vm800, %v2156, %v2162
        %v2167 = vmul.f32 %v2165, %v1931
        %v2168 = vmul.f32 %v2166, %v1931
        %2169 = vrot.lane.b32.xlu0 %v2101, 127
        %v2170 = vpop.permute.xlu0 %2169
        %2171 = vrot.lane.b32.xlu0 %v2102, 127
        %v2172 = vpop.permute.xlu0 %2171
        %2175 = vrot.lane.b32.xlu0 %v2101, 15
        %v2176 = vpop.permute.xlu0 %2175
        %2177 = vrot.lane.b32.xlu0 %v2102, 15
        %v2178 = vpop.permute.xlu0 %2177
        %v2181 = vsel %vm775, %v2170, %v2176
        %v2182 = vsel %vm775, %v2172, %v2178
        %v2183 = vmul.f32 %v2181, %v1944
        %v2184 = vmul.f32 %v2182, %v1944
        %2185 = vrot.lane.b32.xlu0 %v2101, 125
        %v2186 = vpop.permute.xlu0 %2185
        %2187 = vrot.lane.b32.xlu0 %v2102, 125
        %v2188 = vpop.permute.xlu0 %2187
        %2191 = vrot.lane.b32.xlu0 %v2101, 13
        %v2192 = vpop.permute.xlu0 %2191
        %2193 = vrot.lane.b32.xlu0 %v2102, 13
        %v2194 = vpop.permute.xlu0 %2193
        %v2197 = vsel %vm1952, %v2186, %v2192
        %v2198 = vsel %vm1952, %v2188, %v2194
        %v2199 = vmul.f32 %v2197, %v1958
        %v2200 = vmul.f32 %v2198, %v1958
        %2201 = vrot.lane.b32.xlu0 %v2101, 124
        %v2202 = vpop.permute.xlu0 %2201
        %2203 = vrot.lane.b32.xlu0 %v2102, 124
        %v2204 = vpop.permute.xlu0 %2203
        %2207 = vrot.lane.b32.xlu0 %v2101, 12
        %v2208 = vpop.permute.xlu0 %2207
        %2209 = vrot.lane.b32.xlu0 %v2102, 12
        %v2210 = vpop.permute.xlu0 %2209
        %v2213 = vsel %vm1966, %v2202, %v2208
        %v2214 = vsel %vm1966, %v2204, %v2210
        %v2215 = vmul.f32 %v2213, %v1972
        %v2216 = vmul.f32 %v2214, %v1972
        %2217 = vrot.lane.b32.xlu0 %v2101, 123
        %v2218 = vpop.permute.xlu0 %2217
        %2219 = vrot.lane.b32.xlu0 %v2102, 123
        %v2220 = vpop.permute.xlu0 %2219
        %2223 = vrot.lane.b32.xlu0 %v2101, 11
        %v2224 = vpop.permute.xlu0 %2223
        %2225 = vrot.lane.b32.xlu0 %v2102, 11
        %v2226 = vpop.permute.xlu0 %2225
        %v2229 = vsel %vm1980, %v2218, %v2224
        %v2230 = vsel %vm1980, %v2220, %v2226
        %v2231 = vmul.f32 %v2229, %v1986
        %v2232 = vmul.f32 %v2230, %v1986
        %v2233 = vld [vmem:[%s6] sm:$0xff]
        %v2234 = vld [vmem:[%s6 + $0x8] sm:$0xff]
        %v2235 = vld [vmem:[%s6 + $0x10] sm:$0xff]
        %v2236 = vld [vmem:[%s6 + $0x18] sm:$0xff]
        %v2238 = vsel %vm750, %v2234, 0
        %v2241 = vsel %vm750, %v2236, 0
        %2243 = vmatprep.subr.mxu0 0.0
        %2244 = vmatpush1.msra.mxu0 %v2216
        %2245 = vmatprep.subr.mxu0 0.0
        %2246 = vmatpush1.msra.mxu0 %v2215
        %2247 = vmatprep.subr.mxu0 0.0
        %2248 = vmatpush1.msra.mxu0 %v2200
        %2249 = vmatprep.subr.mxu0 0.0
        %2250 = vmatpush1.msra.mxu0 %v2199
        %2251 = vmatprep.subr.mxu0 0.0
        %2252 = vmatpush1.msra.mxu0 %v2184
        %2253 = vmatprep.subr.mxu0 0.0
        %2254 = vmatpush1.msra.mxu0 %v2183
        %2255 = vmatprep.subr.mxu0 0.0
        %2256 = vmatpush1.msra.mxu0 %v2102
        %2257 = vmatprep.subr.mxu0 0.0
        %2258 = vmatpush1.msra.mxu0 %v2101
        %2259 = vmatprep.subr.mxu0 0.0
        %2260 = vmatpush1.msra.mxu0 %v2168
        %2261 = vmatprep.subr.mxu0 0.0
        %2262 = vmatpush1.msra.mxu0 %v2167
        %2263 = vmatprep.subr.mxu0 0.0
        %2264 = vmatpush1.msra.mxu0 %v2152
        %2265 = vmatprep.subr.mxu0 0.0
        %2266 = vmatpush1.msra.mxu0 %v2151
        %2267 = vmatprep.subr.mxu0 0.0
        %2268 = vmatpush1.msra.mxu0 %v2136
        %2269 = vmatprep.subr.mxu0 0.0
        %2270 = vmatpush1.msra.mxu0 %v2135
        %2271 = vmatprep.subr.mxu0 0.0
        %2272 = vmatpush1.msra.mxu0 %v2120
        %2273 = vmatprep.subr.mxu0 0.0
        %2274 = vmatpush1.msra.mxu0 %v2119
        %2275 = vmatprep.subr.mxu0 0.0
        %2276 = vmatpush2.msra.mxu0 0.0
        %2277 = vmatprep.subr.mxu0 0.0
        %2278 = vmatpush2.msra.mxu0 0.0
        %2279 = vmatprep.subr.mxu0 0.0
        %2280 = vmatpush2.msra.mxu0 0.0
        %2281 = vmatprep.subr.mxu0 0.0
        %2282 = vmatpush2.msra.mxu0 0.0
        %2283 = vmatprep.subr.mxu0 0.0
        %2284 = vmatpush2.msra.mxu0 0.0
        %2285 = vmatprep.subr.mxu0 0.0
        %2286 = vmatpush2.msra.mxu0 0.0
        %2287 = vmatprep.subr.mxu0 0.0
        %2288 = vmatpush2.msra.mxu0 0.0
        %2289 = vmatprep.subr.mxu0 0.0
        %2290 = vmatpush2.msra.mxu0 0.0
        %2291 = vmatprep.subr.mxu0 0.0
        %2292 = vmatpush2.msra.mxu0 0.0
        %2293 = vmatprep.subr.mxu0 0.0
        %2294 = vmatpush2.msra.mxu0 0.0
        %2295 = vmatprep.subr.mxu0 0.0
        %2296 = vmatpush2.msra.mxu0 0.0
        %2297 = vmatprep.subr.mxu0 0.0
        %2298 = vmatpush2.msra.mxu0 0.0
        %2299 = vmatprep.subr.mxu0 0.0
        %2300 = vmatpush2.msra.mxu0 0.0
        %2301 = vmatprep.subr.mxu0 0.0
        %2302 = vmatpush2.msra.mxu0 0.0
        %2303 = vmatprep.subr.mxu0 0.0
        %2304 = vmatpush2.msra.mxu0 %v2232
        %2305 = vmatprep.subr.mxu0 0.0
        %2306 = vmatpush2.msra.mxu0 %v2231
        %2307 = vmatprep.mubr.f32.mxu0 %v2238
        %2308 = vmatmul.mubr.f32.gmra.mxu0 %v2233
        %v2309 = vpop.f32.mrf.mxu0
        %v2310 = vadd.f32 0.0, %v2309
        %v2311 = vpop.f32.mrf.mxu0
        %2312 = vmatprep.mubr.f32.mxu0 %v2241
        %2313 = vmatmul.mubr.f32.gmra.mxu0 %v2235
        %v2314 = vpop.f32.mrf.mxu0
        %v2315 = vadd.f32 0.0, %v2314
        %v2316 = vpop.f32.mrf.mxu0
        %2317 = vdwg.mxu0
        %v2318 = vsel %vm750, %v2310, 0.0
        %2319 = vadd.xlane.f32.xlu0 %v2318
        %v2320 = vpop.xlane.xlu0 %2319
        %v2321 = vsel %vm750, %v2315, 0.0
        %2322 = vadd.xlane.f32.xlu0 %v2321
        %v2323 = vpop.xlane.xlu0 %2322
        %v2324 = vmul.f32 %v2320, 0.0625
        %v2325 = vmul.f32 %v2323, 0.0625
        %v2326 = vsub.f32 %v2310, %v2324
        %v2327 = vsub.f32 %v2315, %v2325
        %v2328 = vmul.f32 %v2326, %v2326
        %v2329 = vmul.f32 %v2327, %v2327
        %v2330 = vsel %vm750, %v2328, 0.0
        %2331 = vadd.xlane.f32.xlu0 %v2330
        %v2332 = vpop.xlane.xlu0 %2331
        %v2333 = vsel %vm750, %v2329, 0.0
        %2334 = vadd.xlane.f32.xlu0 %v2333
        %v2335 = vpop.xlane.xlu0 %2334
        %v2336 = vmul.f32 %v2332, 0.0625
        %v2337 = vmul.f32 %v2335, 0.0625
        %v2338 = vadd.f32 %v2336, 1e-05
        %v2339 = vadd.f32 %v2337, 1e-05
        %v2340 = vrsqrt.pop %v2338
        %v2341 = vrsqrt.pop %v2339
        %v2342 = vmul.f32 %v2326, %v2340
        %v2343 = vmul.f32 %v2327, %v2341
        %vm2344 = vcmp.ge.f32.partialorder %v2342, 0.0
        %vm2345 = vcmp.ge.f32.partialorder %v2343, 0.0
        %v2346 = vmul.f32 %v2342, 0.2
        %v2347 = vmul.f32 %v2343, 0.2
        %v2348 = vsel %vm2344, %v2342, %v2346
        %v2349 = vsel %vm2345, %v2343, %v2347
        %v2350 = vld [vmem:[%s7] sm:$0xff]
        %v2352 = vsel %vm750, %v2350, 0
        %2354 = vmatprep.subr.mxu0 0.0
        %2355 = vmatpush1.msra.mxu0 0.0
        %2356 = vmatprep.subr.mxu0 0.0
        %2357 = vmatpush1.msra.mxu0 0.0
        %2358 = vmatprep.subr.mxu0 0.0
        %2359 = vmatpush1.msra.mxu0 0.0
        %2360 = vmatprep.subr.mxu0 0.0
        %2361 = vmatpush1.msra.mxu0 0.0
        %2362 = vmatprep.subr.mxu0 0.0
        %2363 = vmatpush1.msra.mxu0 0.0
        %2364 = vmatprep.subr.mxu0 0.0
        %2365 = vmatpush1.msra.mxu0 0.0
        %2366 = vmatprep.subr.mxu0 0.0
        %2367 = vmatpush1.msra.mxu0 0.0
        %2368 = vmatprep.subr.mxu0 0.0
        %2369 = vmatpush1.msra.mxu0 0.0
        %2370 = vmatprep.subr.mxu0 0.0
        %2371 = vmatpush1.msra.mxu0 0.0
        %2372 = vmatprep.subr.mxu0 0.0
        %2373 = vmatpush1.msra.mxu0 0.0
        %2374 = vmatprep.subr.mxu0 0.0
        %2375 = vmatpush1.msra.mxu0 0.0
        %2376 = vmatprep.subr.mxu0 0.0
        %2377 = vmatpush1.msra.mxu0 0.0
        %2378 = vmatprep.subr.mxu0 0.0
        %2379 = vmatpush1.msra.mxu0 0.0
        %2380 = vmatprep.subr.mxu0 0.0
        %2381 = vmatpush1.msra.mxu0 0.0
        %2382 = vmatprep.subr.mxu0 0.0
        %2383 = vmatpush1.msra.mxu0 %v2349
        %2384 = vmatprep.subr.mxu0 0.0
        %2385 = vmatpush1.msra.mxu0 %v2348
        %2386 = vmatprep.subr.mxu0 0.0
        %2387 = vmatpush2.msra.mxu0 0.0
        %2388 = vmatprep.subr.mxu0 0.0
        %2389 = vmatpush2.msra.mxu0 0.0
        %2390 = vmatprep.subr.mxu0 0.0
        %2391 = vmatpush2.msra.mxu0 0.0
        %2392 = vmatprep.subr.mxu0 0.0
        %2393 = vmatpush2.msra.mxu0 0.0
        %2394 = vmatprep.subr.mxu0 0.0
        %2395 = vmatpush2.msra.mxu0 0.0
        %2396 = vmatprep.subr.mxu0 0.0
        %2397 = vmatpush2.msra.mxu0 0.0
        %2398 = vmatprep.subr.mxu0 0.0
        %2399 = vmatpush2.msra.mxu0 0.0
        %2400 = vmatprep.subr.mxu0 0.0
        %2401 = vmatpush2.msra.mxu0 0.0
        %2402 = vmatprep.subr.mxu0 0.0
        %2403 = vmatpush2.msra.mxu0 0.0
        %2404 = vmatprep.subr.mxu0 0.0
        %2405 = vmatpush2.msra.mxu0 0.0
        %2406 = vmatprep.subr.mxu0 0.0
        %2407 = vmatpush2.msra.mxu0 0.0
        %2408 = vmatprep.subr.mxu0 0.0
        %2409 = vmatpush2.msra.mxu0 0.0
        %2410 = vmatprep.subr.mxu0 0.0
        %2411 = vmatpush2.msra.mxu0 0.0
        %2412 = vmatprep.subr.mxu0 0.0
        %2413 = vmatpush2.msra.mxu0 0.0
        %2414 = vmatprep.subr.mxu0 0.0
        %2415 = vmatpush2.msra.mxu0 0.0
        %2416 = vmatprep.subr.mxu0 0.0
        %2417 = vmatpush2.msra.mxu0 0.0
        %2418 = vmatprep.mubr.f32.mxu0 0.0
        %2419 = vmatmul.mubr.f32.gmra.mxu0 %v2352
        %v2420 = vpop.f32.mrf.mxu0
        %v2421 = vadd.f32 0.0, %v2420
        %v2422 = vpop.f32.mrf.mxu0
        %2423 = vdwg.mxu0
        %2424 = vrot.lane.b32.xlu0 %v2350, 112
        %v2425 = vpop.permute.xlu0 %2424
        %v2426 = vsel %vm750, %v2425, 0
        %2428 = vmatprep.subr.mxu0 0.0
        %2429 = vmatpush1.msra.mxu0 0.0
        %2430 = vmatprep.subr.mxu0 0.0
        %2431 = vmatpush1.msra.mxu0 0.0
        %2432 = vmatprep.subr.mxu0 0.0
        %2433 = vmatpush1.msra.mxu0 0.0
        %2434 = vmatprep.subr.mxu0 0.0
        %2435 = vmatpush1.msra.mxu0 0.0
        %2436 = vmatprep.subr.mxu0 0.0
        %2437 = vmatpush1.msra.mxu0 0.0
        %2438 = vmatprep.subr.mxu0 0.0
        %2439 = vmatpush1.msra.mxu0 0.0
        %2440 = vmatprep.subr.mxu0 0.0
        %2441 = vmatpush1.msra.mxu0 0.0
        %2442 = vmatprep.subr.mxu0 0.0
        %2443 = vmatpush1.msra.mxu0 0.0
        %2444 = vmatprep.subr.mxu0 0.0
        %2445 = vmatpush1.msra.mxu0 0.0
        %2446 = vmatprep.subr.mxu0 0.0
        %2447 = vmatpush1.msra.mxu0 0.0
        %2448 = vmatprep.subr.mxu0 0.0
        %2449 = vmatpush1.msra.mxu0 0.0
        %2450 = vmatprep.subr.mxu0 0.0
        %2451 = vmatpush1.msra.mxu0 0.0
        %2452 = vmatprep.subr.mxu0 0.0
        %2453 = vmatpush1.msra.mxu0 0.0
        %2454 = vmatprep.subr.mxu0 0.0
        %2455 = vmatpush1.msra.mxu0 0.0
        %2456 = vmatprep.subr.mxu0 0.0
        %2457 = vmatpush1.msra.mxu0 %v2349
        %2458 = vmatprep.subr.mxu0 0.0
        %2459 = vmatpush1.msra.mxu0 %v2348
        %2460 = vmatprep.subr.mxu0 0.0
        %2461 = vmatpush2.msra.mxu0 0.0
        %2462 = vmatprep.subr.mxu0 0.0
        %2463 = vmatpush2.msra.mxu0 0.0
        %2464 = vmatprep.subr.mxu0 0.0
        %2465 = vmatpush2.msra.mxu0 0.0
        %2466 = vmatprep.subr.mxu0 0.0
        %2467 = vmatpush2.msra.mxu0 0.0
        %2468 = vmatprep.subr.mxu0 0.0
        %2469 = vmatpush2.msra.mxu0 0.0
        %2470 = vmatprep.subr.mxu0 0.0
        %2471 = vmatpush2.msra.mxu0 0.0
        %2472 = vmatprep.subr.mxu0 0.0
        %2473 = vmatpush2.msra.mxu0 0.0
        %2474 = vmatprep.subr.mxu0 0.0
        %2475 = vmatpush2.msra.mxu0 0.0
        %2476 = vmatprep.subr.mxu0 0.0
        %2477 = vmatpush2.msra.mxu0 0.0
        %2478 = vmatprep.subr.mxu0 0.0
        %2479 = vmatpush2.msra.mxu0 0.0
        %2480 = vmatprep.subr.mxu0 0.0
        %2481 = vmatpush2.msra.mxu0 0.0
        %2482 = vmatprep.subr.mxu0 0.0
        %2483 = vmatpush2.msra.mxu0 0.0
        %2484 = vmatprep.subr.mxu0 0.0
        %2485 = vmatpush2.msra.mxu0 0.0
        %2486 = vmatprep.subr.mxu0 0.0
        %2487 = vmatpush2.msra.mxu0 0.0
        %2488 = vmatprep.subr.mxu0 0.0
        %2489 = vmatpush2.msra.mxu0 0.0
        %2490 = vmatprep.subr.mxu0 0.0
        %2491 = vmatpush2.msra.mxu0 0.0
        %2492 = vmatprep.mubr.f32.mxu0 0.0
        %2493 = vmatmul.mubr.f32.gmra.mxu0 %v2426
        %v2494 = vpop.f32.mrf.mxu0
        %v2495 = vadd.f32 0.0, %v2494
        %v2496 = vpop.f32.mrf.mxu0
        %2497 = vdwg.mxu0
        %2498 = vrot.lane.b32.xlu0 %v2350, 96
        %v2499 = vpop.permute.xlu0 %2498
        %v2500 = vsel %vm750, %v2499, 0
        %2502 = vmatprep.subr.mxu0 0.0
        %2503 = vmatpush1.msra.mxu0 0.0
        %2504 = vmatprep.subr.mxu0 0.0
        %2505 = vmatpush1.msra.mxu0 0.0
        %2506 = vmatprep.subr.mxu0 0.0
        %2507 = vmatpush1.msra.mxu0 0.0
        %2508 = vmatprep.subr.mxu0 0.0
        %2509 = vmatpush1.msra.mxu0 0.0
        %2510 = vmatprep.subr.mxu0 0.0
        %2511 = vmatpush1.msra.mxu0 0.0
        %2512 = vmatprep.subr.mxu0 0.0
        %2513 = vmatpush1.msra.mxu0 0.0
        %2514 = vmatprep.subr.mxu0 0.0
        %2515 = vmatpush1.msra.mxu0 0.0
        %2516 = vmatprep.subr.mxu0 0.0
        %2517 = vmatpush1.msra.mxu0 0.0
        %2518 = vmatprep.subr.mxu0 0.0
        %2519 = vmatpush1.msra.mxu0 0.0
        %2520 = vmatprep.subr.mxu0 0.0
        %2521 = vmatpush1.msra.mxu0 0.0
        %2522 = vmatprep.subr.mxu0 0.0
        %2523 = vmatpush1.msra.mxu0 0.0
        %2524 = vmatprep.subr.mxu0 0.0
        %2525 = vmatpush1.msra.mxu0 0.0
        %2526 = vmatprep.subr.mxu0 0.0
        %2527 = vmatpush1.msra.mxu0 0.0
        %2528 = vmatprep.subr.mxu0 0.0
        %2529 = vmatpush1.msra.mxu0 0.0
        %2530 = vmatprep.subr.mxu0 0.0
        %2531 = vmatpush1.msra.mxu0 %v2349
        %2532 = vmatprep.subr.mxu0 0.0
        %2533 = vmatpush1.msra.mxu0 %v2348
        %2534 = vmatprep.subr.mxu0 0.0
        %2535 = vmatpush2.msra.mxu0 0.0
        %2536 = vmatprep.subr.mxu0 0.0
        %2537 = vmatpush2.msra.mxu0 0.0
        %2538 = vmatprep.subr.mxu0 0.0
        %2539 = vmatpush2.msra.mxu0 0.0
        %2540 = vmatprep.subr.mxu0 0.0
        %2541 = vmatpush2.msra.mxu0 0.0
        %2542 = vmatprep.subr.mxu0 0.0
        %2543 = vmatpush2.msra.mxu0 0.0
        %2544 = vmatprep.subr.mxu0 0.0
        %2545 = vmatpush2.msra.mxu0 0.0
        %2546 = vmatprep.subr.mxu0 0.0
        %2547 = vmatpush2.msra.mxu0 0.0
        %2548 = vmatprep.subr.mxu0 0.0
        %2549 = vmatpush2.msra.mxu0 0.0
        %2550 = vmatprep.subr.mxu0 0.0
        %2551 = vmatpush2.msra.mxu0 0.0
        %2552 = vmatprep.subr.mxu0 0.0
        %2553 = vmatpush2.msra.mxu0 0.0
        %2554 = vmatprep.subr.mxu0 0.0
        %2555 = vmatpush2.msra.mxu0 0.0
        %2556 = vmatprep.subr.mxu0 0.0
        %2557 = vmatpush2.msra.mxu0 0.0
        %2558 = vmatprep.subr.mxu0 0.0
        %2559 = vmatpush2.msra.mxu0 0.0
        %2560 = vmatprep.subr.mxu0 0.0
        %2561 = vmatpush2.msra.mxu0 0.0
        %2562 = vmatprep.subr.mxu0 0.0
        %2563 = vmatpush2.msra.mxu0 0.0
        %2564 = vmatprep.subr.mxu0 0.0
        %2565 = vmatpush2.msra.mxu0 0.0
        %2566 = vmatprep.mubr.f32.mxu0 0.0
        %2567 = vmatmul.mubr.f32.gmra.mxu0 %v2500
        %v2568 = vpop.f32.mrf.mxu0
        %v2569 = vadd.f32 0.0, %v2568
        %v2570 = vpop.f32.mrf.mxu0
        %2571 = vdwg.mxu0
        %2572 = vrot.lane.b32.xlu0 %v2350, 80
        %v2573 = vpop.permute.xlu0 %2572
        %v2574 = vsel %vm750, %v2573, 0
        %2576 = vmatprep.subr.mxu0 0.0
        %2577 = vmatpush1.msra.mxu0 0.0
        %2578 = vmatprep.subr.mxu0 0.0
        %2579 = vmatpush1.msra.mxu0 0.0
        %2580 = vmatprep.subr.mxu0 0.0
        %2581 = vmatpush1.msra.mxu0 0.0
        %2582 = vmatprep.subr.mxu0 0.0
        %2583 = vmatpush1.msra.mxu0 0.0
        %2584 = vmatprep.subr.mxu0 0.0
        %2585 = vmatpush1.msra.mxu0 0.0
        %2586 = vmatprep.subr.mxu0 0.0
        %2587 = vmatpush1.msra.mxu0 0.0
        %2588 = vmatprep.subr.mxu0 0.0
        %2589 = vmatpush1.msra.mxu0 0.0
        %2590 = vmatprep.subr.mxu0 0.0
        %2591 = vmatpush1.msra.mxu0 0.0
        %2592 = vmatprep.subr.mxu0 0.0
        %2593 = vmatpush1.msra.mxu0 0.0
        %2594 = vmatprep.subr.mxu0 0.0
        %2595 = vmatpush1.msra.mxu0 0.0
        %2596 = vmatprep.subr.mxu0 0.0
        %2597 = vmatpush1.msra.mxu0 0.0
        %2598 = vmatprep.subr.mxu0 0.0
        %2599 = vmatpush1.msra.mxu0 0.0
        %2600 = vmatprep.subr.mxu0 0.0
        %2601 = vmatpush1.msra.mxu0 0.0
        %2602 = vmatprep.subr.mxu0 0.0
        %2603 = vmatpush1.msra.mxu0 0.0
        %2604 = vmatprep.subr.mxu0 0.0
        %2605 = vmatpush1.msra.mxu0 %v2349
        %2606 = vmatprep.subr.mxu0 0.0
        %2607 = vmatpush1.msra.mxu0 %v2348
        %2608 = vmatprep.subr.mxu0 0.0
        %2609 = vmatpush2.msra.mxu0 0.0
        %2610 = vmatprep.subr.mxu0 0.0
        %2611 = vmatpush2.msra.mxu0 0.0
        %2612 = vmatprep.subr.mxu0 0.0
        %2613 = vmatpush2.msra.mxu0 0.0
        %2614 = vmatprep.subr.mxu0 0.0
        %2615 = vmatpush2.msra.mxu0 0.0
        %2616 = vmatprep.subr.mxu0 0.0
        %2617 = vmatpush2.msra.mxu0 0.0
        %2618 = vmatprep.subr.mxu0 0.0
        %2619 = vmatpush2.msra.mxu0 0.0
        %2620 = vmatprep.subr.mxu0 0.0
        %2621 = vmatpush2.msra.mxu0 0.0
        %2622 = vmatprep.subr.mxu0 0.0
        %2623 = vmatpush2.msra.mxu0 0.0
        %2624 = vmatprep.subr.mxu0 0.0
        %2625 = vmatpush2.msra.mxu0 0.0
        %2626 = vmatprep.subr.mxu0 0.0
        %2627 = vmatpush2.msra.mxu0 0.0
        %2628 = vmatprep.subr.mxu0 0.0
        %2629 = vmatpush2.msra.mxu0 0.0
        %2630 = vmatprep.subr.mxu0 0.0
        %2631 = vmatpush2.msra.mxu0 0.0
        %2632 = vmatprep.subr.mxu0 0.0
        %2633 = vmatpush2.msra.mxu0 0.0
        %2634 = vmatprep.subr.mxu0 0.0
        %2635 = vmatpush2.msra.mxu0 0.0
        %2636 = vmatprep.subr.mxu0 0.0
        %2637 = vmatpush2.msra.mxu0 0.0
        %2638 = vmatprep.subr.mxu0 0.0
        %2639 = vmatpush2.msra.mxu0 0.0
        %2640 = vmatprep.mubr.f32.mxu0 0.0
        %2641 = vmatmul.mubr.f32.gmra.mxu0 %v2574
        %v2642 = vpop.f32.mrf.mxu0
        %v2643 = vadd.f32 0.0, %v2642
        %v2644 = vpop.f32.mrf.mxu0
        %2645 = vdwg.mxu0
        %2647 = vrot.lane.b32.xlu0 %v2495, 16
        %v2648 = vpop.permute.xlu0 %2647
        %2651 = vrot.lane.b32.xlu0 %v2569, 32
        %v2652 = vpop.permute.xlu0 %2651
        %2655 = vrot.lane.b32.xlu0 %v2643, 48
        %v2656 = vpop.permute.xlu0 %2655
        %v2658 = vsel %vm750, %v2421, %v2648
        %vm2659 = vcmask 261120
        %v2660 = vsel %vm2659, %v2658, %v2652
        %vm2661 = vcmask 392192
        %v2662 = vsel %vm2661, %v2660, %v2656
        %v2663 = vld [vmem:[%s20] sm:$0xff]
        %v2664 = vld [vmem:[%s20 + $0x8] sm:$0xff]
        %v2665 = vld [vmem:[%s20 + $0x10] sm:$0xff]
        %v2666 = vld [vmem:[%s20 + $0x18] sm:$0xff]
        %v2667 = vld [vmem:[%s20 + $0x20] sm:$0xff]
        %v2668 = vld [vmem:[%s20 + $0x28] sm:$0xff]
        %v2669 = vld [vmem:[%s20 + $0x30] sm:$0xff]
        %v2670 = vld [vmem:[%s20 + $0x38] sm:$0xff]
        %v2672 = vsel %vm1623, %v2662, 0
        %2674 = vmatprep.subr.mxu0 0.0
        %2675 = vmatpush1.msra.mxu0 0.0
        %2676 = vmatprep.subr.mxu0 0.0
        %2677 = vmatpush1.msra.mxu0 0.0
        %2678 = vmatprep.subr.mxu0 0.0
        %2679 = vmatpush1.msra.mxu0 0.0
        %2680 = vmatprep.subr.mxu0 0.0
        %2681 = vmatpush1.msra.mxu0 0.0
        %2682 = vmatprep.subr.mxu0 0.0
        %2683 = vmatpush1.msra.mxu0 0.0
        %2684 = vmatprep.subr.mxu0 0.0
        %2685 = vmatpush1.msra.mxu0 0.0
        %2686 = vmatprep.subr.mxu0 0.0
        %2687 = vmatpush1.msra.mxu0 0.0
        %2688 = vmatprep.subr.mxu0 0.0
        %2689 = vmatpush1.msra.mxu0 0.0
        %2690 = vmatprep.subr.mxu0 0.0
        %2691 = vmatpush1.msra.mxu0 %v2670
        %2692 = vmatprep.subr.mxu0 0.0
        %2693 = vmatpush1.msra.mxu0 %v2669
        %2694 = vmatprep.subr.mxu0 0.0
        %2695 = vmatpush1.msra.mxu0 %v2668
        %2696 = vmatprep.subr.mxu0 0.0
        %2697 = vmatpush1.msra.mxu0 %v2667
        %2698 = vmatprep.subr.mxu0 0.0
        %2699 = vmatpush1.msra.mxu0 %v2666
        %2700 = vmatprep.subr.mxu0 0.0
        %2701 = vmatpush1.msra.mxu0 %v2665
        %2702 = vmatprep.subr.mxu0 0.0
        %2703 = vmatpush1.msra.mxu0 %v2664
        %2704 = vmatprep.subr.mxu0 0.0
        %2705 = vmatpush1.msra.mxu0 %v2663
        %2706 = vmatprep.subr.mxu0 0.0
        %2707 = vmatpush2.msra.mxu0 0.0
        %2708 = vmatprep.subr.mxu0 0.0
        %2709 = vmatpush2.msra.mxu0 0.0
        %2710 = vmatprep.subr.mxu0 0.0
        %2711 = vmatpush2.msra.mxu0 0.0
        %2712 = vmatprep.subr.mxu0 0.0
        %2713 = vmatpush2.msra.mxu0 0.0
        %2714 = vmatprep.subr.mxu0 0.0
        %2715 = vmatpush2.msra.mxu0 0.0
        %2716 = vmatprep.subr.mxu0 0.0
        %2717 = vmatpush2.msra.mxu0 0.0
        %2718 = vmatprep.subr.mxu0 0.0
        %2719 = vmatpush2.msra.mxu0 0.0
        %2720 = vmatprep.subr.mxu0 0.0
        %2721 = vmatpush2.msra.mxu0 0.0
        %2722 = vmatprep.subr.mxu0 0.0
        %2723 = vmatpush2.msra.mxu0 0.0
        %2724 = vmatprep.subr.mxu0 0.0
        %2725 = vmatpush2.msra.mxu0 0.0
        %2726 = vmatprep.subr.mxu0 0.0
        %2727 = vmatpush2.msra.mxu0 0.0
        %2728 = vmatprep.subr.mxu0 0.0
        %2729 = vmatpush2.msra.mxu0 0.0
        %2730 = vmatprep.subr.mxu0 0.0
        %2731 = vmatpush2.msra.mxu0 0.0
        %2732 = vmatprep.subr.mxu0 0.0
        %2733 = vmatpush2.msra.mxu0 0.0
        %2734 = vmatprep.subr.mxu0 0.0
        %2735 = vmatpush2.msra.mxu0 0.0
        %2736 = vmatprep.subr.mxu0 0.0
        %2737 = vmatpush2.msra.mxu0 0.0
        %2738 = vmatprep.mubr.f32.mxu0 0.0
        %2739 = vmatmul.mubr.f32.gmra.mxu0 %v2672
        %v2740 = vpop.f32.mrf.mxu0
        %v2741 = vadd.f32 0.0, %v2740
        %v2742 = vpop.f32.mrf.mxu0
        %2743 = vdwg.mxu0
        %v2744 = vsel %vm1623, %v2741, 0.0
        %2745 = vadd.xlane.f32.xlu0 %v2744
        %v2746 = vpop.xlane.xlu0 %2745
        %v2747 = vmul.f32 %v2746, 0.015625
        %v2748 = vsub.f32 %v2741, %v2747
        %v2749 = vmul.f32 %v2748, %v2748
        %v2750 = vsel %vm1623, %v2749, 0.0
        %2751 = vadd.xlane.f32.xlu0 %v2750
        %v2752 = vpop.xlane.xlu0 %2751
        %v2753 = vmul.f32 %v2752, 0.015625
        %v2754 = vadd.f32 %v2753, 1e-05
        %v2755 = vrsqrt.pop %v2754
        %v2756 = vmul.f32 %v2748, %v2755
        %vm2757 = vcmp.ge.f32.partialorder %v2756, 0.0
        %v2758 = vmul.f32 %v2756, 0.2
        %v2759 = vsel %vm2757, %v2756, %v2758
        %2761 = vrot.lane.b32.xlu0 %v2759, 73
        %v2762 = vpop.permute.xlu0 %2761
        %2763 = vrot.lane.b32.xlu0 %v1795, 73
        %v2764 = vpop.permute.xlu0 %2763
        %2767 = vrot.lane.b32.xlu0 %v2759, 9
        %v2768 = vpop.permute.xlu0 %2767
        %2769 = vrot.lane.b32.xlu0 %v1795, 9
        %v2770 = vpop.permute.xlu0 %2769
        %v2773 = vsel %vm980, %v2762, %v2768
        %v2774 = vsel %vm980, %v2764, %v2770
        %v2775 = vmul.f32 %v2773, %v1431
        %v2776 = vmul.f32 %v2774, %v1431
        %2777 = vrot.lane.b32.xlu0 %v2759, 72
        %v2778 = vpop.permute.xlu0 %2777
        %2779 = vrot.lane.b32.xlu0 %v1795, 72
        %v2780 = vpop.permute.xlu0 %2779
        %2783 = vrot.lane.b32.xlu0 %v2759, 8
        %v2784 = vpop.permute.xlu0 %2783
        %2785 = vrot.lane.b32.xlu0 %v1795, 8
        %v2786 = vpop.permute.xlu0 %2785
        %v2789 = vsel %vm1439, %v2778, %v2784
        %v2790 = vsel %vm1439, %v2780, %v2786
        %v2791 = vmul.f32 %v2789, %v1445
        %v2792 = vmul.f32 %v2790, %v1445
        %2793 = vrot.lane.b32.xlu0 %v2759, 71
        %v2794 = vpop.permute.xlu0 %2793
        %2795 = vrot.lane.b32.xlu0 %v1795, 71
        %v2796 = vpop.permute.xlu0 %2795
        %2799 = vrot.lane.b32.xlu0 %v2759, 7
        %v2800 = vpop.permute.xlu0 %2799
        %2801 = vrot.lane.b32.xlu0 %v1795, 7
        %v2802 = vpop.permute.xlu0 %2801
        %v2805 = vsel %vm1453, %v2794, %v2800
        %v2806 = vsel %vm1453, %v2796, %v2802
        %v2807 = vmul.f32 %v2805, %v1459
        %v2808 = vmul.f32 %v2806, %v1459
        %2809 = vrot.lane.b32.xlu0 %v2759, 65
        %v2810 = vpop.permute.xlu0 %2809
        %2811 = vrot.lane.b32.xlu0 %v1795, 65
        %v2812 = vpop.permute.xlu0 %2811
        %2815 = vrot.lane.b32.xlu0 %v2759, 1
        %v2816 = vpop.permute.xlu0 %2815
        %2817 = vrot.lane.b32.xlu0 %v1795, 1
        %v2818 = vpop.permute.xlu0 %2817
        %v2821 = vsel %vm800, %v2810, %v2816
        %v2822 = vsel %vm800, %v2812, %v2818
        %v2823 = vmul.f32 %v2821, %v1472
        %v2824 = vmul.f32 %v2822, %v1472
        %2825 = vrot.lane.b32.xlu0 %v2759, 127
        %v2826 = vpop.permute.xlu0 %2825
        %2827 = vrot.lane.b32.xlu0 %v1795, 127
        %v2828 = vpop.permute.xlu0 %2827
        %2831 = vrot.lane.b32.xlu0 %v2759, 63
        %v2832 = vpop.permute.xlu0 %2831
        %2833 = vrot.lane.b32.xlu0 %v1795, 63
        %v2834 = vpop.permute.xlu0 %2833
        %v2837 = vsel %vm1480, %v2826, %v2832
        %v2838 = vsel %vm1480, %v2828, %v2834
        %v2839 = vmul.f32 %v2837, %v1486
        %v2840 = vmul.f32 %v2838, %v1486
        %2841 = vrot.lane.b32.xlu0 %v2759, 121
        %v2842 = vpop.permute.xlu0 %2841
        %2843 = vrot.lane.b32.xlu0 %v1795, 121
        %v2844 = vpop.permute.xlu0 %2843
        %2847 = vrot.lane.b32.xlu0 %v2759, 57
        %v2848 = vpop.permute.xlu0 %2847
        %2849 = vrot.lane.b32.xlu0 %v1795, 57
        %v2850 = vpop.permute.xlu0 %2849
        %v2853 = vsel %vm1494, %v2842, %v2848
        %v2854 = vsel %vm1494, %v2844, %v2850
        %v2855 = vmul.f32 %v2853, %v1500
        %v2856 = vmul.f32 %v2854, %v1500
        %2857 = vrot.lane.b32.xlu0 %v2759, 120
        %v2858 = vpop.permute.xlu0 %2857
        %2859 = vrot.lane.b32.xlu0 %v1795, 120
        %v2860 = vpop.permute.xlu0 %2859
        %2863 = vrot.lane.b32.xlu0 %v2759, 56
        %v2864 = vpop.permute.xlu0 %2863
        %2865 = vrot.lane.b32.xlu0 %v1795, 56
        %v2866 = vpop.permute.xlu0 %2865
        %v2869 = vsel %vm1508, %v2858, %v2864
        %v2870 = vsel %vm1508, %v2860, %v2866
        %v2871 = vmul.f32 %v2869, %v1514
        %v2872 = vmul.f32 %v2870, %v1514
        %2873 = vrot.lane.b32.xlu0 %v2759, 119
        %v2874 = vpop.permute.xlu0 %2873
        %2875 = vrot.lane.b32.xlu0 %v1795, 119
        %v2876 = vpop.permute.xlu0 %2875
        %2879 = vrot.lane.b32.xlu0 %v2759, 55
        %v2880 = vpop.permute.xlu0 %2879
        %2881 = vrot.lane.b32.xlu0 %v1795, 55
        %v2882 = vpop.permute.xlu0 %2881
        %v2885 = vsel %vm1522, %v2874, %v2880
        %v2886 = vsel %vm1522, %v2876, %v2882
        %v2887 = vmul.f32 %v2885, %v1528
        %v2888 = vmul.f32 %v2886, %v1528
        %v2889 = vld [vmem:[%s8] sm:$0xff]
        %v2890 = vld [vmem:[%s8 + $0x8] sm:$0xff]
        %v2892 = vsel %vm750, %v2890, 0
        %2894 = vmatprep.subr.mxu0 0.0
        %2895 = vmatpush1.msra.mxu0 %v2872
        %2896 = vmatprep.subr.mxu0 0.0
        %2897 = vmatpush1.msra.mxu0 %v2871
        %2898 = vmatprep.subr.mxu0 0.0
        %2899 = vmatpush1.msra.mxu0 %v2856
        %2900 = vmatprep.subr.mxu0 0.0
        %2901 = vmatpush1.msra.mxu0 %v2855
        %2902 = vmatprep.subr.mxu0 0.0
        %2903 = vmatpush1.msra.mxu0 %v2840
        %2904 = vmatprep.subr.mxu0 0.0
        %2905 = vmatpush1.msra.mxu0 %v2839
        %2906 = vmatprep.subr.mxu0 0.0
        %2907 = vmatpush1.msra.mxu0 %v1795
        %2908 = vmatprep.subr.mxu0 0.0
        %2909 = vmatpush1.msra.mxu0 %v2759
        %2910 = vmatprep.subr.mxu0 0.0
        %2911 = vmatpush1.msra.mxu0 %v2824
        %2912 = vmatprep.subr.mxu0 0.0
        %2913 = vmatpush1.msra.mxu0 %v2823
        %2914 = vmatprep.subr.mxu0 0.0
        %2915 = vmatpush1.msra.mxu0 %v2808
        %2916 = vmatprep.subr.mxu0 0.0
        %2917 = vmatpush1.msra.mxu0 %v2807
        %2918 = vmatprep.subr.mxu0 0.0
        %2919 = vmatpush1.msra.mxu0 %v2792
        %2920 = vmatprep.subr.mxu0 0.0
        %2921 = vmatpush1.msra.mxu0 %v2791
        %2922 = vmatprep.subr.mxu0 0.0
        %2923 = vmatpush1.msra.mxu0 %v2776
        %2924 = vmatprep.subr.mxu0 0.0
        %2925 = vmatpush1.msra.mxu0 %v2775
        %2926 = vmatprep.subr.mxu0 0.0
        %2927 = vmatpush2.msra.mxu0 0.0
        %2928 = vmatprep.subr.mxu0 0.0
        %2929 = vmatpush2.msra.mxu0 0.0
        %2930 = vmatprep.subr.mxu0 0.0
        %2931 = vmatpush2.msra.mxu0 0.0
        %2932 = vmatprep.subr.mxu0 0.0
        %2933 = vmatpush2.msra.mxu0 0.0
        %2934 = vmatprep.subr.mxu0 0.0
        %2935 = vmatpush2.msra.mxu0 0.0
        %2936 = vmatprep.subr.mxu0 0.0
        %2937 = vmatpush2.msra.mxu0 0.0
        %2938 = vmatprep.subr.mxu0 0.0
        %2939 = vmatpush2.msra.mxu0 0.0
        %2940 = vmatprep.subr.mxu0 0.0
        %2941 = vmatpush2.msra.mxu0 0.0
        %2942 = vmatprep.subr.mxu0 0.0
        %2943 = vmatpush2.msra.mxu0 0.0
        %2944 = vmatprep.subr.mxu0 0.0
        %2945 = vmatpush2.msra.mxu0 0.0
        %2946 = vmatprep.subr.mxu0 0.0
        %2947 = vmatpush2.msra.mxu0 0.0
        %2948 = vmatprep.subr.mxu0 0.0
        %2949 = vmatpush2.msra.mxu0 0.0
        %2950 = vmatprep.subr.mxu0 0.0
        %2951 = vmatpush2.msra.mxu0 0.0
        %2952 = vmatprep.subr.mxu0 0.0
        %2953 = vmatpush2.msra.mxu0 0.0
        %2954 = vmatprep.subr.mxu0 0.0
        %2955 = vmatpush2.msra.mxu0 %v2888
        %2956 = vmatprep.subr.mxu0 0.0
        %2957 = vmatpush2.msra.mxu0 %v2887
        %2958 = vmatprep.mubr.f32.mxu0 %v2892
        %2959 = vmatmul.mubr.f32.gmra.mxu0 %v2889
        %v2960 = vpop.f32.mrf.mxu0
        %v2961 = vadd.f32 0.0, %v2960
        %v2962 = vpop.f32.mrf.mxu0
        %2963 = vdwg.mxu0
        %v2964 = vsel %vm1623, %v2961, 0.0
        %2965 = vadd.xlane.f32.xlu0 %v2964
        %v2966 = vpop.xlane.xlu0 %2965
        %v2967 = vmul.f32 %v2966, 0.015625
        %v2968 = vsub.f32 %v2961, %v2967
        %v2969 = vmul.f32 %v2968, %v2968
        %v2970 = vsel %vm1623, %v2969, 0.0
        %2971 = vadd.xlane.f32.xlu0 %v2970
        %v2972 = vpop.xlane.xlu0 %2971
        %v2973 = vmul.f32 %v2972, 0.015625
        %v2974 = vadd.f32 %v2973, 1e-05
        %v2975 = vrsqrt.pop %v2974
        %v2976 = vmul.f32 %v2968, %v2975
        %vm2977 = vcmp.ge.f32.partialorder %v2976, 0.0
        %v2978 = vmul.f32 %v2976, 0.2
        %v2979 = vsel %vm2977, %v2976, %v2978
        %2981 = vrot.lane.b32.xlu0 %v2979, 73
        %v2982 = vpop.permute.xlu0 %2981
        %2984 = vrot.lane.b32.xlu0 %v2979, 9
        %v2985 = vpop.permute.xlu0 %2984
        %v2987 = vsel %vm980, %v2982, %v2985
        %v2988 = vmul.f32 %v2987, %v1431
        %2989 = vrot.lane.b32.xlu0 %v2979, 72
        %v2990 = vpop.permute.xlu0 %2989
        %2992 = vrot.lane.b32.xlu0 %v2979, 8
        %v2993 = vpop.permute.xlu0 %2992
        %v2995 = vsel %vm1439, %v2990, %v2993
        %v2996 = vmul.f32 %v2995, %v1445
        %2997 = vrot.lane.b32.xlu0 %v2979, 71
        %v2998 = vpop.permute.xlu0 %2997
        %3000 = vrot.lane.b32.xlu0 %v2979, 7
        %v3001 = vpop.permute.xlu0 %3000
        %v3003 = vsel %vm1453, %v2998, %v3001
        %v3004 = vmul.f32 %v3003, %v1459
        %3005 = vrot.lane.b32.xlu0 %v2979, 65
        %v3006 = vpop.permute.xlu0 %3005
        %3008 = vrot.lane.b32.xlu0 %v2979, 1
        %v3009 = vpop.permute.xlu0 %3008
        %v3011 = vsel %vm800, %v3006, %v3009
        %v3012 = vmul.f32 %v3011, %v1472
        %3013 = vrot.lane.b32.xlu0 %v2979, 127
        %v3014 = vpop.permute.xlu0 %3013
        %3016 = vrot.lane.b32.xlu0 %v2979, 63
        %v3017 = vpop.permute.xlu0 %3016
        %v3019 = vsel %vm1480, %v3014, %v3017
        %v3020 = vmul.f32 %v3019, %v1486
        %3021 = vrot.lane.b32.xlu0 %v2979, 121
        %v3022 = vpop.permute.xlu0 %3021
        %3024 = vrot.lane.b32.xlu0 %v2979, 57
        %v3025 = vpop.permute.xlu0 %3024
        %v3027 = vsel %vm1494, %v3022, %v3025
        %v3028 = vmul.f32 %v3027, %v1500
        %3029 = vrot.lane.b32.xlu0 %v2979, 120
        %v3030 = vpop.permute.xlu0 %3029
        %3032 = vrot.lane.b32.xlu0 %v2979, 56
        %v3033 = vpop.permute.xlu0 %3032
        %v3035 = vsel %vm1508, %v3030, %v3033
        %v3036 = vmul.f32 %v3035, %v1514
        %3037 = vrot.lane.b32.xlu0 %v2979, 119
        %v3038 = vpop.permute.xlu0 %3037
        %3040 = vrot.lane.b32.xlu0 %v2979, 55
        %v3041 = vpop.permute.xlu0 %3040
        %v3043 = vsel %vm1522, %v3038, %v3041
        %v3044 = vmul.f32 %v3043, %v1528
        %v3045 = vld [vmem:[%s9] sm:$0xff]
        %v3047 = vsel %vm1706, %v3045, 0
        %3049 = vmatprep.subr.mxu0 0.0
        %3050 = vmatpush1.msra.mxu0 0.0
        %3051 = vmatprep.subr.mxu0 0.0
        %3052 = vmatpush1.msra.mxu0 0.0
        %3053 = vmatprep.subr.mxu0 0.0
        %3054 = vmatpush1.msra.mxu0 0.0
        %3055 = vmatprep.subr.mxu0 0.0
        %3056 = vmatpush1.msra.mxu0 0.0
        %3057 = vmatprep.subr.mxu0 0.0
        %3058 = vmatpush1.msra.mxu0 0.0
        %3059 = vmatprep.subr.mxu0 0.0
        %3060 = vmatpush1.msra.mxu0 0.0
        %3061 = vmatprep.subr.mxu0 0.0
        %3062 = vmatpush1.msra.mxu0 0.0
        %3063 = vmatprep.subr.mxu0 0.0
        %3064 = vmatpush1.msra.mxu0 %v3044
        %3065 = vmatprep.subr.mxu0 0.0
        %3066 = vmatpush1.msra.mxu0 %v3036
        %3067 = vmatprep.subr.mxu0 0.0
        %3068 = vmatpush1.msra.mxu0 %v3028
        %3069 = vmatprep.subr.mxu0 0.0
        %3070 = vmatpush1.msra.mxu0 %v3020
        %3071 = vmatprep.subr.mxu0 0.0
        %3072 = vmatpush1.msra.mxu0 %v2979
        %3073 = vmatprep.subr.mxu0 0.0
        %3074 = vmatpush1.msra.mxu0 %v3012
        %3075 = vmatprep.subr.mxu0 0.0
        %3076 = vmatpush1.msra.mxu0 %v3004
        %3077 = vmatprep.subr.mxu0 0.0
        %3078 = vmatpush1.msra.mxu0 %v2996
        %3079 = vmatprep.subr.mxu0 0.0
        %3080 = vmatpush1.msra.mxu0 %v2988
        %3081 = vmatprep.subr.mxu0 0.0
        %3082 = vmatpush2.msra.mxu0 0.0
        %3083 = vmatprep.subr.mxu0 0.0
        %3084 = vmatpush2.msra.mxu0 0.0
        %3085 = vmatprep.subr.mxu0 0.0
        %3086 = vmatpush2.msra.mxu0 0.0
        %3087 = vmatprep.subr.mxu0 0.0
        %3088 = vmatpush2.msra.mxu0 0.0
        %3089 = vmatprep.subr.mxu0 0.0
        %3090 = vmatpush2.msra.mxu0 0.0
        %3091 = vmatprep.subr.mxu0 0.0
        %3092 = vmatpush2.msra.mxu0 0.0
        %3093 = vmatprep.subr.mxu0 0.0
        %3094 = vmatpush2.msra.mxu0 0.0
        %3095 = vmatprep.subr.mxu0 0.0
        %3096 = vmatpush2.msra.mxu0 0.0
        %3097 = vmatprep.subr.mxu0 0.0
        %3098 = vmatpush2.msra.mxu0 0.0
        %3099 = vmatprep.subr.mxu0 0.0
        %3100 = vmatpush2.msra.mxu0 0.0
        %3101 = vmatprep.subr.mxu0 0.0
        %3102 = vmatpush2.msra.mxu0 0.0
        %3103 = vmatprep.subr.mxu0 0.0
        %3104 = vmatpush2.msra.mxu0 0.0
        %3105 = vmatprep.subr.mxu0 0.0
        %3106 = vmatpush2.msra.mxu0 0.0
        %3107 = vmatprep.subr.mxu0 0.0
        %3108 = vmatpush2.msra.mxu0 0.0
        %3109 = vmatprep.subr.mxu0 0.0
        %3110 = vmatpush2.msra.mxu0 0.0
        %3111 = vmatprep.subr.mxu0 0.0
        %3112 = vmatpush2.msra.mxu0 0.0
        %3113 = vmatprep.mubr.f32.mxu0 0.0
        %3114 = vmatmul.mubr.f32.gmra.mxu0 %v3047
        %v3115 = vpop.f32.mrf.mxu0
        %v3116 = vadd.f32 0.0, %v3115
        %v3117 = vpop.f32.mrf.mxu0
        %3118 = vdwg.mxu0
        %v3119 = vsel %vm1623, %v3116, 0.0
        %3120 = vadd.xlane.f32.xlu0 %v3119
        %v3121 = vpop.xlane.xlu0 %3120
        %v3122 = vmul.f32 %v3121, 0.015625
        %v3123 = vsub.f32 %v3116, %v3122
        %v3124 = vmul.f32 %v3123, %v3123
        %v3125 = vsel %vm1623, %v3124, 0.0
        %3126 = vadd.xlane.f32.xlu0 %v3125
        %v3127 = vpop.xlane.xlu0 %3126
        %v3128 = vmul.f32 %v3127, 0.015625
        %v3129 = vadd.f32 %v3128, 1e-05
        %v3130 = vrsqrt.pop %v3129
        %v3131 = vmul.f32 %v3123, %v3130
        %vm3132 = vcmp.ge.f32.partialorder %v3131, 0.0
        %v3133 = vmul.f32 %v3131, 0.2
        %v3134 = vsel %vm3132, %v3131, %v3133
        %v3135 = vld [vmem:[%s10] sm:$0xf]
        %v3137 = vsel %vm1439, %v3135, 0
        %3139 = vmatprep.subr.mxu0 0.0
        %3140 = vmatpush1.msra.mxu0 0.0
        %3141 = vmatprep.subr.mxu0 0.0
        %3142 = vmatpush1.msra.mxu0 0.0
        %3143 = vmatprep.subr.mxu0 0.0
        %3144 = vmatpush1.msra.mxu0 0.0
        %3145 = vmatprep.subr.mxu0 0.0
        %3146 = vmatpush1.msra.mxu0 0.0
        %3147 = vmatprep.subr.mxu0 0.0
        %3148 = vmatpush1.msra.mxu0 0.0
        %3149 = vmatprep.subr.mxu0 0.0
        %3150 = vmatpush1.msra.mxu0 0.0
        %3151 = vmatprep.subr.mxu0 0.0
        %3152 = vmatpush1.msra.mxu0 0.0
        %3153 = vmatprep.subr.mxu0 0.0
        %3154 = vmatpush1.msra.mxu0 0.0
        %3155 = vmatprep.subr.mxu0 0.0
        %3156 = vmatpush1.msra.mxu0 0.0
        %3157 = vmatprep.subr.mxu0 0.0
        %3158 = vmatpush1.msra.mxu0 0.0
        %3159 = vmatprep.subr.mxu0 0.0
        %3160 = vmatpush1.msra.mxu0 0.0
        %3161 = vmatprep.subr.mxu0 0.0
        %3162 = vmatpush1.msra.mxu0 0.0
        %3163 = vmatprep.subr.mxu0 0.0
        %3164 = vmatpush1.msra.mxu0 0.0
        %3165 = vmatprep.subr.mxu0 0.0
        %3166 = vmatpush1.msra.mxu0 0.0
        %3167 = vmatprep.subr.mxu0 0.0
        %3168 = vmatpush1.msra.mxu0 0.0
        %3169 = vmatprep.subr.mxu0 0.0
        %3170 = vmatpush1.msra.mxu0 %v3134
        %3171 = vmatprep.subr.mxu0 0.0
        %3172 = vmatpush2.msra.mxu0 0.0
        %3173 = vmatprep.subr.mxu0 0.0
        %3174 = vmatpush2.msra.mxu0 0.0
        %3175 = vmatprep.subr.mxu0 0.0
        %3176 = vmatpush2.msra.mxu0 0.0
        %3177 = vmatprep.subr.mxu0 0.0
        %3178 = vmatpush2.msra.mxu0 0.0
        %3179 = vmatprep.subr.mxu0 0.0
        %3180 = vmatpush2.msra.mxu0 0.0
        %3181 = vmatprep.subr.mxu0 0.0
        %3182 = vmatpush2.msra.mxu0 0.0
        %3183 = vmatprep.subr.mxu0 0.0
        %3184 = vmatpush2.msra.mxu0 0.0
        %3185 = vmatprep.subr.mxu0 0.0
        %3186 = vmatpush2.msra.mxu0 0.0
        %3187 = vmatprep.subr.mxu0 0.0
        %3188 = vmatpush2.msra.mxu0 0.0
        %3189 = vmatprep.subr.mxu0 0.0
        %3190 = vmatpush2.msra.mxu0 0.0
        %3191 = vmatprep.subr.mxu0 0.0
        %3192 = vmatpush2.msra.mxu0 0.0
        %3193 = vmatprep.subr.mxu0 0.0
        %3194 = vmatpush2.msra.mxu0 0.0
        %3195 = vmatprep.subr.mxu0 0.0
        %3196 = vmatpush2.msra.mxu0 0.0
        %3197 = vmatprep.subr.mxu0 0.0
        %3198 = vmatpush2.msra.mxu0 0.0
        %3199 = vmatprep.subr.mxu0 0.0
        %3200 = vmatpush2.msra.mxu0 0.0
        %3201 = vmatprep.subr.mxu0 0.0
        %3202 = vmatpush2.msra.mxu0 0.0
        %3203 = vmatprep.mubr.f32.mxu0 0.0
        %3204 = vmatmul.mubr.f32.gmra.mxu0 %v3137
        %v3205 = vpop.f32.mrf.mxu0
        %v3206 = vadd.f32 0.0, %v3205
        %v3207 = vpop.f32.mrf.mxu0
        %3208 = vdwg.mxu0
        %3209 = vrot.lane.b32.xlu0 %v3135, 120
        %v3210 = vpop.permute.xlu0 %3209
        %v3211 = vsel %vm1439, %v3210, 0
        %3213 = vmatprep.subr.mxu0 0.0
        %3214 = vmatpush1.msra.mxu0 0.0
        %3215 = vmatprep.subr.mxu0 0.0
        %3216 = vmatpush1.msra.mxu0 0.0
        %3217 = vmatprep.subr.mxu0 0.0
        %3218 = vmatpush1.msra.mxu0 0.0
        %3219 = vmatprep.subr.mxu0 0.0
        %3220 = vmatpush1.msra.mxu0 0.0
        %3221 = vmatprep.subr.mxu0 0.0
        %3222 = vmatpush1.msra.mxu0 0.0
        %3223 = vmatprep.subr.mxu0 0.0
        %3224 = vmatpush1.msra.mxu0 0.0
        %3225 = vmatprep.subr.mxu0 0.0
        %3226 = vmatpush1.msra.mxu0 0.0
        %3227 = vmatprep.subr.mxu0 0.0
        %3228 = vmatpush1.msra.mxu0 0.0
        %3229 = vmatprep.subr.mxu0 0.0
        %3230 = vmatpush1.msra.mxu0 0.0
        %3231 = vmatprep.subr.mxu0 0.0
        %3232 = vmatpush1.msra.mxu0 0.0
        %3233 = vmatprep.subr.mxu0 0.0
        %3234 = vmatpush1.msra.mxu0 0.0
        %3235 = vmatprep.subr.mxu0 0.0
        %3236 = vmatpush1.msra.mxu0 0.0
        %3237 = vmatprep.subr.mxu0 0.0
        %3238 = vmatpush1.msra.mxu0 0.0
        %3239 = vmatprep.subr.mxu0 0.0
        %3240 = vmatpush1.msra.mxu0 0.0
        %3241 = vmatprep.subr.mxu0 0.0
        %3242 = vmatpush1.msra.mxu0 0.0
        %3243 = vmatprep.subr.mxu0 0.0
        %3244 = vmatpush1.msra.mxu0 %v3134
        %3245 = vmatprep.subr.mxu0 0.0
        %3246 = vmatpush2.msra.mxu0 0.0
        %3247 = vmatprep.subr.mxu0 0.0
        %3248 = vmatpush2.msra.mxu0 0.0
        %3249 = vmatprep.subr.mxu0 0.0
        %3250 = vmatpush2.msra.mxu0 0.0
        %3251 = vmatprep.subr.mxu0 0.0
        %3252 = vmatpush2.msra.mxu0 0.0
        %3253 = vmatprep.subr.mxu0 0.0
        %3254 = vmatpush2.msra.mxu0 0.0
        %3255 = vmatprep.subr.mxu0 0.0
        %3256 = vmatpush2.msra.mxu0 0.0
        %3257 = vmatprep.subr.mxu0 0.0
        %3258 = vmatpush2.msra.mxu0 0.0
        %3259 = vmatprep.subr.mxu0 0.0
        %3260 = vmatpush2.msra.mxu0 0.0
        %3261 = vmatprep.subr.mxu0 0.0
        %3262 = vmatpush2.msra.mxu0 0.0
        %3263 = vmatprep.subr.mxu0 0.0
        %3264 = vmatpush2.msra.mxu0 0.0
        %3265 = vmatprep.subr.mxu0 0.0
        %3266 = vmatpush2.msra.mxu0 0.0
        %3267 = vmatprep.subr.mxu0 0.0
        %3268 = vmatpush2.msra.mxu0 0.0
        %3269 = vmatprep.subr.mxu0 0.0
        %3270 = vmatpush2.msra.mxu0 0.0
        %3271 = vmatprep.subr.mxu0 0.0
        %3272 = vmatpush2.msra.mxu0 0.0
        %3273 = vmatprep.subr.mxu0 0.0
        %3274 = vmatpush2.msra.mxu0 0.0
        %3275 = vmatprep.subr.mxu0 0.0
        %3276 = vmatpush2.msra.mxu0 0.0
        %3277 = vmatprep.mubr.f32.mxu0 0.0
        %3278 = vmatmul.mubr.f32.gmra.mxu0 %v3211
        %v3279 = vpop.f32.mrf.mxu0
        %v3280 = vadd.f32 0.0, %v3279
        %v3281 = vpop.f32.mrf.mxu0
        %3282 = vdwg.mxu0
        %3283 = vrot.lane.b32.xlu0 %v3135, 112
        %v3284 = vpop.permute.xlu0 %3283
        %v3285 = vsel %vm1439, %v3284, 0
        %3287 = vmatprep.subr.mxu0 0.0
        %3288 = vmatpush1.msra.mxu0 0.0
        %3289 = vmatprep.subr.mxu0 0.0
        %3290 = vmatpush1.msra.mxu0 0.0
        %3291 = vmatprep.subr.mxu0 0.0
        %3292 = vmatpush1.msra.mxu0 0.0
        %3293 = vmatprep.subr.mxu0 0.0
        %3294 = vmatpush1.msra.mxu0 0.0
        %3295 = vmatprep.subr.mxu0 0.0
        %3296 = vmatpush1.msra.mxu0 0.0
        %3297 = vmatprep.subr.mxu0 0.0
        %3298 = vmatpush1.msra.mxu0 0.0
        %3299 = vmatprep.subr.mxu0 0.0
        %3300 = vmatpush1.msra.mxu0 0.0
        %3301 = vmatprep.subr.mxu0 0.0
        %3302 = vmatpush1.msra.mxu0 0.0
        %3303 = vmatprep.subr.mxu0 0.0
        %3304 = vmatpush1.msra.mxu0 0.0
        %3305 = vmatprep.subr.mxu0 0.0
        %3306 = vmatpush1.msra.mxu0 0.0
        %3307 = vmatprep.subr.mxu0 0.0
        %3308 = vmatpush1.msra.mxu0 0.0
        %3309 = vmatprep.subr.mxu0 0.0
        %3310 = vmatpush1.msra.mxu0 0.0
        %3311 = vmatprep.subr.mxu0 0.0
        %3312 = vmatpush1.msra.mxu0 0.0
        %3313 = vmatprep.subr.mxu0 0.0
        %3314 = vmatpush1.msra.mxu0 0.0
        %3315 = vmatprep.subr.mxu0 0.0
        %3316 = vmatpush1.msra.mxu0 0.0
        %3317 = vmatprep.subr.mxu0 0.0
        %3318 = vmatpush1.msra.mxu0 %v3134
        %3319 = vmatprep.subr.mxu0 0.0
        %3320 = vmatpush2.msra.mxu0 0.0
        %3321 = vmatprep.subr.mxu0 0.0
        %3322 = vmatpush2.msra.mxu0 0.0
        %3323 = vmatprep.subr.mxu0 0.0
        %3324 = vmatpush2.msra.mxu0 0.0
        %3325 = vmatprep.subr.mxu0 0.0
        %3326 = vmatpush2.msra.mxu0 0.0
        %3327 = vmatprep.subr.mxu0 0.0
        %3328 = vmatpush2.msra.mxu0 0.0
        %3329 = vmatprep.subr.mxu0 0.0
        %3330 = vmatpush2.msra.mxu0 0.0
        %3331 = vmatprep.subr.mxu0 0.0
        %3332 = vmatpush2.msra.mxu0 0.0
        %3333 = vmatprep.subr.mxu0 0.0
        %3334 = vmatpush2.msra.mxu0 0.0
        %3335 = vmatprep.subr.mxu0 0.0
        %3336 = vmatpush2.msra.mxu0 0.0
        %3337 = vmatprep.subr.mxu0 0.0
        %3338 = vmatpush2.msra.mxu0 0.0
        %3339 = vmatprep.subr.mxu0 0.0
        %3340 = vmatpush2.msra.mxu0 0.0
        %3341 = vmatprep.subr.mxu0 0.0
        %3342 = vmatpush2.msra.mxu0 0.0
        %3343 = vmatprep.subr.mxu0 0.0
        %3344 = vmatpush2.msra.mxu0 0.0
        %3345 = vmatprep.subr.mxu0 0.0
        %3346 = vmatpush2.msra.mxu0 0.0
        %3347 = vmatprep.subr.mxu0 0.0
        %3348 = vmatpush2.msra.mxu0 0.0
        %3349 = vmatprep.subr.mxu0 0.0
        %3350 = vmatpush2.msra.mxu0 0.0
        %3351 = vmatprep.mubr.f32.mxu0 0.0
        %3352 = vmatmul.mubr.f32.gmra.mxu0 %v3285
        %v3353 = vpop.f32.mrf.mxu0
        %v3354 = vadd.f32 0.0, %v3353
        %v3355 = vpop.f32.mrf.mxu0
        %3356 = vdwg.mxu0
        %3357 = vrot.lane.b32.xlu0 %v3135, 104
        %v3358 = vpop.permute.xlu0 %3357
        %v3359 = vsel %vm1439, %v3358, 0
        %3361 = vmatprep.subr.mxu0 0.0
        %3362 = vmatpush1.msra.mxu0 0.0
        %3363 = vmatprep.subr.mxu0 0.0
        %3364 = vmatpush1.msra.mxu0 0.0
        %3365 = vmatprep.subr.mxu0 0.0
        %3366 = vmatpush1.msra.mxu0 0.0
        %3367 = vmatprep.subr.mxu0 0.0
        %3368 = vmatpush1.msra.mxu0 0.0
        %3369 = vmatprep.subr.mxu0 0.0
        %3370 = vmatpush1.msra.mxu0 0.0
        %3371 = vmatprep.subr.mxu0 0.0
        %3372 = vmatpush1.msra.mxu0 0.0
        %3373 = vmatprep.subr.mxu0 0.0
        %3374 = vmatpush1.msra.mxu0 0.0
        %3375 = vmatprep.subr.mxu0 0.0
        %3376 = vmatpush1.msra.mxu0 0.0
        %3377 = vmatprep.subr.mxu0 0.0
        %3378 = vmatpush1.msra.mxu0 0.0
        %3379 = vmatprep.subr.mxu0 0.0
        %3380 = vmatpush1.msra.mxu0 0.0
        %3381 = vmatprep.subr.mxu0 0.0
        %3382 = vmatpush1.msra.mxu0 0.0
        %3383 = vmatprep.subr.mxu0 0.0
        %3384 = vmatpush1.msra.mxu0 0.0
        %3385 = vmatprep.subr.mxu0 0.0
        %3386 = vmatpush1.msra.mxu0 0.0
        %3387 = vmatprep.subr.mxu0 0.0
        %3388 = vmatpush1.msra.mxu0 0.0
        %3389 = vmatprep.subr.mxu0 0.0
        %3390 = vmatpush1.msra.mxu0 0.0
        %3391 = vmatprep.subr.mxu0 0.0
        %3392 = vmatpush1.msra.mxu0 %v3134
        %3393 = vmatprep.subr.mxu0 0.0
        %3394 = vmatpush2.msra.mxu0 0.0
        %3395 = vmatprep.subr.mxu0 0.0
        %3396 = vmatpush2.msra.mxu0 0.0
        %3397 = vmatprep.subr.mxu0 0.0
        %3398 = vmatpush2.msra.mxu0 0.0
        %3399 = vmatprep.subr.mxu0 0.0
        %3400 = vmatpush2.msra.mxu0 0.0
        %3401 = vmatprep.subr.mxu0 0.0
        %3402 = vmatpush2.msra.mxu0 0.0
        %3403 = vmatprep.subr.mxu0 0.0
        %3404 = vmatpush2.msra.mxu0 0.0
        %3405 = vmatprep.subr.mxu0 0.0
        %3406 = vmatpush2.msra.mxu0 0.0
        %3407 = vmatprep.subr.mxu0 0.0
        %3408 = vmatpush2.msra.mxu0 0.0
        %3409 = vmatprep.subr.mxu0 0.0
        %3410 = vmatpush2.msra.mxu0 0.0
        %3411 = vmatprep.subr.mxu0 0.0
        %3412 = vmatpush2.msra.mxu0 0.0
        %3413 = vmatprep.subr.mxu0 0.0
        %3414 = vmatpush2.msra.mxu0 0.0
        %3415 = vmatprep.subr.mxu0 0.0
        %3416 = vmatpush2.msra.mxu0 0.0
        %3417 = vmatprep.subr.mxu0 0.0
        %3418 = vmatpush2.msra.mxu0 0.0
        %3419 = vmatprep.subr.mxu0 0.0
        %3420 = vmatpush2.msra.mxu0 0.0
        %3421 = vmatprep.subr.mxu0 0.0
        %3422 = vmatpush2.msra.mxu0 0.0
        %3423 = vmatprep.subr.mxu0 0.0
        %3424 = vmatpush2.msra.mxu0 0.0
        %3425 = vmatprep.mubr.f32.mxu0 0.0
        %3426 = vmatmul.mubr.f32.gmra.mxu0 %v3359
        %v3427 = vpop.f32.mrf.mxu0
        %v3428 = vadd.f32 0.0, %v3427
        %v3429 = vpop.f32.mrf.mxu0
        %3430 = vdwg.mxu0
        %3432 = vrot.lane.b32.xlu0 %v3280, 64
        %v3433 = vpop.permute.xlu0 %3432
        %3436 = vrot.lane.b32.xlu0 %v3428, 64
        %v3437 = vpop.permute.xlu0 %3436
        %v3439 = vsel %vm1623, %v3206, %v3433
        %v3440 = vsel %vm1623, %v3354, %v3437
        %v3441 = vld [vmem:[%s21] sm:$0xff]
        %v3442 = vld [vmem:[%s21 + $0x8] sm:$0xff]
        %v3443 = vld [vmem:[%s21 + $0x10] sm:$0xff]
        %v3444 = vld [vmem:[%s21 + $0x18] sm:$0xff]
        %v3445 = vld [vmem:[%s21 + $0x20] sm:$0xff]
        %v3446 = vld [vmem:[%s21 + $0x28] sm:$0xff]
        %v3447 = vld [vmem:[%s21 + $0x30] sm:$0xff]
        %v3448 = vld [vmem:[%s21 + $0x38] sm:$0xff]
        %v3449 = vld [vmem:[%s21 + $0x40] sm:$0xff]
        %v3450 = vld [vmem:[%s21 + $0x48] sm:$0xff]
        %v3451 = vld [vmem:[%s21 + $0x50] sm:$0xff]
        %v3452 = vld [vmem:[%s21 + $0x58] sm:$0xff]
        %v3453 = vld [vmem:[%s21 + $0x60] sm:$0xff]
        %v3454 = vld [vmem:[%s21 + $0x68] sm:$0xff]
        %v3455 = vld [vmem:[%s21 + $0x70] sm:$0xff]
        %v3456 = vld [vmem:[%s21 + $0x78] sm:$0xff]
        %v3457 = vld [vmem:[%s21 + $0x80] sm:$0xff]
        %v3458 = vld [vmem:[%s21 + $0x88] sm:$0xff]
        %v3459 = vld [vmem:[%s21 + $0x90] sm:$0xff]
        %v3460 = vld [vmem:[%s21 + $0x98] sm:$0xff]
        %v3461 = vld [vmem:[%s21 + $0xa0] sm:$0xff]
        %v3462 = vld [vmem:[%s21 + $0xa8] sm:$0xff]
        %v3463 = vld [vmem:[%s21 + $0xb0] sm:$0xff]
        %v3464 = vld [vmem:[%s21 + $0xb8] sm:$0xff]
        %v3465 = vld [vmem:[%s21 + $0xc0] sm:$0xff]
        %v3466 = vld [vmem:[%s21 + $0xc8] sm:$0xff]
        %v3467 = vld [vmem:[%s21 + $0xd0] sm:$0xff]
        %v3468 = vld [vmem:[%s21 + $0xd8] sm:$0xff]
        %v3469 = vld [vmem:[%s21 + $0xe0] sm:$0xff]
        %v3470 = vld [vmem:[%s21 + $0xe8] sm:$0xff]
        %v3471 = vld [vmem:[%s21 + $0xf0] sm:$0xff]
        %v3472 = vld [vmem:[%s21 + $0xf8] sm:$0xff]
        %v3473 = vld [vmem:[%s21 + $0x100] sm:$0xff]
        %v3474 = vld [vmem:[%s21 + $0x108] sm:$0xff]
        %v3475 = vld [vmem:[%s21 + $0x110] sm:$0xff]
        %v3476 = vld [vmem:[%s21 + $0x118] sm:$0xff]
        %v3477 = vld [vmem:[%s21 + $0x120] sm:$0xff]
        %v3478 = vld [vmem:[%s21 + $0x128] sm:$0xff]
        %v3479 = vld [vmem:[%s21 + $0x130] sm:$0xff]
        %v3480 = vld [vmem:[%s21 + $0x138] sm:$0xff]
        %v3481 = vld [vmem:[%s21 + $0x140] sm:$0xff]
        %v3482 = vld [vmem:[%s21 + $0x148] sm:$0xff]
        %v3483 = vld [vmem:[%s21 + $0x150] sm:$0xff]
        %v3484 = vld [vmem:[%s21 + $0x158] sm:$0xff]
        %v3485 = vld [vmem:[%s21 + $0x160] sm:$0xff]
        %v3486 = vld [vmem:[%s21 + $0x168] sm:$0xff]
        %v3487 = vld [vmem:[%s21 + $0x170] sm:$0xff]
        %v3488 = vld [vmem:[%s21 + $0x178] sm:$0xff]
        %v3489 = vld [vmem:[%s21 + $0x180] sm:$0xff]
        %v3490 = vld [vmem:[%s21 + $0x188] sm:$0xff]
        %v3491 = vld [vmem:[%s21 + $0x190] sm:$0xff]
        %v3492 = vld [vmem:[%s21 + $0x198] sm:$0xff]
        %v3493 = vld [vmem:[%s21 + $0x1a0] sm:$0xff]
        %v3494 = vld [vmem:[%s21 + $0x1a8] sm:$0xff]
        %v3495 = vld [vmem:[%s21 + $0x1b0] sm:$0xff]
        %v3496 = vld [vmem:[%s21 + $0x1b8] sm:$0xff]
        %v3497 = vld [vmem:[%s21 + $0x1c0] sm:$0xff]
        %v3498 = vld [vmem:[%s21 + $0x1c8] sm:$0xff]
        %v3499 = vld [vmem:[%s21 + $0x1d0] sm:$0xff]
        %v3500 = vld [vmem:[%s21 + $0x1d8] sm:$0xff]
        %v3501 = vld [vmem:[%s21 + $0x1e0] sm:$0xff]
        %v3502 = vld [vmem:[%s21 + $0x1e8] sm:$0xff]
        %v3503 = vld [vmem:[%s21 + $0x1f0] sm:$0xff]
        %v3504 = vld [vmem:[%s21 + $0x1f8] sm:$0xff]
        %3505 = vmatprep.subr.mxu0 %v3472
        %3506 = vmatpush1.msra.mxu0 %v3471
        %3507 = vmatprep.subr.mxu0 %v3470
        %3508 = vmatpush1.msra.mxu0 %v3469
        %3509 = vmatprep.subr.mxu0 %v3468
        %3510 = vmatpush1.msra.mxu0 %v3467
        %3511 = vmatprep.subr.mxu0 %v3466
        %3512 = vmatpush1.msra.mxu0 %v3465
        %3513 = vmatprep.subr.mxu0 %v3464
        %3514 = vmatpush1.msra.mxu0 %v3463
        %3515 = vmatprep.subr.mxu0 %v3462
        %3516 = vmatpush1.msra.mxu0 %v3461
        %3517 = vmatprep.subr.mxu0 %v3460
        %3518 = vmatpush1.msra.mxu0 %v3459
        %3519 = vmatprep.subr.mxu0 %v3458
        %3520 = vmatpush1.msra.mxu0 %v3457
        %3521 = vmatprep.subr.mxu0 %v3456
        %3522 = vmatpush1.msra.mxu0 %v3455
        %3523 = vmatprep.subr.mxu0 %v3454
        %3524 = vmatpush1.msra.mxu0 %v3453
        %3525 = vmatprep.subr.mxu0 %v3452
        %3526 = vmatpush1.msra.mxu0 %v3451
        %3527 = vmatprep.subr.mxu0 %v3450
        %3528 = vmatpush1.msra.mxu0 %v3449
        %3529 = vmatprep.subr.mxu0 %v3448
        %3530 = vmatpush1.msra.mxu0 %v3447
        %3531 = vmatprep.subr.mxu0 %v3446
        %3532 = vmatpush1.msra.mxu0 %v3445
        %3533 = vmatprep.subr.mxu0 %v3444
        %3534 = vmatpush1.msra.mxu0 %v3443
        %3535 = vmatprep.subr.mxu0 %v3442
        %3536 = vmatpush1.msra.mxu0 %v3441
        %3537 = vmatprep.subr.mxu0 %v3504
        %3538 = vmatpush2.msra.mxu0 %v3503
        %3539 = vmatprep.subr.mxu0 %v3502
        %3540 = vmatpush2.msra.mxu0 %v3501
        %3541 = vmatprep.subr.mxu0 %v3500
        %3542 = vmatpush2.msra.mxu0 %v3499
        %3543 = vmatprep.subr.mxu0 %v3498
        %3544 = vmatpush2.msra.mxu0 %v3497
        %3545 = vmatprep.subr.mxu0 %v3496
        %3546 = vmatpush2.msra.mxu0 %v3495
        %3547 = vmatprep.subr.mxu0 %v3494
        %3548 = vmatpush2.msra.mxu0 %v3493
        %3549 = vmatprep.subr.mxu0 %v3492
        %3550 = vmatpush2.msra.mxu0 %v3491
        %3551 = vmatprep.subr.mxu0 %v3490
        %3552 = vmatpush2.msra.mxu0 %v3489
        %3553 = vmatprep.subr.mxu0 %v3488
        %3554 = vmatpush2.msra.mxu0 %v3487
        %3555 = vmatprep.subr.mxu0 %v3486
        %3556 = vmatpush2.msra.mxu0 %v3485
        %3557 = vmatprep.subr.mxu0 %v3484
        %3558 = vmatpush2.msra.mxu0 %v3483
        %3559 = vmatprep.subr.mxu0 %v3482
        %3560 = vmatpush2.msra.mxu0 %v3481
        %3561 = vmatprep.subr.mxu0 %v3480
        %3562 = vmatpush2.msra.mxu0 %v3479
        %3563 = vmatprep.subr.mxu0 %v3478
        %3564 = vmatpush2.msra.mxu0 %v3477
        %3565 = vmatprep.subr.mxu0 %v3476
        %3566 = vmatpush2.msra.mxu0 %v3475
        %3567 = vmatprep.subr.mxu0 %v3474
        %3568 = vmatpush2.msra.mxu0 %v3473
        %3569 = vmatprep.mubr.f32.mxu0 %v3440
        %3570 = vmatmul.mubr.f32.gmra.mxu0 %v3439
        %v3571 = vpop.f32.mrf.mxu0
        %v3572 = vadd.f32 0.0, %v3571
        %v3573 = vpop.f32.mrf.mxu0
        %v3574 = vadd.f32 0.0, %v3573
        %3575 = vdwg.mxu0
        %v3576 = vsel %vm967, %v3572, 0.0
        %v3577 = vsel %vm967, %v3574, 0.0
        %v3578 = vadd.f32 %v3576, %v3577
        %3579 = vadd.xlane.f32.xlu0 %v3578
        %v3580 = vpop.xlane.xlu0 %3579
        %v3581 = vmul.f32 %v3580, 0.00390625
        %v3582 = vsub.f32 %v3572, %v3581
        %v3583 = vsub.f32 %v3574, %v3581
        %v3584 = vmul.f32 %v3582, %v3582
        %v3585 = vmul.f32 %v3583, %v3583
        %v3586 = vsel %vm967, %v3584, 0.0
        %v3587 = vsel %vm967, %v3585, 0.0
        %v3588 = vadd.f32 %v3586, %v3587
        %3589 = vadd.xlane.f32.xlu0 %v3588
        %v3590 = vpop.xlane.xlu0 %3589
        %v3591 = vmul.f32 %v3590, 0.00390625
        %v3592 = vadd.f32 %v3591, 1e-05
        %v3593 = vrsqrt.pop %v3592
        %v3594 = vmul.f32 %v3582, %v3593
        %v3595 = vmul.f32 %v3583, %v3593
        %vm3596 = vcmp.ge.f32.partialorder %v3594, 0.0
        %vm3597 = vcmp.ge.f32.partialorder %v3595, 0.0
        %v3598 = vmul.f32 %v3594, 0.2
        %v3599 = vmul.f32 %v3595, 0.2
        %v3600 = vsel %vm3596, %v3594, %v3598
        %v3601 = vsel %vm3597, %v3595, %v3599
        %v3604 = vrot.slane %v1315, 4
        %v3605 = vrot.slane %v1316, 4
        %v3608 = vsel %vm967, %v3600, %v3604
        %v3609 = vsel %vm967, %v3601, %v3605
        %3611 = vrot.lane.b32.xlu0 %v3609, 17
        %v3612 = vpop.permute.xlu0 %3611
        %3615 = vrot.lane.b32.xlu0 %v3608, 17
        %v3616 = vpop.permute.xlu0 %3615
        %v3617 = vsel %vm726, %v3616, %v3612
        %v3620 = vsel %vm726, %v3612, %v3616
        %v3621 = vmul.f32 %v3620, %v736
        %v3622 = vmul.f32 %v3617, %v740
        %3623 = vrot.lane.b32.xlu0 %v3609, 16
        %v3624 = vpop.permute.xlu0 %3623
        %3626 = vrot.lane.b32.xlu0 %v3608, 16
        %v3627 = vpop.permute.xlu0 %3626
        %v3628 = vsel %vm750, %v3627, %v3624
        %v3631 = vsel %vm750, %v3624, %v3627
        %v3632 = vmul.f32 %v3631, %v761
        %v3633 = vmul.f32 %v3628, %v765
        %3634 = vrot.lane.b32.xlu0 %v3609, 15
        %v3635 = vpop.permute.xlu0 %3634
        %3637 = vrot.lane.b32.xlu0 %v3608, 15
        %v3638 = vpop.permute.xlu0 %3637
        %v3639 = vsel %vm775, %v3638, %v3635
        %v3642 = vsel %vm775, %v3635, %v3638
        %v3643 = vmul.f32 %v3642, %v786
        %v3644 = vmul.f32 %v3639, %v790
        %3645 = vrot.lane.b32.xlu0 %v3609, 1
        %v3646 = vpop.permute.xlu0 %3645
        %3648 = vrot.lane.b32.xlu0 %v3608, 1
        %v3649 = vpop.permute.xlu0 %3648
        %v3650 = vsel %vm800, %v3649, %v3646
        %v3653 = vsel %vm800, %v3646, %v3649
        %v3654 = vmul.f32 %v3653, %v811
        %v3655 = vmul.f32 %v3650, %v815
        %3656 = vrot.lane.b32.xlu0 %v3608, 127
        %v3657 = vpop.permute.xlu0 %3656
        %3658 = vrot.lane.b32.xlu0 %v3609, 127
        %v3659 = vpop.permute.xlu0 %3658
        %v3660 = vsel %vm824, %v3657, %v3659
        %v3664 = vsel %vm824, %v3659, %v3657
        %v3665 = vmul.f32 %v3660, %v836
        %v3666 = vmul.f32 %v3664, %v840
        %3667 = vrot.lane.b32.xlu0 %v3608, 113
        %v3668 = vpop.permute.xlu0 %3667
        %3669 = vrot.lane.b32.xlu0 %v3609, 113
        %v3670 = vpop.permute.xlu0 %3669
        %v3671 = vsel %vm849, %v3668, %v3670
        %v3675 = vsel %vm849, %v3670, %v3668
        %v3676 = vmul.f32 %v3671, %v861
        %v3677 = vmul.f32 %v3675, %v865
        %3678 = vrot.lane.b32.xlu0 %v3608, 112
        %v3679 = vpop.permute.xlu0 %3678
        %3680 = vrot.lane.b32.xlu0 %v3609, 112
        %v3681 = vpop.permute.xlu0 %3680
        %v3682 = vsel %vm874, %v3679, %v3681
        %v3686 = vsel %vm874, %v3681, %v3679
        %v3687 = vmul.f32 %v3682, %v886
        %v3688 = vmul.f32 %v3686, %v890
        %3689 = vrot.lane.b32.xlu0 %v3608, 111
        %v3690 = vpop.permute.xlu0 %3689
        %3691 = vrot.lane.b32.xlu0 %v3609, 111
        %v3692 = vpop.permute.xlu0 %3691
        %v3693 = vsel %vm899, %v3690, %v3692
        %v3697 = vsel %vm899, %v3692, %v3690
        %v3698 = vmul.f32 %v3693, %v911
        %v3699 = vmul.f32 %v3697, %v915
        %v3700 = vld [vmem:[%s11] sm:$0xf]
        %v3702 = vsel %vm1706, %v3700, 0
        %3704 = vmatprep.subr.mxu0 0.0
        %3705 = vmatpush1.msra.mxu0 0.0
        %3706 = vmatprep.subr.mxu0 0.0
        %3707 = vmatpush1.msra.mxu0 0.0
        %3708 = vmatprep.subr.mxu0 0.0
        %3709 = vmatpush1.msra.mxu0 0.0
        %3710 = vmatprep.subr.mxu0 0.0
        %3711 = vmatpush1.msra.mxu0 0.0
        %3712 = vmatprep.subr.mxu0 0.0
        %3713 = vmatpush1.msra.mxu0 0.0
        %3714 = vmatprep.subr.mxu0 0.0
        %3715 = vmatpush1.msra.mxu0 0.0
        %3716 = vmatprep.subr.mxu0 0.0
        %3717 = vmatpush1.msra.mxu0 0.0
        %3718 = vmatprep.subr.mxu0 %v3699
        %3719 = vmatpush1.msra.mxu0 %v3698
        %3720 = vmatprep.subr.mxu0 %v3688
        %3721 = vmatpush1.msra.mxu0 %v3687
        %3722 = vmatprep.subr.mxu0 %v3677
        %3723 = vmatpush1.msra.mxu0 %v3676
        %3724 = vmatprep.subr.mxu0 %v3666
        %3725 = vmatpush1.msra.mxu0 %v3665
        %3726 = vmatprep.subr.mxu0 %v3609
        %3727 = vmatpush1.msra.mxu0 %v3608
        %3728 = vmatprep.subr.mxu0 %v3655
        %3729 = vmatpush1.msra.mxu0 %v3654
        %3730 = vmatprep.subr.mxu0 %v3644
        %3731 = vmatpush1.msra.mxu0 %v3643
        %3732 = vmatprep.subr.mxu0 %v3633
        %3733 = vmatpush1.msra.mxu0 %v3632
        %3734 = vmatprep.subr.mxu0 %v3622
        %3735 = vmatpush1.msra.mxu0 %v3621
        %3736 = vmatprep.subr.mxu0 0.0
        %3737 = vmatpush2.msra.mxu0 0.0
        %3738 = vmatprep.subr.mxu0 0.0
        %3739 = vmatpush2.msra.mxu0 0.0
        %3740 = vmatprep.subr.mxu0 0.0
        %3741 = vmatpush2.msra.mxu0 0.0
        %3742 = vmatprep.subr.mxu0 0.0
        %3743 = vmatpush2.msra.mxu0 0.0
        %3744 = vmatprep.subr.mxu0 0.0
        %3745 = vmatpush2.msra.mxu0 0.0
        %3746 = vmatprep.subr.mxu0 0.0
        %3747 = vmatpush2.msra.mxu0 0.0
        %3748 = vmatprep.subr.mxu0 0.0
        %3749 = vmatpush2.msra.mxu0 0.0
        %3750 = vmatprep.subr.mxu0 0.0
        %3751 = vmatpush2.msra.mxu0 0.0
        %3752 = vmatprep.subr.mxu0 0.0
        %3753 = vmatpush2.msra.mxu0 0.0
        %3754 = vmatprep.subr.mxu0 0.0
        %3755 = vmatpush2.msra.mxu0 0.0
        %3756 = vmatprep.subr.mxu0 0.0
        %3757 = vmatpush2.msra.mxu0 0.0
        %3758 = vmatprep.subr.mxu0 0.0
        %3759 = vmatpush2.msra.mxu0 0.0
        %3760 = vmatprep.subr.mxu0 0.0
        %3761 = vmatpush2.msra.mxu0 0.0
        %3762 = vmatprep.subr.mxu0 0.0
        %3763 = vmatpush2.msra.mxu0 0.0
        %3764 = vmatprep.subr.mxu0 0.0
        %3765 = vmatpush2.msra.mxu0 0.0
        %3766 = vmatprep.subr.mxu0 0.0
        %3767 = vmatpush2.msra.mxu0 0.0
        %3768 = vmatprep.mubr.f32.mxu0 0.0
        %3769 = vmatmul.mubr.f32.gmra.mxu0 %v3702
        %v3770 = vpop.f32.mrf.mxu0
        %v3771 = vadd.f32 0.0, %v3770
        %v3772 = vpop.f32.mrf.mxu0
        %v3773 = vadd.f32 0.0, %v3772
        %3774 = vdwg.mxu0
        %v3775 = vsel %vm967, %v3771, 0.0
        %v3776 = vsel %vm967, %v3773, 0.0
        %v3777 = vadd.f32 %v3775, %v3776
        %3778 = vadd.xlane.f32.xlu0 %v3777
        %v3779 = vpop.xlane.xlu0 %3778
        %v3780 = vmul.f32 %v3779, 0.00390625
        %v3781 = vsub.f32 %v3771, %v3780
        %v3782 = vsub.f32 %v3773, %v3780
        %v3783 = vmul.f32 %v3781, %v3781
        %v3784 = vmul.f32 %v3782, %v3782
        %v3785 = vsel %vm967, %v3783, 0.0
        %v3786 = vsel %vm967, %v3784, 0.0
        %v3787 = vadd.f32 %v3785, %v3786
        %3788 = vadd.xlane.f32.xlu0 %v3787
        %v3789 = vpop.xlane.xlu0 %3788
        %v3790 = vmul.f32 %v3789, 0.00390625
        %v3791 = vadd.f32 %v3790, 1e-05
        %v3792 = vrsqrt.pop %v3791
        %v3793 = vmul.f32 %v3781, %v3792
        %v3794 = vmul.f32 %v3782, %v3792
        %vm3795 = vcmp.ge.f32.partialorder %v3793, 0.0
        %vm3796 = vcmp.ge.f32.partialorder %v3794, 0.0
        %v3797 = vmul.f32 %v3793, 0.2
        %v3798 = vmul.f32 %v3794, 0.2
        %v3799 = vsel %vm3795, %v3793, %v3797
        %v3800 = vsel %vm3796, %v3794, %v3798
        %3802 = vrot.lane.b32.xlu0 %v3800, 17
        %v3803 = vpop.permute.xlu0 %3802
        %3806 = vrot.lane.b32.xlu0 %v3799, 17
        %v3807 = vpop.permute.xlu0 %3806
        %v3808 = vsel %vm726, %v3807, %v3803
        %v3811 = vsel %vm726, %v3803, %v3807
        %v3812 = vmul.f32 %v3811, %v736
        %v3813 = vmul.f32 %v3808, %v740
        %3814 = vrot.lane.b32.xlu0 %v3800, 16
        %v3815 = vpop.permute.xlu0 %3814
        %3817 = vrot.lane.b32.xlu0 %v3799, 16
        %v3818 = vpop.permute.xlu0 %3817
        %v3819 = vsel %vm750, %v3818, %v3815
        %v3822 = vsel %vm750, %v3815, %v3818
        %v3823 = vmul.f32 %v3822, %v761
        %v3824 = vmul.f32 %v3819, %v765
        %3825 = vrot.lane.b32.xlu0 %v3800, 15
        %v3826 = vpop.permute.xlu0 %3825
        %3828 = vrot.lane.b32.xlu0 %v3799, 15
        %v3829 = vpop.permute.xlu0 %3828
        %v3830 = vsel %vm775, %v3829, %v3826
        %v3833 = vsel %vm775, %v3826, %v3829
        %v3834 = vmul.f32 %v3833, %v786
        %v3835 = vmul.f32 %v3830, %v790
        %3836 = vrot.lane.b32.xlu0 %v3800, 1
        %v3837 = vpop.permute.xlu0 %3836
        %3839 = vrot.lane.b32.xlu0 %v3799, 1
        %v3840 = vpop.permute.xlu0 %3839
        %v3841 = vsel %vm800, %v3840, %v3837
        %v3844 = vsel %vm800, %v3837, %v3840
        %v3845 = vmul.f32 %v3844, %v811
        %v3846 = vmul.f32 %v3841, %v815
        %3847 = vrot.lane.b32.xlu0 %v3799, 127
        %v3848 = vpop.permute.xlu0 %3847
        %3849 = vrot.lane.b32.xlu0 %v3800, 127
        %v3850 = vpop.permute.xlu0 %3849
        %v3851 = vsel %vm824, %v3848, %v3850
        %v3855 = vsel %vm824, %v3850, %v3848
        %v3856 = vmul.f32 %v3851, %v836
        %v3857 = vmul.f32 %v3855, %v840
        %3858 = vrot.lane.b32.xlu0 %v3799, 113
        %v3859 = vpop.permute.xlu0 %3858
        %3860 = vrot.lane.b32.xlu0 %v3800, 113
        %v3861 = vpop.permute.xlu0 %3860
        %v3862 = vsel %vm849, %v3859, %v3861
        %v3866 = vsel %vm849, %v3861, %v3859
        %v3867 = vmul.f32 %v3862, %v861
        %v3868 = vmul.f32 %v3866, %v865
        %3869 = vrot.lane.b32.xlu0 %v3799, 112
        %v3870 = vpop.permute.xlu0 %3869
        %3871 = vrot.lane.b32.xlu0 %v3800, 112
        %v3872 = vpop.permute.xlu0 %3871
        %v3873 = vsel %vm874, %v3870, %v3872
        %v3877 = vsel %vm874, %v3872, %v3870
        %v3878 = vmul.f32 %v3873, %v886
        %v3879 = vmul.f32 %v3877, %v890
        %3880 = vrot.lane.b32.xlu0 %v3799, 111
        %v3881 = vpop.permute.xlu0 %3880
        %3882 = vrot.lane.b32.xlu0 %v3800, 111
        %v3883 = vpop.permute.xlu0 %3882
        %v3884 = vsel %vm899, %v3881, %v3883
        %v3888 = vsel %vm899, %v3883, %v3881
        %v3889 = vmul.f32 %v3884, %v911
        %v3890 = vmul.f32 %v3888, %v915
        %v3893 = vrot.slane %v3823, 4
        %v3894 = vrot.slane %v3824, 4
        %v3899 = vrot.slane %v3845, 4
        %v3900 = vrot.slane %v3846, 4
        %v3905 = vrot.slane %v3856, 4
        %v3906 = vrot.slane %v3857, 4
        %v3911 = vrot.slane %v3878, 4
        %v3912 = vrot.slane %v3879, 4
        %v3915 = vsel %vm967, %v3812, %v3893
        %v3916 = vsel %vm967, %v3813, %v3894
        %v3917 = vsel %vm967, %v3834, %v3899
        %v3918 = vsel %vm967, %v3835, %v3900
        %v3919 = vsel %vm967, %v3799, %v3905
        %v3920 = vsel %vm967, %v3800, %v3906
        %v3921 = vsel %vm967, %v3867, %v3911
        %v3922 = vsel %vm967, %v3868, %v3912
        %v3923 = vld [vmem:[%s12] sm:$0xf]
        %v3925 = vsel %vm1210, %v3923, 0
        %v3928 = vsel %vm967, %v3889, 0
        %v3931 = vsel %vm967, %v3890, 0
        %3933 = vmatprep.subr.mxu0 0.0
        %3934 = vmatpush1.msra.mxu0 0.0
        %3935 = vmatprep.subr.mxu0 0.0
        %3936 = vmatpush1.msra.mxu0 0.0
        %3937 = vmatprep.subr.mxu0 0.0
        %3938 = vmatpush1.msra.mxu0 0.0
        %3939 = vmatprep.subr.mxu0 0.0
        %3940 = vmatpush1.msra.mxu0 0.0
        %3941 = vmatprep.subr.mxu0 0.0
        %3942 = vmatpush1.msra.mxu0 0.0
        %3943 = vmatprep.subr.mxu0 0.0
        %3944 = vmatpush1.msra.mxu0 0.0
        %3945 = vmatprep.subr.mxu0 0.0
        %3946 = vmatpush1.msra.mxu0 0.0
        %3947 = vmatprep.subr.mxu0 0.0
        %3948 = vmatpush1.msra.mxu0 0.0
        %3949 = vmatprep.subr.mxu0 0.0
        %3950 = vmatpush1.msra.mxu0 0.0
        %3951 = vmatprep.subr.mxu0 0.0
        %3952 = vmatpush1.msra.mxu0 0.0
        %3953 = vmatprep.subr.mxu0 0.0
        %3954 = vmatpush1.msra.mxu0 0.0
        %3955 = vmatprep.subr.mxu0 %v3931
        %3956 = vmatpush1.msra.mxu0 %v3928
        %3957 = vmatprep.subr.mxu0 %v3922
        %3958 = vmatpush1.msra.mxu0 %v3921
        %3959 = vmatprep.subr.mxu0 %v3920
        %3960 = vmatpush1.msra.mxu0 %v3919
        %3961 = vmatprep.subr.mxu0 %v3918
        %3962 = vmatpush1.msra.mxu0 %v3917
        %3963 = vmatprep.subr.mxu0 %v3916
        %3964 = vmatpush1.msra.mxu0 %v3915
        %3965 = vmatprep.subr.mxu0 0.0
        %3966 = vmatpush2.msra.mxu0 0.0
        %3967 = vmatprep.subr.mxu0 0.0
        %3968 = vmatpush2.msra.mxu0 0.0
        %3969 = vmatprep.subr.mxu0 0.0
        %3970 = vmatpush2.msra.mxu0 0.0
        %3971 = vmatprep.subr.mxu0 0.0
        %3972 = vmatpush2.msra.mxu0 0.0
        %3973 = vmatprep.subr.mxu0 0.0
        %3974 = vmatpush2.msra.mxu0 0.0
        %3975 = vmatprep.subr.mxu0 0.0
        %3976 = vmatpush2.msra.mxu0 0.0
        %3977 = vmatprep.subr.mxu0 0.0
        %3978 = vmatpush2.msra.mxu0 0.0
        %3979 = vmatprep.subr.mxu0 0.0
        %3980 = vmatpush2.msra.mxu0 0.0
        %3981 = vmatprep.subr.mxu0 0.0
        %3982 = vmatpush2.msra.mxu0 0.0
        %3983 = vmatprep.subr.mxu0 0.0
        %3984 = vmatpush2.msra.mxu0 0.0
        %3985 = vmatprep.subr.mxu0 0.0
        %3986 = vmatpush2.msra.mxu0 0.0
        %3987 = vmatprep.subr.mxu0 0.0
        %3988 = vmatpush2.msra.mxu0 0.0
        %3989 = vmatprep.subr.mxu0 0.0
        %3990 = vmatpush2.msra.mxu0 0.0
        %3991 = vmatprep.subr.mxu0 0.0
        %3992 = vmatpush2.msra.mxu0 0.0
        %3993 = vmatprep.subr.mxu0 0.0
        %3994 = vmatpush2.msra.mxu0 0.0
        %3995 = vmatprep.subr.mxu0 0.0
        %3996 = vmatpush2.msra.mxu0 0.0
        %3997 = vmatprep.mubr.f32.mxu0 0.0
        %3998 = vmatmul.mubr.f32.gmra.mxu0 %v3925
        %v3999 = vpop.f32.mrf.mxu0
        %v4000 = vadd.f32 0.0, %v3999
        %v4001 = vpop.f32.mrf.mxu0
        %v4002 = vadd.f32 0.0, %v4001
        %4003 = vdwg.mxu0
        %v4004 = vsel %vm967, %v4000, 0.0
        %v4005 = vsel %vm967, %v4002, 0.0
        %v4006 = vadd.f32 %v4004, %v4005
        %4007 = vadd.xlane.f32.xlu0 %v4006
        %v4008 = vpop.xlane.xlu0 %4007
        %v4009 = vmul.f32 %v4008, 0.00390625
        %v4010 = vsub.f32 %v4000, %v4009
        %v4011 = vsub.f32 %v4002, %v4009
        %v4012 = vmul.f32 %v4010, %v4010
        %v4013 = vmul.f32 %v4011, %v4011
        %v4014 = vsel %vm967, %v4012, 0.0
        %v4015 = vsel %vm967, %v4013, 0.0
        %v4016 = vadd.f32 %v4014, %v4015
        %4017 = vadd.xlane.f32.xlu0 %v4016
        %v4018 = vpop.xlane.xlu0 %4017
        %v4019 = vmul.f32 %v4018, 0.00390625
        %v4020 = vadd.f32 %v4019, 1e-05
        %v4021 = vrsqrt.pop %v4020
        %v4022 = vmul.f32 %v4010, %v4021
        %v4023 = vmul.f32 %v4011, %v4021
        %vm4024 = vcmp.ge.f32.partialorder %v4022, 0.0
        %vm4025 = vcmp.ge.f32.partialorder %v4023, 0.0
        %v4026 = vmul.f32 %v4022, 0.2
        %v4027 = vmul.f32 %v4023, 0.2
        %v4028 = vsel %vm4024, %v4022, %v4026
        %v4029 = vsel %vm4025, %v4023, %v4027
        %v4030 = vld [vmem:[%s13] sm:$0x1]
        %v4031 = vld [vmem:[#allocation2] sm:$0x1]
        %4033 = vset.pattern.permute.xlu0 0
        %4034 = vperm.xlu0 %4033, %v4031
        %v4035 = vpop.permute.xlu0 %4034
        %v4037 = vlaneseq
        %v4038 = vshrl.u32 %v4037, 7
        %v4039 = vsub.s32 0, %v4038
        %v4040 = vrot.slane %v4035, %v4039
        %v4042 = vsel %vm1898, %v4030, 0
        %v4045 = vsel %vm967, %v4028, 0
        %v4048 = vsel %vm967, %v4029, 0
        %4050 = vmatprep.subr.mxu0 0.0
        %4051 = vmatpush1.msra.mxu0 0.0
        %4052 = vmatprep.subr.mxu0 0.0
        %4053 = vmatpush1.msra.mxu0 0.0
        %4054 = vmatprep.subr.mxu0 0.0
        %4055 = vmatpush1.msra.mxu0 0.0
        %4056 = vmatprep.subr.mxu0 0.0
        %4057 = vmatpush1.msra.mxu0 0.0
        %4058 = vmatprep.subr.mxu0 0.0
        %4059 = vmatpush1.msra.mxu0 0.0
        %4060 = vmatprep.subr.mxu0 0.0
        %4061 = vmatpush1.msra.mxu0 0.0
        %4062 = vmatprep.subr.mxu0 0.0
        %4063 = vmatpush1.msra.mxu0 0.0
        %4064 = vmatprep.subr.mxu0 0.0
        %4065 = vmatpush1.msra.mxu0 0.0
        %4066 = vmatprep.subr.mxu0 0.0
        %4067 = vmatpush1.msra.mxu0 0.0
        %4068 = vmatprep.subr.mxu0 0.0
        %4069 = vmatpush1.msra.mxu0 0.0
        %4070 = vmatprep.subr.mxu0 0.0
        %4071 = vmatpush1.msra.mxu0 0.0
        %4072 = vmatprep.subr.mxu0 0.0
        %4073 = vmatpush1.msra.mxu0 0.0
        %4074 = vmatprep.subr.mxu0 0.0
        %4075 = vmatpush1.msra.mxu0 0.0
        %4076 = vmatprep.subr.mxu0 0.0
        %4077 = vmatpush1.msra.mxu0 0.0
        %4078 = vmatprep.subr.mxu0 0.0
        %4079 = vmatpush1.msra.mxu0 0.0
        %4080 = vmatprep.subr.mxu0 %v4048
        %4081 = vmatpush1.msra.mxu0 %v4045
        %4082 = vmatprep.subr.mxu0 0.0
        %4083 = vmatpush2.msra.mxu0 0.0
        %4084 = vmatprep.subr.mxu0 0.0
        %4085 = vmatpush2.msra.mxu0 0.0
        %4086 = vmatprep.subr.mxu0 0.0
        %4087 = vmatpush2.msra.mxu0 0.0
        %4088 = vmatprep.subr.mxu0 0.0
        %4089 = vmatpush2.msra.mxu0 0.0
        %4090 = vmatprep.subr.mxu0 0.0
        %4091 = vmatpush2.msra.mxu0 0.0
        %4092 = vmatprep.subr.mxu0 0.0
        %4093 = vmatpush2.msra.mxu0 0.0
        %4094 = vmatprep.subr.mxu0 0.0
        %4095 = vmatpush2.msra.mxu0 0.0
        %4096 = vmatprep.subr.mxu0 0.0
        %4097 = vmatpush2.msra.mxu0 0.0
        %4098 = vmatprep.subr.mxu0 0.0
        %4099 = vmatpush2.msra.mxu0 0.0
        %4100 = vmatprep.subr.mxu0 0.0
        %4101 = vmatpush2.msra.mxu0 0.0
        %4102 = vmatprep.subr.mxu0 0.0
        %4103 = vmatpush2.msra.mxu0 0.0
        %4104 = vmatprep.subr.mxu0 0.0
        %4105 = vmatpush2.msra.mxu0 0.0
        %4106 = vmatprep.subr.mxu0 0.0
        %4107 = vmatpush2.msra.mxu0 0.0
        %4108 = vmatprep.subr.mxu0 0.0
        %4109 = vmatpush2.msra.mxu0 0.0
        %4110 = vmatprep.subr.mxu0 0.0
        %4111 = vmatpush2.msra.mxu0 0.0
        %4112 = vmatprep.subr.mxu0 0.0
        %4113 = vmatpush2.msra.mxu0 0.0
        %4114 = vmatprep.mubr.f32.mxu0 0.0
        %4115 = vmatmul.mubr.f32.gmra.mxu0 %v4042
        %v4116 = vpop.f32.mrf.mxu0
        %v4117 = vadd.f32 %v4040, %v4116
        %v4118 = vpop.f32.mrf.mxu0
        %v4119 = vadd.f32 %v4040, %v4118
        %4120 = vdwg.mxu0
        %v4123 = vcombine.low %v4117, %v4119
        %v4125 = vunpack.c.l.s4 1966171168
        %v4126 = vunpack.c.0.s8 %v4125
        %v4127 = vlaneseq
        %v4128 = vshrl.u32 %v4127, 7
        %v4129 = vsub.s32 %v4126, %v4128
        %v4130 = vrot.slane %v4123, %v4129
        %v4132 = vunpack.c.l.s4 1966171168
        %v4133 = vunpack.c.0.s8 %v4132
        %v4134 = vlaneseq
        %v4135 = vshrl.u32 %v4134, 7
        %v4136 = vsub.s32 %v4133, %v4135
        %v4137 = vrot.slane %v4130, %v4136
        %v4139 = vlaneseq
        %vm4140 = vcmp.ge.s32.totalorder %v4139, 0
        %vm4141 = vcmp.lt.s32.totalorder %v4139, 256
        %vm4142 = vmand %vm4140, %vm4141
        %4143 = vst.msk [vmem:[%s710] sm:$0x3] %vm4142, %v4137
        %p4144 = scmp.lt.s32.totalorder %s37, 1
        %s4145 = scalar_select %p4144, %s37, 1
        %s4146 = smul.addr %s4145, 2
        %s4147 = scalar_lea.vmem %s22, %s4146
        // Predicated region
        $region117: #{unet_dcl_cascade.2} parent=107 // pred_check
          %p4148 = pneg %p522
        $region118: #{unet_dcl_cascade.2} parent=107 // pred_check_branch
          %4150 = sbr.rel (%p4148) target = $region120
        $region119: #{unet_dcl_cascade.2} parent=107 // pred_region
          _
        $region120: #{unet_dcl_cascade.2} parent=107 // pred_fallthru
          _
      $region108: #{unet_dcl_cascade.2} parent=5 // pred_fallthru
        _
      %p4151 = scmp.le.s32.totalorder 2, %s32
      // Predicated region
      $region121: #{unet_dcl_cascade.2} parent=5 // pred_check
        %p4152 = pneg %p4151
      $region122: #{unet_dcl_cascade.2} parent=5 // pred_check_branch
        %4154 = sbr.rel (%p4152) target = $region124
      $region123: #{unet_dcl_cascade.2} parent=5 // pred_region
        %s4155 = ssub.s32 %s32, 2
        // Predicated region
        $region125: #{unet_dcl_cascade.2} parent=123 // pred_check
          %p4156 = pneg %p528
        $region126: #{unet_dcl_cascade.2} parent=123 // pred_check_branch
          %4158 = sbr.rel (%p4156) target = $region128
        $region127: #{unet_dcl_cascade.2} parent=123 // pred_region
          %p4159 = scmp.lt.s32.totalorder %s38, 1
          %s4160 = scalar_select %p4159, %s38, 1
          %s4161 = smul.addr %s4160, 2
          %s4162 = scalar_lea.vmem %s22, %s4161
        $region128: #{unet_dcl_cascade.2} parent=123 // pred_fallthru
          _
      $region124: #{unet_dcl_cascade.2} parent=5 // pred_fallthru
        _
    $region6: #{unet_dcl_cascade.2} parent=1 // loop_footer
      %s36 = sadd.s32 1, %s32
    $region7: #{unet_dcl_cascade.2} parent=1 // loop_footer_branch
      %31 = sbr.rel target = $region3
    $region8: #{unet_dcl_cascade.2} parent=1 // loop_exit
      _
    %4163 = vsyncpa [#allocation4], 1
    %s4164 = scalar_lea.sflag [#allocation4], 1
    %4165 = vsyncpa %s4164, 1
    %4166 = vsyncpa [#allocation6], 1

</llo_original>
